<compile_context>
chip_gen: v6e
topology: v6e:2x2x1
jax: 0.10.0
libtpu: 0.0.40
codegen_flags: <defaults>
</compile_context>

<pallas_src>
import numpy as np
import jax
import jax.numpy as jnp
from jax.experimental import pallas as pl
from jax.experimental.pallas import tpu as pltpu

MID = 256
HIDDEN = 512
OUT_LANES = 128   # lane-dense output slab; lanes 0/1/2 = diag / sa / rbb


def _round_up(x, m):
    return ((x + m - 1) // m) * m


# ----------------------------------------------------------------------------
# Kernel
# ----------------------------------------------------------------------------
def classification_kernel(x_ref, w0_ref, wr_ref, w4_ref, wh0_ref,
                          wmid_ref, wfin_ref, b_ref, out_ref):
    """One batch-row tile through the whole fused network."""

    def dense(h, w, brow, odim):
        acc = jnp.dot(h, w, preferred_element_type=jnp.float32)
        return acc + b_ref[brow:brow + 1, 0:odim]          # (1,odim) broadcast

    def relu_bf16(a):
        return jnp.maximum(a, 0.0).astype(jnp.bfloat16)

    h = x_ref[...].astype(jnp.bfloat16)                    # (TM, in_features)

    # --- rMLP: 4 x (Linear + ReLU), then Linear(512 -> 256), no activation ---
    h = relu_bf16(dense(h, w0_ref[...], 0, HIDDEN))
    for l in range(3):
        h = relu_bf16(dense(h, wr_ref[l], 1 + l, HIDDEN))
    x_mid = dense(h, w4_ref[...], 4, MID).astype(jnp.bfloat16)    # (TM, 256)

    # --- fused first layer of the 3 heads: (TM,256) @ (256,768) ---
    h0 = dense(x_mid, wh0_ref[...], 5, 3 * MID)            # (TM, 768) f32
    hd = h0[:, 0:MID]
    hd = jnp.maximum(hd, 0.01 * hd).astype(jnp.bfloat16)   # LeakyReLU(0.01), diag head
    hs = jnp.maximum(h0[:, MID:2 * MID], 0.0).astype(jnp.bfloat16)   # saMLP[0]
    hr = jnp.maximum(h0[:, 2 * MID:3 * MID], 0.0).astype(jnp.bfloat16)  # rbbMLP[0]

    # --- saMLP hidden layers 1..3 ---
    for l in range(3):
        hs = relu_bf16(dense(hs, wmid_ref[l], 6 + l, MID))
    # --- rbbMLP hidden layers 1..3 ---
    for l in range(3):
        hr = relu_bf16(dense(hr, wmid_ref[3 + l], 9 + l, MID))

    # --- fused lane-dense final projection: sum of three (TM,256)@(256,128) ---
    acc = jnp.dot(hd, wfin_ref[0], preferred_element_type=jnp.float32)
    acc = acc + jnp.dot(hs, wfin_ref[1], preferred_element_type=jnp.float32)
    acc = acc + jnp.dot(hr, wfin_ref[2], preferred_element_type=jnp.float32)
    acc = acc + b_ref[12:13, 0:OUT_LANES]
    out_ref[...] = acc.astype(out_ref.dtype)


# ----------------------------------------------------------------------------
# Parameter packing (17 PyTorch-order (W, b) pairs -> 7 fused arrays + bias pack)
# ----------------------------------------------------------------------------
def pack_params(params):
    """params: 17 (W, b) pairs, W (in,out) f32, b (1,out) f32, in PyTorch layer
    order: rMLP[0..4], layer_diag_1, layer_diag_2, saMLP[0..4], rbbMLP[0..4]."""
    assert len(params) == 17
    rmlp = params[0:5]
    w_d1, b_d1 = params[5]
    w_d2, b_d2 = params[6]
    sa = params[7:12]
    rbb = params[12:17]

    w0 = rmlp[0][0].astype(jnp.bfloat16)                                   # (F, 512)
    w_r = jnp.stack([rmlp[i][0] for i in (1, 2, 3)]).astype(jnp.bfloat16)  # (3,512,512)
    w4 = rmlp[4][0].astype(jnp.bfloat16)                                   # (512,256)

    # Fused head layer 0: [diag_1 | saMLP[0] | rbbMLP[0]] -> (256, 768)
    w_h0 = jnp.concatenate([w_d1, sa[0][0], rbb[0][0]], axis=1).astype(jnp.bfloat16)

    # sa/rbb hidden layers 1..3 stacked: (6, 256, 256)
    w_mid = jnp.stack([sa[1][0], sa[2][0], sa[3][0],
                       rbb[1][0], rbb[2][0], rbb[3][0]]).astype(jnp.bfloat16)

    # Fused lane-dense final projection: (3, 256, 128), lanes 0/1/2 = diag/sa/rbb.
    w_fin = jnp.zeros((3, MID, OUT_LANES), jnp.float32)
    w_fin = w_fin.at[0, :, 0].set(w_d2[:, 0])
    w_fin = w_fin.at[1, :, 1].set(sa[4][0][:, 0])
    w_fin = w_fin.at[2, :, 2].set(rbb[4][0][:, 0])
    w_fin = w_fin.astype(jnp.bfloat16)

    # Bias pack: (13, 768) f32, one row per fused layer.
    bpack = jnp.zeros((13, 3 * MID), jnp.float32)

    def put(bp, row, vec):
        vec = vec.reshape(-1)
        return bp.at[row, 0:vec.shape[0]].set(vec)

    bpack = put(bpack, 0, rmlp[0][1])
    bpack = put(bpack, 1, rmlp[1][1])
    bpack = put(bpack, 2, rmlp[2][1])
    bpack = put(bpack, 3, rmlp[3][1])
    bpack = put(bpack, 4, rmlp[4][1])
    bpack = put(bpack, 5, jnp.concatenate([b_d1.reshape(-1),
                                           sa[0][1].reshape(-1),
                                           rbb[0][1].reshape(-1)]))
    for i in range(3):
        bpack = put(bpack, 6 + i, sa[1 + i][1])
    for i in range(3):
        bpack = put(bpack, 9 + i, rbb[1 + i][1])
    b_fin = jnp.zeros((OUT_LANES,), jnp.float32)
    b_fin = b_fin.at[0].set(b_d2.reshape(-1)[0])
    b_fin = b_fin.at[1].set(sa[4][1].reshape(-1)[0])
    b_fin = b_fin.at[2].set(rbb[4][1].reshape(-1)[0])
    bpack = put(bpack, 12, b_fin)

    return w0, w_r, w4, w_h0, w_mid, w_fin, bpack


# ----------------------------------------------------------------------------
# Wrapper
# ----------------------------------------------------------------------------
def classification_net_multi(x, params, *, tm=None):
    """x: (B, in_features) f32.  params: 17 (W, b) pairs (PyTorch layer order).
    Returns (x_diag, x_sa, x_rbb), each (B, 1) f32."""
    B, F = x.shape
    w0, w_r, w4, w_h0, w_mid, w_fin, bpack = pack_params(params)

    # Adaptive row tile: don't pad tiny batches to 128/256 rows; cap at 256 to
    # fill the 256-row MXU on v6e/v7x (pass tm=128 explicitly on v5e).
    if tm is None:
        tm = min(256, _round_up(B, 8))
    tm = max(8, _round_up(tm, 8))
    num_tiles = pl.cdiv(B, tm)
    b_pad = num_tiles * tm

    x = x.astype(jnp.float32)
    if b_pad != B:
        x = jnp.pad(x, ((0, b_pad - B), (0, 0)))

    def resident(arr):
        nd = arr.ndim
        return pl.BlockSpec(arr.shape, lambda i, _nd=nd: (0,) * _nd)

    in_specs = [
        pl.BlockSpec((tm, F), lambda i: (i, 0)),   # x: row-tiled
        resident(w0), resident(w_r), resident(w4),
        resident(w_h0), resident(w_mid), resident(w_fin), resident(bpack),
    ]

    weights = (w0, w_r, w4, w_h0, w_mid, w_fin)
    flops = 2 * b_pad * (F * HIDDEN + 3 * HIDDEN * HIDDEN + HIDDEN * MID
                         + MID * 3 * MID + 6 * MID * MID + 3 * MID * OUT_LANES)
    bytes_accessed = (x.size * 4
                      + sum(int(w.size) * 2 for w in weights)
                      + int(bpack.size) * 4
                      + b_pad * OUT_LANES * 4)

    out = pl.pallas_call(
        classification_kernel,
        grid=(num_tiles,),
        out_shape=jax.ShapeDtypeStruct((b_pad, OUT_LANES), jnp.float32),
        in_specs=in_specs,
        out_specs=pl.BlockSpec((tm, OUT_LANES), lambda i: (i, 0)),
        compiler_params=pltpu.CompilerParams(
            dimension_semantics=("parallel",),
            vmem_limit_bytes=32 << 20),
        cost_estimate=pl.CostEstimate(flops=int(flops), transcendentals=0,
                                      bytes_accessed=int(bytes_accessed)),
    )(x, w0, w_r, w4, w_h0, w_mid, w_fin, bpack)

    # Pad rows receive biases (nonzero) but are sliced away here — keep [:B].
    return out[:B, 0:1], out[:B, 1:2], out[:B, 2:3]


# ----------------------------------------------------------------------------
# Parameter construction (PyTorch-style default init) and references
# ----------------------------------------------------------------------------
def init_linear(key, in_dim, out_dim):
    """PyTorch default init: U(-1/sqrt(in_dim), 1/sqrt(in_dim)) for W and b."""
    kw, kb = jax.random.split(key)
    bound = 1.0 / np.sqrt(in_dim)
    w = jax.random.uniform(kw, (in_dim, out_dim), jnp.float32, -bound, bound)
    b = jax.random.uniform(kb, (1, out_dim), jnp.float32, -bound, bound)
    return w, b


def build_params(key, in_features, hidden_size=HIDDEN, mid_size=MID):
    """17 (W, b) pairs in the original PyTorch layer order."""
    dims = []
    d = in_features
    for _ in range(4):                      # rMLP hidden layers
        dims.append((d, hidden_size))
        d = hidden_size
    dims.append((hidden_size, mid_size))    # rMLP output layer
    dims.append((mid_size, mid_size))       # layer_diag_1
    dims.append((mid_size, 1))              # layer_diag_2
    for _ in range(2):                      # saMLP, rbbMLP
        d = mid_size
        for _ in range(4):
            dims.append((d, mid_size))
            d = mid_size
        dims.append((mid_size, 1))

    keys = jax.random.split(key, len(dims))
    return [init_linear(k, di, do) for k, (di, do) in zip(keys, dims)]


def reference_forward(x, params, weight_dtype=jnp.float32):
    """Pure-JAX mirror of the PyTorch module.  weight_dtype=f32 gives an
    independent PyTorch-parity reference; bf16 mirrors the kernel's casts."""
    def dense(h, w, b):
        return jnp.dot(h.astype(weight_dtype), w.astype(weight_dtype),
                       preferred_element_type=jnp.float32) + b

    rmlp = params[0:5]
    w_d1, b_d1 = params[5]
    w_d2, b_d2 = params[6]
    sa = params[7:12]
    rbb = params[12:17]

    h = x.astype(jnp.float32)
    for w, b in rmlp[:4]:
        h = jnp.maximum(dense(h, w, b), 0.0)
    x_mid = dense(h, *rmlp[4])

    x_diag = dense(x_mid, w_d1, b_d1)
    x_diag = jnp.maximum(x_diag, 0.01 * x_diag)     # LeakyReLU(0.01)
    x_diag = dense(x_diag, w_d2, b_d2)

    def head(h0, layers):
        for w, b in layers[:4]:
            h0 = jnp.maximum(dense(h0, w, b), 0.0)
        return dense(h0, *layers[4])

    return x_diag, head(x_mid, sa), head(x_mid, rbb)


if __name__ == "__main__":
    key = jax.random.PRNGKey(0)
    k_x, k_p = jax.random.split(key)

    batch, in_features = 8, 32
    x = jax.random.normal(k_x, (batch, in_features), jnp.float32)
    params = build_params(k_p, in_features)

    x_diag, x_sa, x_rbb = classification_net_multi(x, params)
    jax.block_until_ready((x_diag, x_sa, x_rbb))

    # Strict check: pure-JAX mirror of the kernel math (bf16 weights/activations,
    # f32 accumulation) -> only accumulation-order level differences expected.
    md, ms, mr = reference_forward(x, params, weight_dtype=jnp.bfloat16)
    np.testing.assert_allclose(np.asarray(x_diag), np.asarray(md), rtol=1e-2, atol=1e-2)
    np.testing.assert_allclose(np.asarray(x_sa), np.asarray(ms), rtol=1e-2, atol=1e-2)
    np.testing.assert_allclose(np.asarray(x_rbb), np.asarray(mr), rtol=1e-2, atol=1e-2)

    # Independent PyTorch-parity check (full f32 math); looser tolerance covers
    # the kernel's bf16 weight/activation casts.
    rd, rs, rr = reference_forward(x, params, weight_dtype=jnp.float32)
    np.testing.assert_allclose(np.asarray(x_diag), np.asarray(rd), rtol=5e-2, atol=5e-2)
    np.testing.assert_allclose(np.asarray(x_sa), np.asarray(rs), rtol=5e-2, atol=5e-2)
    np.testing.assert_allclose(np.asarray(x_rbb), np.asarray(rr), rtol=5e-2, atol=5e-2)

    assert x_diag.shape == (batch, 1)
    assert x_sa.shape == (batch, 1)
    assert x_rbb.shape == (batch, 1)
    print("KERNEL_OK")
</pallas_src>

<mosaic_0001>
module attributes {stable_mosaic.version = 11 : i64} {
  func.func @classification_kernel(%arg0: i32, %arg1: memref<8x32xf32, #tpu.memory_space<vmem>>, %arg2: memref<32x512xbf16, #tpu.memory_space<vmem>>, %arg3: memref<3x512x512xbf16, #tpu.memory_space<vmem>>, %arg4: memref<512x256xbf16, #tpu.memory_space<vmem>>, %arg5: memref<256x768xbf16, #tpu.memory_space<vmem>>, %arg6: memref<6x256x256xbf16, #tpu.memory_space<vmem>>, %arg7: memref<3x256x128xbf16, #tpu.memory_space<vmem>>, %arg8: memref<13x768xf32, #tpu.memory_space<vmem>>, %arg9: memref<8x128xf32, #tpu.memory_space<vmem>>) attributes {dimension_semantics = [#tpu.dimension_semantics<parallel>], iteration_bounds = array<i64: 1>, scalar_prefetch = 0 : i64, scratch_operands = 0 : i64, tpu.core_type = #tpu.core_type<tc>, window_params = [{transform_indices = @transform_0, window_bounds = array<i64: 8, 32>}, {pipeline_mode = #tpu.pipeline_mode<synchronous>, transform_indices = @transform_1, window_bounds = array<i64: 32, 512>}, {pipeline_mode = #tpu.pipeline_mode<synchronous>, transform_indices = @transform_2, window_bounds = array<i64: 3, 512, 512>}, {pipeline_mode = #tpu.pipeline_mode<synchronous>, transform_indices = @transform_3, window_bounds = array<i64: 512, 256>}, {pipeline_mode = #tpu.pipeline_mode<synchronous>, transform_indices = @transform_4, window_bounds = array<i64: 256, 768>}, {pipeline_mode = #tpu.pipeline_mode<synchronous>, transform_indices = @transform_5, window_bounds = array<i64: 6, 256, 256>}, {pipeline_mode = #tpu.pipeline_mode<synchronous>, transform_indices = @transform_6, window_bounds = array<i64: 3, 256, 128>}, {pipeline_mode = #tpu.pipeline_mode<synchronous>, transform_indices = @transform_7, window_bounds = array<i64: 13, 768>}, {transform_indices = @transform_8, window_bounds = array<i64: 8, 128>}]} {
    %c0 = arith.constant 0 : index
    %c0_0 = arith.constant 0 : index
    %0 = vector.load %arg1[%c0, %c0_0] : memref<8x32xf32, #tpu.memory_space<vmem>>, vector<8x32xf32>
    %1 = arith.truncf %0 : vector<8x32xf32> to vector<8x32xbf16>
    %c0_1 = arith.constant 0 : index
    %c0_2 = arith.constant 0 : index
    %2 = vector.load %arg2[%c0_1, %c0_2] : memref<32x512xbf16, #tpu.memory_space<vmem>>, vector<32x512xbf16>
    %cst = arith.constant dense<0.000000e+00> : vector<8x512xf32>
    %3 = tpu.matmul %1, %2, %cst {dimension_numbers = #tpu.dot_dimension_numbers<[1], [0], [0], [1], [0, 0, 1, 1], [], []>} : vector<8x32xbf16>, vector<32x512xbf16>, vector<8x512xf32> -> vector<8x512xf32>
    %c0_3 = arith.constant 0 : index
    %c0_4 = arith.constant 0 : index
    %4 = vector.load %arg8[%c0_3, %c0_4] : memref<13x768xf32, #tpu.memory_space<vmem>>, vector<1x512xf32>
    %5 = vector.broadcast %4 : vector<1x512xf32> to vector<8x512xf32>
    %6 = arith.addf %3, %5 : vector<8x512xf32>
    %cst_5 = arith.constant 0.000000e+00 : f32
    %7 = vector.broadcast %cst_5 : f32 to vector<8x512xf32>
    %8 = arith.maximumf %6, %7 : vector<8x512xf32>
    %9 = arith.truncf %8 : vector<8x512xf32> to vector<8x512xbf16>
    %c0_6 = arith.constant 0 : index
    %c0_7 = arith.constant 0 : index
    %c0_8 = arith.constant 0 : index
    %10 = vector.load %arg3[%c0_6, %c0_7, %c0_8] : memref<3x512x512xbf16, #tpu.memory_space<vmem>>, vector<1x512x512xbf16>
    %11 = vector.shape_cast %10 : vector<1x512x512xbf16> to vector<512x512xbf16>
    %cst_9 = arith.constant dense<0.000000e+00> : vector<8x512xf32>
    %12 = tpu.matmul %9, %11, %cst_9 {dimension_numbers = #tpu.dot_dimension_numbers<[1], [0], [0], [1], [0, 0, 1, 1], [], []>} : vector<8x512xbf16>, vector<512x512xbf16>, vector<8x512xf32> -> vector<8x512xf32>
    %c1 = arith.constant 1 : index
    %c0_10 = arith.constant 0 : index
    %13 = vector.load %arg8[%c1, %c0_10] : memref<13x768xf32, #tpu.memory_space<vmem>>, vector<1x512xf32>
    %14 = vector.broadcast %13 : vector<1x512xf32> to vector<8x512xf32>
    %15 = arith.addf %12, %14 : vector<8x512xf32>
    %cst_11 = arith.constant 0.000000e+00 : f32
    %16 = vector.broadcast %cst_11 : f32 to vector<8x512xf32>
    %17 = arith.maximumf %15, %16 : vector<8x512xf32>
    %18 = arith.truncf %17 : vector<8x512xf32> to vector<8x512xbf16>
    %c1_12 = arith.constant 1 : index
    %c0_13 = arith.constant 0 : index
    %c0_14 = arith.constant 0 : index
    %19 = vector.load %arg3[%c1_12, %c0_13, %c0_14] : memref<3x512x512xbf16, #tpu.memory_space<vmem>>, vector<1x512x512xbf16>
    %20 = vector.shape_cast %19 : vector<1x512x512xbf16> to vector<512x512xbf16>
    %cst_15 = arith.constant dense<0.000000e+00> : vector<8x512xf32>
    %21 = tpu.matmul %18, %20, %cst_15 {dimension_numbers = #tpu.dot_dimension_numbers<[1], [0], [0], [1], [0, 0, 1, 1], [], []>} : vector<8x512xbf16>, vector<512x512xbf16>, vector<8x512xf32> -> vector<8x512xf32>
    %c2 = arith.constant 2 : index
    %c0_16 = arith.constant 0 : index
    %22 = vector.load %arg8[%c2, %c0_16] : memref<13x768xf32, #tpu.memory_space<vmem>>, vector<1x512xf32>
    %23 = vector.broadcast %22 : vector<1x512xf32> to vector<8x512xf32>
    %24 = arith.addf %21, %23 : vector<8x512xf32>
    %cst_17 = arith.constant 0.000000e+00 : f32
    %25 = vector.broadcast %cst_17 : f32 to vector<8x512xf32>
    %26 = arith.maximumf %24, %25 : vector<8x512xf32>
    %27 = arith.truncf %26 : vector<8x512xf32> to vector<8x512xbf16>
    %c2_18 = arith.constant 2 : index
    %c0_19 = arith.constant 0 : index
    %c0_20 = arith.constant 0 : index
    %28 = vector.load %arg3[%c2_18, %c0_19, %c0_20] : memref<3x512x512xbf16, #tpu.memory_space<vmem>>, vector<1x512x512xbf16>
    %29 = vector.shape_cast %28 : vector<1x512x512xbf16> to vector<512x512xbf16>
    %cst_21 = arith.constant dense<0.000000e+00> : vector<8x512xf32>
    %30 = tpu.matmul %27, %29, %cst_21 {dimension_numbers = #tpu.dot_dimension_numbers<[1], [0], [0], [1], [0, 0, 1, 1], [], []>} : vector<8x512xbf16>, vector<512x512xbf16>, vector<8x512xf32> -> vector<8x512xf32>
    %c3 = arith.constant 3 : index
    %c0_22 = arith.constant 0 : index
    %31 = vector.load %arg8[%c3, %c0_22] : memref<13x768xf32, #tpu.memory_space<vmem>>, vector<1x512xf32>
    %32 = vector.broadcast %31 : vector<1x512xf32> to vector<8x512xf32>
    %33 = arith.addf %30, %32 : vector<8x512xf32>
    %cst_23 = arith.constant 0.000000e+00 : f32
    %34 = vector.broadcast %cst_23 : f32 to vector<8x512xf32>
    %35 = arith.maximumf %33, %34 : vector<8x512xf32>
    %36 = arith.truncf %35 : vector<8x512xf32> to vector<8x512xbf16>
    %c0_24 = arith.constant 0 : index
    %c0_25 = arith.constant 0 : index
    %37 = vector.load %arg4[%c0_24, %c0_25] : memref<512x256xbf16, #tpu.memory_space<vmem>>, vector<512x256xbf16>
    %cst_26 = arith.constant dense<0.000000e+00> : vector<8x256xf32>
    %38 = tpu.matmul %36, %37, %cst_26 {dimension_numbers = #tpu.dot_dimension_numbers<[1], [0], [0], [1], [0, 0, 1, 1], [], []>} : vector<8x512xbf16>, vector<512x256xbf16>, vector<8x256xf32> -> vector<8x256xf32>
    %c4 = arith.constant 4 : index
    %c0_27 = arith.constant 0 : index
    %39 = vector.load %arg8[%c4, %c0_27] : memref<13x768xf32, #tpu.memory_space<vmem>>, vector<1x256xf32>
    %40 = vector.broadcast %39 : vector<1x256xf32> to vector<8x256xf32>
    %41 = arith.addf %38, %40 : vector<8x256xf32>
    %42 = arith.truncf %41 : vector<8x256xf32> to vector<8x256xbf16>
    %c0_28 = arith.constant 0 : index
    %c0_29 = arith.constant 0 : index
    %43 = vector.load %arg5[%c0_28, %c0_29] : memref<256x768xbf16, #tpu.memory_space<vmem>>, vector<256x768xbf16>
    %cst_30 = arith.constant dense<0.000000e+00> : vector<8x768xf32>
    %44 = tpu.matmul %42, %43, %cst_30 {dimension_numbers = #tpu.dot_dimension_numbers<[1], [0], [0], [1], [0, 0, 1, 1], [], []>} : vector<8x256xbf16>, vector<256x768xbf16>, vector<8x768xf32> -> vector<8x768xf32>
    %c5 = arith.constant 5 : index
    %c0_31 = arith.constant 0 : index
    %45 = vector.load %arg8[%c5, %c0_31] : memref<13x768xf32, #tpu.memory_space<vmem>>, vector<1x768xf32>
    %46 = vector.broadcast %45 : vector<1x768xf32> to vector<8x768xf32>
    %47 = arith.addf %44, %46 : vector<8x768xf32>
    %48 = vector.extract_strided_slice %47 {offsets = [0, 0], sizes = [8, 256], strides = [1, 1]} : vector<8x768xf32> to vector<8x256xf32>
    %cst_32 = arith.constant 0.00999999977 : f32
    %49 = vector.broadcast %cst_32 : f32 to vector<8x256xf32>
    %50 = arith.mulf %49, %48 : vector<8x256xf32>
    %51 = arith.maximumf %48, %50 : vector<8x256xf32>
    %52 = arith.truncf %51 : vector<8x256xf32> to vector<8x256xbf16>
    %53 = vector.extract_strided_slice %47 {offsets = [0, 256], sizes = [8, 256], strides = [1, 1]} : vector<8x768xf32> to vector<8x256xf32>
    %cst_33 = arith.constant 0.000000e+00 : f32
    %54 = vector.broadcast %cst_33 : f32 to vector<8x256xf32>
    %55 = arith.maximumf %53, %54 : vector<8x256xf32>
    %56 = arith.truncf %55 : vector<8x256xf32> to vector<8x256xbf16>
    %57 = vector.extract_strided_slice %47 {offsets = [0, 512], sizes = [8, 256], strides = [1, 1]} : vector<8x768xf32> to vector<8x256xf32>
    %cst_34 = arith.constant 0.000000e+00 : f32
    %58 = vector.broadcast %cst_34 : f32 to vector<8x256xf32>
    %59 = arith.maximumf %57, %58 : vector<8x256xf32>
    %60 = arith.truncf %59 : vector<8x256xf32> to vector<8x256xbf16>
    %c0_35 = arith.constant 0 : index
    %c0_36 = arith.constant 0 : index
    %c0_37 = arith.constant 0 : index
    %61 = vector.load %arg6[%c0_35, %c0_36, %c0_37] : memref<6x256x256xbf16, #tpu.memory_space<vmem>>, vector<1x256x256xbf16>
    %62 = vector.shape_cast %61 : vector<1x256x256xbf16> to vector<256x256xbf16>
    %cst_38 = arith.constant dense<0.000000e+00> : vector<8x256xf32>
    %63 = tpu.matmul %56, %62, %cst_38 {dimension_numbers = #tpu.dot_dimension_numbers<[1], [0], [0], [1], [0, 0, 1, 1], [], []>} : vector<8x256xbf16>, vector<256x256xbf16>, vector<8x256xf32> -> vector<8x256xf32>
    %c6 = arith.constant 6 : index
    %c0_39 = arith.constant 0 : index
    %64 = vector.load %arg8[%c6, %c0_39] : memref<13x768xf32, #tpu.memory_space<vmem>>, vector<1x256xf32>
    %65 = vector.broadcast %64 : vector<1x256xf32> to vector<8x256xf32>
    %66 = arith.addf %63, %65 : vector<8x256xf32>
    %cst_40 = arith.constant 0.000000e+00 : f32
    %67 = vector.broadcast %cst_40 : f32 to vector<8x256xf32>
    %68 = arith.maximumf %66, %67 : vector<8x256xf32>
    %69 = arith.truncf %68 : vector<8x256xf32> to vector<8x256xbf16>
    %c1_41 = arith.constant 1 : index
    %c0_42 = arith.constant 0 : index
    %c0_43 = arith.constant 0 : index
    %70 = vector.load %arg6[%c1_41, %c0_42, %c0_43] : memref<6x256x256xbf16, #tpu.memory_space<vmem>>, vector<1x256x256xbf16>
    %71 = vector.shape_cast %70 : vector<1x256x256xbf16> to vector<256x256xbf16>
    %cst_44 = arith.constant dense<0.000000e+00> : vector<8x256xf32>
    %72 = tpu.matmul %69, %71, %cst_44 {dimension_numbers = #tpu.dot_dimension_numbers<[1], [0], [0], [1], [0, 0, 1, 1], [], []>} : vector<8x256xbf16>, vector<256x256xbf16>, vector<8x256xf32> -> vector<8x256xf32>
    %c7 = arith.constant 7 : index
    %c0_45 = arith.constant 0 : index
    %73 = vector.load %arg8[%c7, %c0_45] : memref<13x768xf32, #tpu.memory_space<vmem>>, vector<1x256xf32>
    %74 = vector.broadcast %73 : vector<1x256xf32> to vector<8x256xf32>
    %75 = arith.addf %72, %74 : vector<8x256xf32>
    %cst_46 = arith.constant 0.000000e+00 : f32
    %76 = vector.broadcast %cst_46 : f32 to vector<8x256xf32>
    %77 = arith.maximumf %75, %76 : vector<8x256xf32>
    %78 = arith.truncf %77 : vector<8x256xf32> to vector<8x256xbf16>
    %c2_47 = arith.constant 2 : index
    %c0_48 = arith.constant 0 : index
    %c0_49 = arith.constant 0 : index
    %79 = vector.load %arg6[%c2_47, %c0_48, %c0_49] : memref<6x256x256xbf16, #tpu.memory_space<vmem>>, vector<1x256x256xbf16>
    %80 = vector.shape_cast %79 : vector<1x256x256xbf16> to vector<256x256xbf16>
    %cst_50 = arith.constant dense<0.000000e+00> : vector<8x256xf32>
    %81 = tpu.matmul %78, %80, %cst_50 {dimension_numbers = #tpu.dot_dimension_numbers<[1], [0], [0], [1], [0, 0, 1, 1], [], []>} : vector<8x256xbf16>, vector<256x256xbf16>, vector<8x256xf32> -> vector<8x256xf32>
    %c8 = arith.constant 8 : index
    %c0_51 = arith.constant 0 : index
    %82 = vector.load %arg8[%c8, %c0_51] : memref<13x768xf32, #tpu.memory_space<vmem>>, vector<1x256xf32>
    %83 = vector.broadcast %82 : vector<1x256xf32> to vector<8x256xf32>
    %84 = arith.addf %81, %83 : vector<8x256xf32>
    %cst_52 = arith.constant 0.000000e+00 : f32
    %85 = vector.broadcast %cst_52 : f32 to vector<8x256xf32>
    %86 = arith.maximumf %84, %85 : vector<8x256xf32>
    %87 = arith.truncf %86 : vector<8x256xf32> to vector<8x256xbf16>
    %c3_53 = arith.constant 3 : index
    %c0_54 = arith.constant 0 : index
    %c0_55 = arith.constant 0 : index
    %88 = vector.load %arg6[%c3_53, %c0_54, %c0_55] : memref<6x256x256xbf16, #tpu.memory_space<vmem>>, vector<1x256x256xbf16>
    %89 = vector.shape_cast %88 : vector<1x256x256xbf16> to vector<256x256xbf16>
    %cst_56 = arith.constant dense<0.000000e+00> : vector<8x256xf32>
    %90 = tpu.matmul %60, %89, %cst_56 {dimension_numbers = #tpu.dot_dimension_numbers<[1], [0], [0], [1], [0, 0, 1, 1], [], []>} : vector<8x256xbf16>, vector<256x256xbf16>, vector<8x256xf32> -> vector<8x256xf32>
    %c9 = arith.constant 9 : index
    %c0_57 = arith.constant 0 : index
    %91 = vector.load %arg8[%c9, %c0_57] : memref<13x768xf32, #tpu.memory_space<vmem>>, vector<1x256xf32>
    %92 = vector.broadcast %91 : vector<1x256xf32> to vector<8x256xf32>
    %93 = arith.addf %90, %92 : vector<8x256xf32>
    %cst_58 = arith.constant 0.000000e+00 : f32
    %94 = vector.broadcast %cst_58 : f32 to vector<8x256xf32>
    %95 = arith.maximumf %93, %94 : vector<8x256xf32>
    %96 = arith.truncf %95 : vector<8x256xf32> to vector<8x256xbf16>
    %c4_59 = arith.constant 4 : index
    %c0_60 = arith.constant 0 : index
    %c0_61 = arith.constant 0 : index
    %97 = vector.load %arg6[%c4_59, %c0_60, %c0_61] : memref<6x256x256xbf16, #tpu.memory_space<vmem>>, vector<1x256x256xbf16>
    %98 = vector.shape_cast %97 : vector<1x256x256xbf16> to vector<256x256xbf16>
    %cst_62 = arith.constant dense<0.000000e+00> : vector<8x256xf32>
    %99 = tpu.matmul %96, %98, %cst_62 {dimension_numbers = #tpu.dot_dimension_numbers<[1], [0], [0], [1], [0, 0, 1, 1], [], []>} : vector<8x256xbf16>, vector<256x256xbf16>, vector<8x256xf32> -> vector<8x256xf32>
    %c10 = arith.constant 10 : index
    %c0_63 = arith.constant 0 : index
    %100 = vector.load %arg8[%c10, %c0_63] : memref<13x768xf32, #tpu.memory_space<vmem>>, vector<1x256xf32>
    %101 = vector.broadcast %100 : vector<1x256xf32> to vector<8x256xf32>
    %102 = arith.addf %99, %101 : vector<8x256xf32>
    %cst_64 = arith.constant 0.000000e+00 : f32
    %103 = vector.broadcast %cst_64 : f32 to vector<8x256xf32>
    %104 = arith.maximumf %102, %103 : vector<8x256xf32>
    %105 = arith.truncf %104 : vector<8x256xf32> to vector<8x256xbf16>
    %c5_65 = arith.constant 5 : index
    %c0_66 = arith.constant 0 : index
    %c0_67 = arith.constant 0 : index
    %106 = vector.load %arg6[%c5_65, %c0_66, %c0_67] : memref<6x256x256xbf16, #tpu.memory_space<vmem>>, vector<1x256x256xbf16>
    %107 = vector.shape_cast %106 : vector<1x256x256xbf16> to vector<256x256xbf16>
    %cst_68 = arith.constant dense<0.000000e+00> : vector<8x256xf32>
    %108 = tpu.matmul %105, %107, %cst_68 {dimension_numbers = #tpu.dot_dimension_numbers<[1], [0], [0], [1], [0, 0, 1, 1], [], []>} : vector<8x256xbf16>, vector<256x256xbf16>, vector<8x256xf32> -> vector<8x256xf32>
    %c11 = arith.constant 11 : index
    %c0_69 = arith.constant 0 : index
    %109 = vector.load %arg8[%c11, %c0_69] : memref<13x768xf32, #tpu.memory_space<vmem>>, vector<1x256xf32>
    %110 = vector.broadcast %109 : vector<1x256xf32> to vector<8x256xf32>
    %111 = arith.addf %108, %110 : vector<8x256xf32>
    %cst_70 = arith.constant 0.000000e+00 : f32
    %112 = vector.broadcast %cst_70 : f32 to vector<8x256xf32>
    %113 = arith.maximumf %111, %112 : vector<8x256xf32>
    %114 = arith.truncf %113 : vector<8x256xf32> to vector<8x256xbf16>
    %c0_71 = arith.constant 0 : index
    %c0_72 = arith.constant 0 : index
    %c0_73 = arith.constant 0 : index
    %115 = vector.load %arg7[%c0_71, %c0_72, %c0_73] : memref<3x256x128xbf16, #tpu.memory_space<vmem>>, vector<1x256x128xbf16>
    %116 = vector.shape_cast %115 : vector<1x256x128xbf16> to vector<256x128xbf16>
    %cst_74 = arith.constant dense<0.000000e+00> : vector<8x128xf32>
    %117 = tpu.matmul %52, %116, %cst_74 {dimension_numbers = #tpu.dot_dimension_numbers<[1], [0], [0], [1], [0, 0, 1, 1], [], []>} : vector<8x256xbf16>, vector<256x128xbf16>, vector<8x128xf32> -> vector<8x128xf32>
    %c1_75 = arith.constant 1 : index
    %c0_76 = arith.constant 0 : index
    %c0_77 = arith.constant 0 : index
    %118 = vector.load %arg7[%c1_75, %c0_76, %c0_77] : memref<3x256x128xbf16, #tpu.memory_space<vmem>>, vector<1x256x128xbf16>
    %119 = vector.shape_cast %118 : vector<1x256x128xbf16> to vector<256x128xbf16>
    %cst_78 = arith.constant dense<0.000000e+00> : vector<8x128xf32>
    %120 = tpu.matmul %87, %119, %cst_78 {dimension_numbers = #tpu.dot_dimension_numbers<[1], [0], [0], [1], [0, 0, 1, 1], [], []>} : vector<8x256xbf16>, vector<256x128xbf16>, vector<8x128xf32> -> vector<8x128xf32>
    %121 = arith.addf %117, %120 : vector<8x128xf32>
    %c2_79 = arith.constant 2 : index
    %c0_80 = arith.constant 0 : index
    %c0_81 = arith.constant 0 : index
    %122 = vector.load %arg7[%c2_79, %c0_80, %c0_81] : memref<3x256x128xbf16, #tpu.memory_space<vmem>>, vector<1x256x128xbf16>
    %123 = vector.shape_cast %122 : vector<1x256x128xbf16> to vector<256x128xbf16>
    %cst_82 = arith.constant dense<0.000000e+00> : vector<8x128xf32>
    %124 = tpu.matmul %114, %123, %cst_82 {dimension_numbers = #tpu.dot_dimension_numbers<[1], [0], [0], [1], [0, 0, 1, 1], [], []>} : vector<8x256xbf16>, vector<256x128xbf16>, vector<8x128xf32> -> vector<8x128xf32>
    %125 = arith.addf %121, %124 : vector<8x128xf32>
    %c12 = arith.constant 12 : index
    %c0_83 = arith.constant 0 : index
    %126 = vector.load %arg8[%c12, %c0_83] : memref<13x768xf32, #tpu.memory_space<vmem>>, vector<1x128xf32>
    %127 = vector.broadcast %126 : vector<1x128xf32> to vector<8x128xf32>
    %128 = arith.addf %125, %127 : vector<8x128xf32>
    %c0_84 = arith.constant 0 : index
    %c0_85 = arith.constant 0 : index
    %129 = vector.load %arg9[%c0_84, %c0_85] : memref<8x128xf32, #tpu.memory_space<vmem>>, vector<8x128xf32>
    tpu.vector_store %arg9[%c0_84, %c0_85], %128 {strides = array<i32>} : memref<8x128xf32, #tpu.memory_space<vmem>>, vector<8x128xf32>,
    return
  }
  func.func @transform_0(%arg0: i32) -> (i32, i32) {
    %c0_i32 = arith.constant 0 : i32
    %c0_i32_0 = arith.constant 0 : i32
    return %arg0, %c0_i32 : i32, i32
  }
  func.func @transform_1(%arg0: i32) -> (i32, i32) {
    %c0_i32 = arith.constant 0 : i32
    %c0_i32_0 = arith.constant 0 : i32
    %c0_i32_1 = arith.constant 0 : i32
    return %c0_i32, %c0_i32_0 : i32, i32
  }
  func.func @transform_2(%arg0: i32) -> (i32, i32, i32) {
    %c0_i32 = arith.constant 0 : i32
    %c0_i32_0 = arith.constant 0 : i32
    %c0_i32_1 = arith.constant 0 : i32
    %c0_i32_2 = arith.constant 0 : i32
    return %c0_i32, %c0_i32_0, %c0_i32_1 : i32, i32, i32
  }
  func.func @transform_3(%arg0: i32) -> (i32, i32) {
    %c0_i32 = arith.constant 0 : i32
    %c0_i32_0 = arith.constant 0 : i32
    %c0_i32_1 = arith.constant 0 : i32
    return %c0_i32, %c0_i32_0 : i32, i32
  }
  func.func @transform_4(%arg0: i32) -> (i32, i32) {
    %c0_i32 = arith.constant 0 : i32
    %c0_i32_0 = arith.constant 0 : i32
    %c0_i32_1 = arith.constant 0 : i32
    return %c0_i32, %c0_i32_0 : i32, i32
  }
  func.func @transform_5(%arg0: i32) -> (i32, i32, i32) {
    %c0_i32 = arith.constant 0 : i32
    %c0_i32_0 = arith.constant 0 : i32
    %c0_i32_1 = arith.constant 0 : i32
    %c0_i32_2 = arith.constant 0 : i32
    return %c0_i32, %c0_i32_0, %c0_i32_1 : i32, i32, i32
  }
  func.func @transform_6(%arg0: i32) -> (i32, i32, i32) {
    %c0_i32 = arith.constant 0 : i32
    %c0_i32_0 = arith.constant 0 : i32
    %c0_i32_1 = arith.constant 0 : i32
    %c0_i32_2 = arith.constant 0 : i32
    return %c0_i32, %c0_i32_0, %c0_i32_1 : i32, i32, i32
  }
  func.func @transform_7(%arg0: i32) -> (i32, i32) {
    %c0_i32 = arith.constant 0 : i32
    %c0_i32_0 = arith.constant 0 : i32
    %c0_i32_1 = arith.constant 0 : i32
    return %c0_i32, %c0_i32_0 : i32, i32
  }
  func.func @transform_8(%arg0: i32) -> (i32, i32) {
    %c0_i32 = arith.constant 0 : i32
    %c0_i32_0 = arith.constant 0 : i32
    return %arg0, %c0_i32 : i32, i32
  }
}

</mosaic_0001>

<llo_original>
// kernel: tpu_custom_call.1
$region0: #{tpu_custom_call.1}
  #allocation0 [shape = 'u32[]', space=smem, size = 0x4, offset = 0x4, fixed_abs, tag = 'smem constant byte address 0x4 - core index']
  #allocation1 [shape = 'u32[144,128]{1,0:T(1,128)}', space=vmem, size = 0x12000, scoped, tag = 'internal scratch']
  %s0 = inlined_call_operand.hbm [shape: f32[8,32], index: 0, kind: input, shape index: {}]
  %s1 = inlined_call_operand.hbm [shape: bf16[32,512], index: 1, kind: input, shape index: {}]
  %s2 = inlined_call_operand.hbm [shape: bf16[3,512,512], index: 2, kind: input, shape index: {}]
  %s3 = inlined_call_operand.hbm [shape: bf16[512,256], index: 3, kind: input, shape index: {}]
  %s4 = inlined_call_operand.hbm [shape: bf16[256,768], index: 4, kind: input, shape index: {}]
  %s5 = inlined_call_operand.hbm [shape: bf16[6,256,256], index: 5, kind: input, shape index: {}]
  %s6 = inlined_call_operand.hbm [shape: bf16[3,256,128], index: 6, kind: input, shape index: {}]
  %s7 = inlined_call_operand.hbm [shape: f32[13,768], index: 7, kind: input, shape index: {}]
  %s8 = inlined_call_operand.hbm [shape: f32[8,128], index: 8, kind: output, shape index: {}]
  %s9 = sld [smem:[#allocation0]]
  $region74: #{tpu_custom_call.1} parent=0
    _
  %s11 = ssub.s32 1, %s9
  %s12 = scalar_select 0, %s11, %s9
  $region1: #{tpu_custom_call.1} parent=0
    #allocation2 [shape = 'u8[4096]{0}', space=vmem, size = 0x1000, scoped, tag = 'input window, operand 0, single buffered']
    #allocation3 [shape = 's32[1]{0}', space=sflag, size = 0x4, scoped, tag = 'scoped memory for tpu_custom_call.1']
    #allocation4 [shape = 's32[1]{0}', space=sflag, size = 0x4, scoped, tag = 'scoped memory for tpu_custom_call.1']
    #allocation5 [shape = 'u8[32768]{0}', space=vmem, size = 0x8000, scoped, tag = 'input window, operand 1, single buffered']
    #allocation6 [shape = 's32[1]{0}', space=sflag, size = 0x4, scoped, tag = 'scoped memory for tpu_custom_call.1']
    #allocation7 [shape = 'u8[1572864]{0}', space=vmem, size = 0x180000, scoped, tag = 'input window, operand 2, single buffered']
    #allocation8 [shape = 'u8[262144]{0}', space=vmem, size = 0x40000, scoped, tag = 'input window, operand 3, single buffered']
    #allocation9 [shape = 's32[1]{0}', space=sflag, size = 0x4, scoped, tag = 'scoped memory for tpu_custom_call.1']
    #allocation10 [shape = 'u8[393216]{0}', space=vmem, size = 0x60000, scoped, tag = 'input window, operand 4, single buffered']
    #allocation11 [shape = 'u8[786432]{0}', space=vmem, size = 0xc0000, scoped, tag = 'input window, operand 5, single buffered']
    #allocation12 [shape = 's32[1]{0}', space=sflag, size = 0x4, scoped, tag = 'scoped memory for tpu_custom_call.1']
    #allocation13 [shape = 'u8[196608]{0}', space=vmem, size = 0x30000, scoped, tag = 'input window, operand 6, single buffered']
    #allocation14 [shape = 'u8[49152]{0}', space=vmem, size = 0xc000, scoped, tag = 'input window, operand 7, single buffered']
    #allocation15 [shape = 's32[1]{0}', space=sflag, size = 0x4, scoped, tag = 'scoped memory for tpu_custom_call.1']
    #allocation16 [shape = 'u8[4096]{0}', space=vmem, size = 0x1000, scoped, tag = 'output window, operand 0, single buffered']
    %13 = vsyncpa [#allocation3], 0
    %14 = vsyncpa [#allocation6], 0
    %15 = vsyncpa [#allocation9], 0
    %16 = vsyncpa [#allocation12], 0
    %17 = vsyncpa [#allocation15], 0
    %18 = vsyncpa [#allocation4], 0
    // Predicated region
    $region2: #{tpu_custom_call.1} parent=1 // pred_check
      _
    $region3: #{tpu_custom_call.1} parent=1 // pred_check_branch
      %20 = sbr.rel (0) target = $region5
    $region4: #{tpu_custom_call.1} parent=1 // pred_region
      %s22 = ssub.s32 128, 128
      %23 = vsyncadd [#allocation3], %s22
      %s25 = sshll.u32 [#allocation2], 4
      %s26 = int_to_ptr.vmem [resolvable:$true] %s25
      %28 = dma.hbm_to_vmem [thread:$0]  %s0, 128, %s26, [#allocation3]
    $region5: #{tpu_custom_call.1} parent=1 // pred_fallthru
      _
    // Predicated region
    $region6: #{tpu_custom_call.1} parent=1 // pred_check
      _
    $region7: #{tpu_custom_call.1} parent=1 // pred_check_branch
      %30 = sbr.rel (0) target = $region9
    $region8: #{tpu_custom_call.1} parent=1 // pred_region
      %s32 = ssub.s32 1024, 1024
      %33 = vsyncadd [#allocation6], %s32
      %s34 = sshll.u32 [#allocation5], 4
      %s35 = int_to_ptr.vmem [resolvable:$true] %s34
      %40 = dma.hbm_to_vmem [thread:$0]  %s1, 1024, %s35, [#allocation6], 256, 256, 16
    $region9: #{tpu_custom_call.1} parent=1 // pred_fallthru
      _
    // Predicated region
    $region10: #{tpu_custom_call.1} parent=1 // pred_check
      _
    $region11: #{tpu_custom_call.1} parent=1 // pred_check_branch
      %42 = sbr.rel (0) target = $region13
    $region12: #{tpu_custom_call.1} parent=1 // pred_region
      %s44 = ssub.s32 49152, 49152
      %45 = vsyncadd [#allocation6], %s44
      %s46 = sshll.u32 [#allocation7], 4
      %s47 = int_to_ptr.vmem [resolvable:$true] %s46
      %52 = dma.hbm_to_vmem [thread:$0]  %s2, 49152, %s47, [#allocation6], 256, 256, 16
    $region13: #{tpu_custom_call.1} parent=1 // pred_fallthru
      _
    // Predicated region
    $region14: #{tpu_custom_call.1} parent=1 // pred_check
      _
    $region15: #{tpu_custom_call.1} parent=1 // pred_check_branch
      %54 = sbr.rel (0) target = $region17
    $region16: #{tpu_custom_call.1} parent=1 // pred_region
      %s56 = ssub.s32 8192, 8192
      %57 = vsyncadd [#allocation9], %s56
      %s58 = sshll.u32 [#allocation8], 4
      %s59 = int_to_ptr.vmem [resolvable:$true] %s58
      %64 = dma.hbm_to_vmem [thread:$0]  %s3, 8192, %s59, [#allocation9], 128, 128, 8
    $region17: #{tpu_custom_call.1} parent=1 // pred_fallthru
      _
    // Predicated region
    $region18: #{tpu_custom_call.1} parent=1 // pred_check
      _
    $region19: #{tpu_custom_call.1} parent=1 // pred_check_branch
      %66 = sbr.rel (0) target = $region21
    $region20: #{tpu_custom_call.1} parent=1 // pred_region
      %s68 = ssub.s32 12288, 12288
      %69 = vsyncadd [#allocation9], %s68
      %s70 = sshll.u32 [#allocation10], 4
      %s71 = int_to_ptr.vmem [resolvable:$true] %s70
      %76 = dma.hbm_to_vmem [thread:$0]  %s4, 12288, %s71, [#allocation9], 384, 384, 24
    $region21: #{tpu_custom_call.1} parent=1 // pred_fallthru
      _
    // Predicated region
    $region22: #{tpu_custom_call.1} parent=1 // pred_check
      _
    $region23: #{tpu_custom_call.1} parent=1 // pred_check_branch
      %78 = sbr.rel (0) target = $region25
    $region24: #{tpu_custom_call.1} parent=1 // pred_region
      %s80 = ssub.s32 24576, 24576
      %81 = vsyncadd [#allocation12], %s80
      %s82 = sshll.u32 [#allocation11], 4
      %s83 = int_to_ptr.vmem [resolvable:$true] %s82
      %88 = dma.hbm_to_vmem [thread:$0]  %s5, 24576, %s83, [#allocation12], 128, 128, 8
    $region25: #{tpu_custom_call.1} parent=1 // pred_fallthru
      _
    // Predicated region
    $region26: #{tpu_custom_call.1} parent=1 // pred_check
      _
    $region27: #{tpu_custom_call.1} parent=1 // pred_check_branch
      %90 = sbr.rel (0) target = $region29
    $region28: #{tpu_custom_call.1} parent=1 // pred_region
      %s92 = ssub.s32 6144, 6144
      %93 = vsyncadd [#allocation12], %s92
      %s94 = sshll.u32 [#allocation13], 4
      %s95 = int_to_ptr.vmem [resolvable:$true] %s94
      %100 = dma.hbm_to_vmem [thread:$0]  %s6, 6144, %s95, [#allocation12], 64, 64, 4
    $region29: #{tpu_custom_call.1} parent=1 // pred_fallthru
      _
    // Predicated region
    $region30: #{tpu_custom_call.1} parent=1 // pred_check
      _
    $region31: #{tpu_custom_call.1} parent=1 // pred_check_branch
      %102 = sbr.rel (0) target = $region33
    $region32: #{tpu_custom_call.1} parent=1 // pred_region
      %s104 = ssub.s32 1536, 1536
      %105 = vsyncadd [#allocation15], %s104
      %s106 = sshll.u32 [#allocation14], 4
      %s107 = int_to_ptr.vmem [resolvable:$true] %s106
      %112 = dma.hbm_to_vmem [thread:$0]  %s7, 1536, %s107, [#allocation15], 768, 768, 48
    $region33: #{tpu_custom_call.1} parent=1 // pred_fallthru
      _
    // Predicated region
    $region34: #{tpu_custom_call.1} parent=1 // pred_check
      _
    $region35: #{tpu_custom_call.1} parent=1 // pred_check_branch
      %114 = sbr.rel (0) target = $region37
    $region36: #{tpu_custom_call.1} parent=1 // pred_region
      %115 = dma.done [#allocation3], 128
    $region37: #{tpu_custom_call.1} parent=1 // pred_fallthru
      _
    // Predicated region
    $region38: #{tpu_custom_call.1} parent=1 // pred_check
      _
    $region39: #{tpu_custom_call.1} parent=1 // pred_check_branch
      %117 = sbr.rel (0) target = $region41
    $region40: #{tpu_custom_call.1} parent=1 // pred_region
      %118 = dma.done [#allocation6], 1024
    $region41: #{tpu_custom_call.1} parent=1 // pred_fallthru
      _
    // Predicated region
    $region42: #{tpu_custom_call.1} parent=1 // pred_check
      _
    $region43: #{tpu_custom_call.1} parent=1 // pred_check_branch
      %120 = sbr.rel (0) target = $region45
    $region44: #{tpu_custom_call.1} parent=1 // pred_region
      %121 = dma.done [#allocation6], 49152
    $region45: #{tpu_custom_call.1} parent=1 // pred_fallthru
      _
    // Predicated region
    $region46: #{tpu_custom_call.1} parent=1 // pred_check
      _
    $region47: #{tpu_custom_call.1} parent=1 // pred_check_branch
      %123 = sbr.rel (0) target = $region49
    $region48: #{tpu_custom_call.1} parent=1 // pred_region
      %124 = dma.done [#allocation9], 8192
    $region49: #{tpu_custom_call.1} parent=1 // pred_fallthru
      _
    // Predicated region
    $region50: #{tpu_custom_call.1} parent=1 // pred_check
      _
    $region51: #{tpu_custom_call.1} parent=1 // pred_check_branch
      %126 = sbr.rel (0) target = $region53
    $region52: #{tpu_custom_call.1} parent=1 // pred_region
      %127 = dma.done [#allocation9], 12288
    $region53: #{tpu_custom_call.1} parent=1 // pred_fallthru
      _
    // Predicated region
    $region54: #{tpu_custom_call.1} parent=1 // pred_check
      _
    $region55: #{tpu_custom_call.1} parent=1 // pred_check_branch
      %129 = sbr.rel (0) target = $region57
    $region56: #{tpu_custom_call.1} parent=1 // pred_region
      %130 = dma.done [#allocation12], 24576
    $region57: #{tpu_custom_call.1} parent=1 // pred_fallthru
      _
    // Predicated region
    $region58: #{tpu_custom_call.1} parent=1 // pred_check
      _
    $region59: #{tpu_custom_call.1} parent=1 // pred_check_branch
      %132 = sbr.rel (0) target = $region61
    $region60: #{tpu_custom_call.1} parent=1 // pred_region
      %133 = dma.done [#allocation12], 6144
    $region61: #{tpu_custom_call.1} parent=1 // pred_fallthru
      _
    // Predicated region
    $region62: #{tpu_custom_call.1} parent=1 // pred_check
      _
    $region63: #{tpu_custom_call.1} parent=1 // pred_check_branch
      %135 = sbr.rel (0) target = $region65
    $region64: #{tpu_custom_call.1} parent=1 // pred_region
      %136 = dma.done [#allocation15], 1536
    $region65: #{tpu_custom_call.1} parent=1 // pred_fallthru
      _
    %v138 = vld [vmem:[#allocation2] sm:$0xff]
    %v139 = vpack.c.bf16 %v138, %v138
    %v140 = vld [vmem:[#allocation5] sm:$0xff]
    %v141 = vld [vmem:[#allocation5 + $0x8] sm:$0xff]
    %v142 = vld [vmem:[#allocation5 + $0x10] sm:$0xff]
    %v143 = vld [vmem:[#allocation5 + $0x18] sm:$0xff]
    %v144 = vld [vmem:[#allocation5 + $0x20] sm:$0xff]
    %v145 = vld [vmem:[#allocation5 + $0x28] sm:$0xff]
    %v146 = vld [vmem:[#allocation5 + $0x30] sm:$0xff]
    %v147 = vld [vmem:[#allocation5 + $0x38] sm:$0xff]
    %v148 = vld [vmem:[#allocation14] ss:$8 sm:$0xf]
    %v150 = vlaneseq
    %v151 = vshrl.u32 %v150, 7
    %v152 = vsub.s32 0, %v151
    %v153 = vrot.slane %v148, %v152
    %v154 = vlaneseq
    %v155 = vshrl.u32 %v154, 7
    %v156 = vsub.s32 1, %v155
    %v157 = vrot.slane %v148, %v156
    %v158 = vlaneseq
    %v159 = vshrl.u32 %v158, 7
    %v160 = vsub.s32 2, %v159
    %v161 = vrot.slane %v148, %v160
    %v162 = vlaneseq
    %v163 = vshrl.u32 %v162, 7
    %v164 = vsub.s32 3, %v163
    %v165 = vrot.slane %v148, %v164
    %v178 = vunpack.c.l.b16 %v140
    %v179 = vunpack.c.h.b16 %v140
    %v180 = vunpack.c.l.b16 %v141
    %v181 = vunpack.c.h.b16 %v141
    %v182 = vunpack.c.l.b16 %v142
    %v183 = vunpack.c.h.b16 %v142
    %v184 = vunpack.c.l.b16 %v143
    %v185 = vunpack.c.h.b16 %v143
    %v186 = vunpack.c.l.b16 %v144
    %v187 = vunpack.c.h.b16 %v144
    %v188 = vunpack.c.l.b16 %v145
    %v189 = vunpack.c.h.b16 %v145
    %v190 = vunpack.c.l.b16 %v146
    %v191 = vunpack.c.h.b16 %v146
    %v192 = vunpack.c.l.b16 %v147
    %v193 = vunpack.c.h.b16 %v147
    %v194 = vpack.c.b16 %v182, %v178
    %v195 = vpack.c.b16 %v183, %v179
    %v196 = vpack.c.b16 %v184, %v180
    %v197 = vpack.c.b16 %v185, %v181
    %v198 = vpack.c.b16 %v190, %v186
    %v199 = vpack.c.b16 %v191, %v187
    %v200 = vpack.c.b16 %v192, %v188
    %v201 = vpack.c.b16 %v193, %v189
    %vm210 = vcmask 261120
    %v212 = vsel %vm210, %v139, 0
    %214 = vmatprep.subr.bf16.mxu0 0
    %215 = vmatpush1.bf16.msra.mxu0 0
    %216 = vmatprep.subr.bf16.mxu0 0
    %217 = vmatpush1.bf16.msra.mxu0 0
    %218 = vmatprep.subr.bf16.mxu0 0
    %219 = vmatpush1.bf16.msra.mxu0 0
    %220 = vmatprep.subr.bf16.mxu0 0
    %221 = vmatpush1.bf16.msra.mxu0 0
    %222 = vmatprep.subr.bf16.mxu0 0
    %223 = vmatpush1.bf16.msra.mxu0 0
    %224 = vmatprep.subr.bf16.mxu0 0
    %225 = vmatpush1.bf16.msra.mxu0 0
    %226 = vmatprep.subr.bf16.mxu0 %v199
    %227 = vmatpush1.bf16.msra.mxu0 %v198
    %228 = vmatprep.subr.bf16.mxu0 %v195
    %229 = vmatpush1.bf16.msra.mxu0 %v194
    %230 = vmatprep.subr.bf16.mxu0 0
    %231 = vmatpush2.bf16.msra.mxu0 0
    %232 = vmatprep.subr.bf16.mxu0 0
    %233 = vmatpush2.bf16.msra.mxu0 0
    %234 = vmatprep.subr.bf16.mxu0 0
    %235 = vmatpush2.bf16.msra.mxu0 0
    %236 = vmatprep.subr.bf16.mxu0 0
    %237 = vmatpush2.bf16.msra.mxu0 0
    %238 = vmatprep.subr.bf16.mxu0 0
    %239 = vmatpush2.bf16.msra.mxu0 0
    %240 = vmatprep.subr.bf16.mxu0 0
    %241 = vmatpush2.bf16.msra.mxu0 0
    %242 = vmatprep.subr.bf16.mxu0 0
    %243 = vmatpush2.bf16.msra.mxu0 0
    %244 = vmatprep.subr.bf16.mxu0 0
    %245 = vmatpush2.bf16.msra.mxu0 0
    %246 = vmatprep.mubr.bf16.mxu0 0
    %247 = vmatmul.mubr.bf16.gmra.mxu0 %v212
    %v248 = vpop.f32.mrf.mxu0
    %v249 = vadd.f32 %v153, %v248
    %v250 = vpop.f32.mrf.mxu0
    %v251 = vadd.f32 %v157, %v250
    %v252 = vpop.f32.mrf.mxu0
    %v253 = vpop.f32.mrf.mxu0
    %254 = vdwg.mxu0
    %255 = vmatprep.subr.bf16.mxu0 0
    %256 = vmatpush1.bf16.msra.mxu0 0
    %257 = vmatprep.subr.bf16.mxu0 0
    %258 = vmatpush1.bf16.msra.mxu0 0
    %259 = vmatprep.subr.bf16.mxu0 0
    %260 = vmatpush1.bf16.msra.mxu0 0
    %261 = vmatprep.subr.bf16.mxu0 0
    %262 = vmatpush1.bf16.msra.mxu0 0
    %263 = vmatprep.subr.bf16.mxu0 0
    %264 = vmatpush1.bf16.msra.mxu0 0
    %265 = vmatprep.subr.bf16.mxu0 0
    %266 = vmatpush1.bf16.msra.mxu0 0
    %267 = vmatprep.subr.bf16.mxu0 %v201
    %268 = vmatpush1.bf16.msra.mxu0 %v200
    %269 = vmatprep.subr.bf16.mxu0 %v197
    %270 = vmatpush1.bf16.msra.mxu0 %v196
    %271 = vmatprep.subr.bf16.mxu0 0
    %272 = vmatpush2.bf16.msra.mxu0 0
    %273 = vmatprep.subr.bf16.mxu0 0
    %274 = vmatpush2.bf16.msra.mxu0 0
    %275 = vmatprep.subr.bf16.mxu0 0
    %276 = vmatpush2.bf16.msra.mxu0 0
    %277 = vmatprep.subr.bf16.mxu0 0
    %278 = vmatpush2.bf16.msra.mxu0 0
    %279 = vmatprep.subr.bf16.mxu0 0
    %280 = vmatpush2.bf16.msra.mxu0 0
    %281 = vmatprep.subr.bf16.mxu0 0
    %282 = vmatpush2.bf16.msra.mxu0 0
    %283 = vmatprep.subr.bf16.mxu0 0
    %284 = vmatpush2.bf16.msra.mxu0 0
    %285 = vmatprep.subr.bf16.mxu0 0
    %286 = vmatpush2.bf16.msra.mxu0 0
    %287 = vmatprep.mubr.bf16.mxu0 0
    %288 = vmatmul.mubr.bf16.gmra.mxu0 %v212
    %v289 = vpop.f32.mrf.mxu0
    %v290 = vadd.f32 %v161, %v289
    %v291 = vpop.f32.mrf.mxu0
    %v292 = vadd.f32 %v165, %v291
    %v293 = vpop.f32.mrf.mxu0
    %v294 = vpop.f32.mrf.mxu0
    %295 = vdwg.mxu0
    %v296 = vmax.f32 %v249, 0.0
    %v297 = vmax.f32 %v251, 0.0
    %v298 = vmax.f32 %v290, 0.0
    %v299 = vmax.f32 %v292, 0.0
    %v300 = vpack.c.bf16 %v296, %v296
    %v301 = vpack.c.bf16 %v297, %v297
    %v302 = vpack.c.bf16 %v298, %v298
    %v303 = vpack.c.bf16 %v299, %v299
    %v304 = vld [vmem:[#allocation7] sm:$0xff]
    %v305 = vld [vmem:[#allocation7 + $0x8] sm:$0xff]
    %v306 = vld [vmem:[#allocation7 + $0x10] sm:$0xff]
    %v307 = vld [vmem:[#allocation7 + $0x18] sm:$0xff]
    %v308 = vld [vmem:[#allocation7 + $0x20] sm:$0xff]
    %v309 = vld [vmem:[#allocation7 + $0x28] sm:$0xff]
    %v310 = vld [vmem:[#allocation7 + $0x30] sm:$0xff]
    %v311 = vld [vmem:[#allocation7 + $0x38] sm:$0xff]
    %v312 = vld [vmem:[#allocation7 + $0x40] sm:$0xff]
    %v313 = vld [vmem:[#allocation7 + $0x48] sm:$0xff]
    %v314 = vld [vmem:[#allocation7 + $0x50] sm:$0xff]
    %v315 = vld [vmem:[#allocation7 + $0x58] sm:$0xff]
    %v316 = vld [vmem:[#allocation7 + $0x60] sm:$0xff]
    %v317 = vld [vmem:[#allocation7 + $0x68] sm:$0xff]
    %v318 = vld [vmem:[#allocation7 + $0x70] sm:$0xff]
    %v319 = vld [vmem:[#allocation7 + $0x78] sm:$0xff]
    %v320 = vld [vmem:[#allocation7 + $0x80] sm:$0xff]
    %v321 = vld [vmem:[#allocation7 + $0x88] sm:$0xff]
    %v322 = vld [vmem:[#allocation7 + $0x90] sm:$0xff]
    %v323 = vld [vmem:[#allocation7 + $0x98] sm:$0xff]
    %v324 = vld [vmem:[#allocation7 + $0xa0] sm:$0xff]
    %v325 = vld [vmem:[#allocation7 + $0xa8] sm:$0xff]
    %v326 = vld [vmem:[#allocation7 + $0xb0] sm:$0xff]
    %v327 = vld [vmem:[#allocation7 + $0xb8] sm:$0xff]
    %v328 = vld [vmem:[#allocation7 + $0xc0] sm:$0xff]
    %v329 = vld [vmem:[#allocation7 + $0xc8] sm:$0xff]
    %v330 = vld [vmem:[#allocation7 + $0xd0] sm:$0xff]
    %v331 = vld [vmem:[#allocation7 + $0xd8] sm:$0xff]
    %v332 = vld [vmem:[#allocation7 + $0xe0] sm:$0xff]
    %v333 = vld [vmem:[#allocation7 + $0xe8] sm:$0xff]
    %v334 = vld [vmem:[#allocation7 + $0xf0] sm:$0xff]
    %v335 = vld [vmem:[#allocation7 + $0xf8] sm:$0xff]
    %v336 = vld [vmem:[#allocation7 + $0x100] sm:$0xff]
    %v337 = vld [vmem:[#allocation7 + $0x108] sm:$0xff]
    %v338 = vld [vmem:[#allocation7 + $0x110] sm:$0xff]
    %v339 = vld [vmem:[#allocation7 + $0x118] sm:$0xff]
    %v340 = vld [vmem:[#allocation7 + $0x120] sm:$0xff]
    %v341 = vld [vmem:[#allocation7 + $0x128] sm:$0xff]
    %v342 = vld [vmem:[#allocation7 + $0x130] sm:$0xff]
    %v343 = vld [vmem:[#allocation7 + $0x138] sm:$0xff]
    %v344 = vld [vmem:[#allocation7 + $0x140] sm:$0xff]
    %v345 = vld [vmem:[#allocation7 + $0x148] sm:$0xff]
    %v346 = vld [vmem:[#allocation7 + $0x150] sm:$0xff]
    %v347 = vld [vmem:[#allocation7 + $0x158] sm:$0xff]
    %v348 = vld [vmem:[#allocation7 + $0x160] sm:$0xff]
    %v349 = vld [vmem:[#allocation7 + $0x168] sm:$0xff]
    %v350 = vld [vmem:[#allocation7 + $0x170] sm:$0xff]
    %v351 = vld [vmem:[#allocation7 + $0x178] sm:$0xff]
    %v352 = vld [vmem:[#allocation7 + $0x180] sm:$0xff]
    %v353 = vld [vmem:[#allocation7 + $0x188] sm:$0xff]
    %v354 = vld [vmem:[#allocation7 + $0x190] sm:$0xff]
    %v355 = vld [vmem:[#allocation7 + $0x198] sm:$0xff]
    %v356 = vld [vmem:[#allocation7 + $0x1a0] sm:$0xff]
    %v357 = vld [vmem:[#allocation7 + $0x1a8] sm:$0xff]
    %v358 = vld [vmem:[#allocation7 + $0x1b0] sm:$0xff]
    %v359 = vld [vmem:[#allocation7 + $0x1b8] sm:$0xff]
    %v360 = vld [vmem:[#allocation7 + $0x1c0] sm:$0xff]
    %v361 = vld [vmem:[#allocation7 + $0x1c8] sm:$0xff]
    %v362 = vld [vmem:[#allocation7 + $0x1d0] sm:$0xff]
    %v363 = vld [vmem:[#allocation7 + $0x1d8] sm:$0xff]
    %v364 = vld [vmem:[#allocation7 + $0x1e0] sm:$0xff]
    %v365 = vld [vmem:[#allocation7 + $0x1e8] sm:$0xff]
    %v366 = vld [vmem:[#allocation7 + $0x1f0] sm:$0xff]
    %v367 = vld [vmem:[#allocation7 + $0x1f8] sm:$0xff]
    %v368 = vld [vmem:[#allocation7 + $0x200] sm:$0xff]
    %v369 = vld [vmem:[#allocation7 + $0x208] sm:$0xff]
    %v370 = vld [vmem:[#allocation7 + $0x210] sm:$0xff]
    %v371 = vld [vmem:[#allocation7 + $0x218] sm:$0xff]
    %v372 = vld [vmem:[#allocation7 + $0x220] sm:$0xff]
    %v373 = vld [vmem:[#allocation7 + $0x228] sm:$0xff]
    %v374 = vld [vmem:[#allocation7 + $0x230] sm:$0xff]
    %v375 = vld [vmem:[#allocation7 + $0x238] sm:$0xff]
    %v376 = vld [vmem:[#allocation7 + $0x240] sm:$0xff]
    %v377 = vld [vmem:[#allocation7 + $0x248] sm:$0xff]
    %v378 = vld [vmem:[#allocation7 + $0x250] sm:$0xff]
    %v379 = vld [vmem:[#allocation7 + $0x258] sm:$0xff]
    %v380 = vld [vmem:[#allocation7 + $0x260] sm:$0xff]
    %v381 = vld [vmem:[#allocation7 + $0x268] sm:$0xff]
    %v382 = vld [vmem:[#allocation7 + $0x270] sm:$0xff]
    %v383 = vld [vmem:[#allocation7 + $0x278] sm:$0xff]
    %v384 = vld [vmem:[#allocation7 + $0x280] sm:$0xff]
    %v385 = vld [vmem:[#allocation7 + $0x288] sm:$0xff]
    %v386 = vld [vmem:[#allocation7 + $0x290] sm:$0xff]
    %v387 = vld [vmem:[#allocation7 + $0x298] sm:$0xff]
    %v388 = vld [vmem:[#allocation7 + $0x2a0] sm:$0xff]
    %v389 = vld [vmem:[#allocation7 + $0x2a8] sm:$0xff]
    %v390 = vld [vmem:[#allocation7 + $0x2b0] sm:$0xff]
    %v391 = vld [vmem:[#allocation7 + $0x2b8] sm:$0xff]
    %v392 = vld [vmem:[#allocation7 + $0x2c0] sm:$0xff]
    %v393 = vld [vmem:[#allocation7 + $0x2c8] sm:$0xff]
    %v394 = vld [vmem:[#allocation7 + $0x2d0] sm:$0xff]
    %v395 = vld [vmem:[#allocation7 + $0x2d8] sm:$0xff]
    %v396 = vld [vmem:[#allocation7 + $0x2e0] sm:$0xff]
    %v397 = vld [vmem:[#allocation7 + $0x2e8] sm:$0xff]
    %v398 = vld [vmem:[#allocation7 + $0x2f0] sm:$0xff]
    %v399 = vld [vmem:[#allocation7 + $0x2f8] sm:$0xff]
    %v400 = vld [vmem:[#allocation7 + $0x300] sm:$0xff]
    %v401 = vld [vmem:[#allocation7 + $0x308] sm:$0xff]
    %v402 = vld [vmem:[#allocation7 + $0x310] sm:$0xff]
    %v403 = vld [vmem:[#allocation7 + $0x318] sm:$0xff]
    %v404 = vld [vmem:[#allocation7 + $0x320] sm:$0xff]
    %v405 = vld [vmem:[#allocation7 + $0x328] sm:$0xff]
    %v406 = vld [vmem:[#allocation7 + $0x330] sm:$0xff]
    %v407 = vld [vmem:[#allocation7 + $0x338] sm:$0xff]
    %v408 = vld [vmem:[#allocation7 + $0x340] sm:$0xff]
    %v409 = vld [vmem:[#allocation7 + $0x348] sm:$0xff]
    %v410 = vld [vmem:[#allocation7 + $0x350] sm:$0xff]
    %v411 = vld [vmem:[#allocation7 + $0x358] sm:$0xff]
    %v412 = vld [vmem:[#allocation7 + $0x360] sm:$0xff]
    %v413 = vld [vmem:[#allocation7 + $0x368] sm:$0xff]
    %v414 = vld [vmem:[#allocation7 + $0x370] sm:$0xff]
    %v415 = vld [vmem:[#allocation7 + $0x378] sm:$0xff]
    %v416 = vld [vmem:[#allocation7 + $0x380] sm:$0xff]
    %v417 = vld [vmem:[#allocation7 + $0x388] sm:$0xff]
    %v418 = vld [vmem:[#allocation7 + $0x390] sm:$0xff]
    %v419 = vld [vmem:[#allocation7 + $0x398] sm:$0xff]
    %v420 = vld [vmem:[#allocation7 + $0x3a0] sm:$0xff]
    %v421 = vld [vmem:[#allocation7 + $0x3a8] sm:$0xff]
    %v422 = vld [vmem:[#allocation7 + $0x3b0] sm:$0xff]
    %v423 = vld [vmem:[#allocation7 + $0x3b8] sm:$0xff]
    %v424 = vld [vmem:[#allocation7 + $0x3c0] sm:$0xff]
    %v425 = vld [vmem:[#allocation7 + $0x3c8] sm:$0xff]
    %v426 = vld [vmem:[#allocation7 + $0x3d0] sm:$0xff]
    %v427 = vld [vmem:[#allocation7 + $0x3d8] sm:$0xff]
    %v428 = vld [vmem:[#allocation7 + $0x3e0] sm:$0xff]
    %v429 = vld [vmem:[#allocation7 + $0x3e8] sm:$0xff]
    %v430 = vld [vmem:[#allocation7 + $0x3f0] sm:$0xff]
    %v431 = vld [vmem:[#allocation7 + $0x3f8] sm:$0xff]
    %s432 = scalar_lea.vmem [#allocation14], 1
    %v433 = vld [vmem:[%s432] ss:$8 sm:$0xf]
    %v435 = vlaneseq
    %v436 = vshrl.u32 %v435, 7
    %v437 = vsub.s32 0, %v436
    %v438 = vrot.slane %v433, %v437
    %v439 = vlaneseq
    %v440 = vshrl.u32 %v439, 7
    %v441 = vsub.s32 1, %v440
    %v442 = vrot.slane %v433, %v441
    %v443 = vlaneseq
    %v444 = vshrl.u32 %v443, 7
    %v445 = vsub.s32 2, %v444
    %v446 = vrot.slane %v433, %v445
    %v447 = vlaneseq
    %v448 = vshrl.u32 %v447, 7
    %v449 = vsub.s32 3, %v448
    %v450 = vrot.slane %v433, %v449
    %v583 = vunpack.c.l.b16 %v304
    %v584 = vunpack.c.h.b16 %v304
    %v585 = vunpack.c.l.b16 %v305
    %v586 = vunpack.c.h.b16 %v305
    %v587 = vunpack.c.l.b16 %v306
    %v588 = vunpack.c.h.b16 %v306
    %v589 = vunpack.c.l.b16 %v307
    %v590 = vunpack.c.h.b16 %v307
    %v591 = vunpack.c.l.b16 %v308
    %v592 = vunpack.c.h.b16 %v308
    %v593 = vunpack.c.l.b16 %v309
    %v594 = vunpack.c.h.b16 %v309
    %v595 = vunpack.c.l.b16 %v310
    %v596 = vunpack.c.h.b16 %v310
    %v597 = vunpack.c.l.b16 %v311
    %v598 = vunpack.c.h.b16 %v311
    %v599 = vunpack.c.l.b16 %v312
    %v600 = vunpack.c.h.b16 %v312
    %v601 = vunpack.c.l.b16 %v313
    %v602 = vunpack.c.h.b16 %v313
    %v603 = vunpack.c.l.b16 %v314
    %v604 = vunpack.c.h.b16 %v314
    %v605 = vunpack.c.l.b16 %v315
    %v606 = vunpack.c.h.b16 %v315
    %v607 = vunpack.c.l.b16 %v316
    %v608 = vunpack.c.h.b16 %v316
    %v609 = vunpack.c.l.b16 %v317
    %v610 = vunpack.c.h.b16 %v317
    %v611 = vunpack.c.l.b16 %v318
    %v612 = vunpack.c.h.b16 %v318
    %v613 = vunpack.c.l.b16 %v319
    %v614 = vunpack.c.h.b16 %v319
    %v615 = vunpack.c.l.b16 %v320
    %v616 = vunpack.c.h.b16 %v320
    %v617 = vunpack.c.l.b16 %v321
    %v618 = vunpack.c.h.b16 %v321
    %v619 = vunpack.c.l.b16 %v322
    %v620 = vunpack.c.h.b16 %v322
    %v621 = vunpack.c.l.b16 %v323
    %v622 = vunpack.c.h.b16 %v323
    %v623 = vunpack.c.l.b16 %v324
    %v624 = vunpack.c.h.b16 %v324
    %v625 = vunpack.c.l.b16 %v325
    %v626 = vunpack.c.h.b16 %v325
    %v627 = vunpack.c.l.b16 %v326
    %v628 = vunpack.c.h.b16 %v326
    %v629 = vunpack.c.l.b16 %v327
    %v630 = vunpack.c.h.b16 %v327
    %v631 = vunpack.c.l.b16 %v328
    %v632 = vunpack.c.h.b16 %v328
    %v633 = vunpack.c.l.b16 %v329
    %v634 = vunpack.c.h.b16 %v329
    %v635 = vunpack.c.l.b16 %v330
    %v636 = vunpack.c.h.b16 %v330
    %v637 = vunpack.c.l.b16 %v331
    %v638 = vunpack.c.h.b16 %v331
    %v639 = vunpack.c.l.b16 %v332
    %v640 = vunpack.c.h.b16 %v332
    %v641 = vunpack.c.l.b16 %v333
    %v642 = vunpack.c.h.b16 %v333
    %v643 = vunpack.c.l.b16 %v334
    %v644 = vunpack.c.h.b16 %v334
    %v645 = vunpack.c.l.b16 %v335
    %v646 = vunpack.c.h.b16 %v335
    %v647 = vunpack.c.l.b16 %v336
    %v648 = vunpack.c.h.b16 %v336
    %v649 = vunpack.c.l.b16 %v337
    %v650 = vunpack.c.h.b16 %v337
    %v651 = vunpack.c.l.b16 %v338
    %v652 = vunpack.c.h.b16 %v338
    %v653 = vunpack.c.l.b16 %v339
    %v654 = vunpack.c.h.b16 %v339
    %v655 = vunpack.c.l.b16 %v340
    %v656 = vunpack.c.h.b16 %v340
    %v657 = vunpack.c.l.b16 %v341
    %v658 = vunpack.c.h.b16 %v341
    %v659 = vunpack.c.l.b16 %v342
    %v660 = vunpack.c.h.b16 %v342
    %v661 = vunpack.c.l.b16 %v343
    %v662 = vunpack.c.h.b16 %v343
    %v663 = vunpack.c.l.b16 %v344
    %v664 = vunpack.c.h.b16 %v344
    %v665 = vunpack.c.l.b16 %v345
    %v666 = vunpack.c.h.b16 %v345
    %v667 = vunpack.c.l.b16 %v346
    %v668 = vunpack.c.h.b16 %v346
    %v669 = vunpack.c.l.b16 %v347
    %v670 = vunpack.c.h.b16 %v347
    %v671 = vunpack.c.l.b16 %v348
    %v672 = vunpack.c.h.b16 %v348
    %v673 = vunpack.c.l.b16 %v349
    %v674 = vunpack.c.h.b16 %v349
    %v675 = vunpack.c.l.b16 %v350
    %v676 = vunpack.c.h.b16 %v350
    %v677 = vunpack.c.l.b16 %v351
    %v678 = vunpack.c.h.b16 %v351
    %v679 = vunpack.c.l.b16 %v352
    %v680 = vunpack.c.h.b16 %v352
    %v681 = vunpack.c.l.b16 %v353
    %v682 = vunpack.c.h.b16 %v353
    %v683 = vunpack.c.l.b16 %v354
    %v684 = vunpack.c.h.b16 %v354
    %v685 = vunpack.c.l.b16 %v355
    %v686 = vunpack.c.h.b16 %v355
    %v687 = vunpack.c.l.b16 %v356
    %v688 = vunpack.c.h.b16 %v356
    %v689 = vunpack.c.l.b16 %v357
    %v690 = vunpack.c.h.b16 %v357
    %v691 = vunpack.c.l.b16 %v358
    %v692 = vunpack.c.h.b16 %v358
    %v693 = vunpack.c.l.b16 %v359
    %v694 = vunpack.c.h.b16 %v359
    %v695 = vunpack.c.l.b16 %v360
    %v696 = vunpack.c.h.b16 %v360
    %v697 = vunpack.c.l.b16 %v361
    %v698 = vunpack.c.h.b16 %v361
    %v699 = vunpack.c.l.b16 %v362
    %v700 = vunpack.c.h.b16 %v362
    %v701 = vunpack.c.l.b16 %v363
    %v702 = vunpack.c.h.b16 %v363
    %v703 = vunpack.c.l.b16 %v364
    %v704 = vunpack.c.h.b16 %v364
    %v705 = vunpack.c.l.b16 %v365
    %v706 = vunpack.c.h.b16 %v365
    %v707 = vunpack.c.l.b16 %v366
    %v708 = vunpack.c.h.b16 %v366
    %v709 = vunpack.c.l.b16 %v367
    %v710 = vunpack.c.h.b16 %v367
    %v711 = vunpack.c.l.b16 %v368
    %v712 = vunpack.c.h.b16 %v368
    %v713 = vunpack.c.l.b16 %v369
    %v714 = vunpack.c.h.b16 %v369
    %v715 = vunpack.c.l.b16 %v370
    %v716 = vunpack.c.h.b16 %v370
    %v717 = vunpack.c.l.b16 %v371
    %v718 = vunpack.c.h.b16 %v371
    %v719 = vunpack.c.l.b16 %v372
    %v720 = vunpack.c.h.b16 %v372
    %v721 = vunpack.c.l.b16 %v373
    %v722 = vunpack.c.h.b16 %v373
    %v723 = vunpack.c.l.b16 %v374
    %v724 = vunpack.c.h.b16 %v374
    %v725 = vunpack.c.l.b16 %v375
    %v726 = vunpack.c.h.b16 %v375
    %v727 = vunpack.c.l.b16 %v376
    %v728 = vunpack.c.h.b16 %v376
    %v729 = vunpack.c.l.b16 %v377
    %v730 = vunpack.c.h.b16 %v377
    %v731 = vunpack.c.l.b16 %v378
    %v732 = vunpack.c.h.b16 %v378
    %v733 = vunpack.c.l.b16 %v379
    %v734 = vunpack.c.h.b16 %v379
    %v735 = vunpack.c.l.b16 %v380
    %v736 = vunpack.c.h.b16 %v380
    %v737 = vunpack.c.l.b16 %v381
    %v738 = vunpack.c.h.b16 %v381
    %v739 = vunpack.c.l.b16 %v382
    %v740 = vunpack.c.h.b16 %v382
    %v741 = vunpack.c.l.b16 %v383
    %v742 = vunpack.c.h.b16 %v383
    %v743 = vunpack.c.l.b16 %v384
    %v744 = vunpack.c.h.b16 %v384
    %v745 = vunpack.c.l.b16 %v385
    %v746 = vunpack.c.h.b16 %v385
    %v747 = vunpack.c.l.b16 %v386
    %v748 = vunpack.c.h.b16 %v386
    %v749 = vunpack.c.l.b16 %v387
    %v750 = vunpack.c.h.b16 %v387
    %v751 = vunpack.c.l.b16 %v388
    %v752 = vunpack.c.h.b16 %v388
    %v753 = vunpack.c.l.b16 %v389
    %v754 = vunpack.c.h.b16 %v389
    %v755 = vunpack.c.l.b16 %v390
    %v756 = vunpack.c.h.b16 %v390
    %v757 = vunpack.c.l.b16 %v391
    %v758 = vunpack.c.h.b16 %v391
    %v759 = vunpack.c.l.b16 %v392
    %v760 = vunpack.c.h.b16 %v392
    %v761 = vunpack.c.l.b16 %v393
    %v762 = vunpack.c.h.b16 %v393
    %v763 = vunpack.c.l.b16 %v394
    %v764 = vunpack.c.h.b16 %v394
    %v765 = vunpack.c.l.b16 %v395
    %v766 = vunpack.c.h.b16 %v395
    %v767 = vunpack.c.l.b16 %v396
    %v768 = vunpack.c.h.b16 %v396
    %v769 = vunpack.c.l.b16 %v397
    %v770 = vunpack.c.h.b16 %v397
    %v771 = vunpack.c.l.b16 %v398
    %v772 = vunpack.c.h.b16 %v398
    %v773 = vunpack.c.l.b16 %v399
    %v774 = vunpack.c.h.b16 %v399
    %v775 = vunpack.c.l.b16 %v400
    %v776 = vunpack.c.h.b16 %v400
    %v777 = vunpack.c.l.b16 %v401
    %v778 = vunpack.c.h.b16 %v401
    %v779 = vunpack.c.l.b16 %v402
    %v780 = vunpack.c.h.b16 %v402
    %v781 = vunpack.c.l.b16 %v403
    %v782 = vunpack.c.h.b16 %v403
    %v783 = vunpack.c.l.b16 %v404
    %v784 = vunpack.c.h.b16 %v404
    %v785 = vunpack.c.l.b16 %v405
    %v786 = vunpack.c.h.b16 %v405
    %v787 = vunpack.c.l.b16 %v406
    %v788 = vunpack.c.h.b16 %v406
    %v789 = vunpack.c.l.b16 %v407
    %v790 = vunpack.c.h.b16 %v407
    %v791 = vunpack.c.l.b16 %v408
    %v792 = vunpack.c.h.b16 %v408
    %v793 = vunpack.c.l.b16 %v409
    %v794 = vunpack.c.h.b16 %v409
    %v795 = vunpack.c.l.b16 %v410
    %v796 = vunpack.c.h.b16 %v410
    %v797 = vunpack.c.l.b16 %v411
    %v798 = vunpack.c.h.b16 %v411
    %v799 = vunpack.c.l.b16 %v412
    %v800 = vunpack.c.h.b16 %v412
    %v801 = vunpack.c.l.b16 %v413
    %v802 = vunpack.c.h.b16 %v413
    %v803 = vunpack.c.l.b16 %v414
    %v804 = vunpack.c.h.b16 %v414
    %v805 = vunpack.c.l.b16 %v415
    %v806 = vunpack.c.h.b16 %v415
    %v807 = vunpack.c.l.b16 %v416
    %v808 = vunpack.c.h.b16 %v416
    %v809 = vunpack.c.l.b16 %v417
    %v810 = vunpack.c.h.b16 %v417
    %v811 = vunpack.c.l.b16 %v418
    %v812 = vunpack.c.h.b16 %v418
    %v813 = vunpack.c.l.b16 %v419
    %v814 = vunpack.c.h.b16 %v419
    %v815 = vunpack.c.l.b16 %v420
    %v816 = vunpack.c.h.b16 %v420
    %v817 = vunpack.c.l.b16 %v421
    %v818 = vunpack.c.h.b16 %v421
    %v819 = vunpack.c.l.b16 %v422
    %v820 = vunpack.c.h.b16 %v422
    %v821 = vunpack.c.l.b16 %v423
    %v822 = vunpack.c.h.b16 %v423
    %v823 = vunpack.c.l.b16 %v424
    %v824 = vunpack.c.h.b16 %v424
    %v825 = vunpack.c.l.b16 %v425
    %v826 = vunpack.c.h.b16 %v425
    %v827 = vunpack.c.l.b16 %v426
    %v828 = vunpack.c.h.b16 %v426
    %v829 = vunpack.c.l.b16 %v427
    %v830 = vunpack.c.h.b16 %v427
    %v831 = vunpack.c.l.b16 %v428
    %v832 = vunpack.c.h.b16 %v428
    %v833 = vunpack.c.l.b16 %v429
    %v834 = vunpack.c.h.b16 %v429
    %v835 = vunpack.c.l.b16 %v430
    %v836 = vunpack.c.h.b16 %v430
    %v837 = vunpack.c.l.b16 %v431
    %v838 = vunpack.c.h.b16 %v431
    %v839 = vpack.c.b16 %v587, %v583
    %v840 = vpack.c.b16 %v588, %v584
    %v841 = vpack.c.b16 %v589, %v585
    %v842 = vpack.c.b16 %v590, %v586
    %v843 = vpack.c.b16 %v595, %v591
    %v844 = vpack.c.b16 %v596, %v592
    %v845 = vpack.c.b16 %v597, %v593
    %v846 = vpack.c.b16 %v598, %v594
    %v847 = vpack.c.b16 %v603, %v599
    %v848 = vpack.c.b16 %v604, %v600
    %v849 = vpack.c.b16 %v605, %v601
    %v850 = vpack.c.b16 %v606, %v602
    %v851 = vpack.c.b16 %v611, %v607
    %v852 = vpack.c.b16 %v612, %v608
    %v853 = vpack.c.b16 %v613, %v609
    %v854 = vpack.c.b16 %v614, %v610
    %v855 = vpack.c.b16 %v619, %v615
    %v856 = vpack.c.b16 %v620, %v616
    %v857 = vpack.c.b16 %v621, %v617
    %v858 = vpack.c.b16 %v622, %v618
    %v859 = vpack.c.b16 %v627, %v623
    %v860 = vpack.c.b16 %v628, %v624
    %v861 = vpack.c.b16 %v629, %v625
    %v862 = vpack.c.b16 %v630, %v626
    %v863 = vpack.c.b16 %v635, %v631
    %v864 = vpack.c.b16 %v636, %v632
    %v865 = vpack.c.b16 %v637, %v633
    %v866 = vpack.c.b16 %v638, %v634
    %v867 = vpack.c.b16 %v643, %v639
    %v868 = vpack.c.b16 %v644, %v640
    %v869 = vpack.c.b16 %v645, %v641
    %v870 = vpack.c.b16 %v646, %v642
    %v871 = vpack.c.b16 %v651, %v647
    %v872 = vpack.c.b16 %v652, %v648
    %v873 = vpack.c.b16 %v653, %v649
    %v874 = vpack.c.b16 %v654, %v650
    %v875 = vpack.c.b16 %v659, %v655
    %v876 = vpack.c.b16 %v660, %v656
    %v877 = vpack.c.b16 %v661, %v657
    %v878 = vpack.c.b16 %v662, %v658
    %v879 = vpack.c.b16 %v667, %v663
    %v880 = vpack.c.b16 %v668, %v664
    %v881 = vpack.c.b16 %v669, %v665
    %v882 = vpack.c.b16 %v670, %v666
    %v883 = vpack.c.b16 %v675, %v671
    %v884 = vpack.c.b16 %v676, %v672
    %v885 = vpack.c.b16 %v677, %v673
    %v886 = vpack.c.b16 %v678, %v674
    %v887 = vpack.c.b16 %v683, %v679
    %v888 = vpack.c.b16 %v684, %v680
    %v889 = vpack.c.b16 %v685, %v681
    %v890 = vpack.c.b16 %v686, %v682
    %v891 = vpack.c.b16 %v691, %v687
    %v892 = vpack.c.b16 %v692, %v688
    %v893 = vpack.c.b16 %v693, %v689
    %v894 = vpack.c.b16 %v694, %v690
    %v895 = vpack.c.b16 %v699, %v695
    %v896 = vpack.c.b16 %v700, %v696
    %v897 = vpack.c.b16 %v701, %v697
    %v898 = vpack.c.b16 %v702, %v698
    %v899 = vpack.c.b16 %v707, %v703
    %v900 = vpack.c.b16 %v708, %v704
    %v901 = vpack.c.b16 %v709, %v705
    %v902 = vpack.c.b16 %v710, %v706
    %v903 = vpack.c.b16 %v715, %v711
    %v904 = vpack.c.b16 %v716, %v712
    %v905 = vpack.c.b16 %v717, %v713
    %v906 = vpack.c.b16 %v718, %v714
    %v907 = vpack.c.b16 %v723, %v719
    %v908 = vpack.c.b16 %v724, %v720
    %v909 = vpack.c.b16 %v725, %v721
    %v910 = vpack.c.b16 %v726, %v722
    %v911 = vpack.c.b16 %v731, %v727
    %v912 = vpack.c.b16 %v732, %v728
    %v913 = vpack.c.b16 %v733, %v729
    %v914 = vpack.c.b16 %v734, %v730
    %v915 = vpack.c.b16 %v739, %v735
    %v916 = vpack.c.b16 %v740, %v736
    %v917 = vpack.c.b16 %v741, %v737
    %v918 = vpack.c.b16 %v742, %v738
    %v919 = vpack.c.b16 %v747, %v743
    %v920 = vpack.c.b16 %v748, %v744
    %v921 = vpack.c.b16 %v749, %v745
    %v922 = vpack.c.b16 %v750, %v746
    %v923 = vpack.c.b16 %v755, %v751
    %v924 = vpack.c.b16 %v756, %v752
    %v925 = vpack.c.b16 %v757, %v753
    %v926 = vpack.c.b16 %v758, %v754
    %v927 = vpack.c.b16 %v763, %v759
    %v928 = vpack.c.b16 %v764, %v760
    %v929 = vpack.c.b16 %v765, %v761
    %v930 = vpack.c.b16 %v766, %v762
    %v931 = vpack.c.b16 %v771, %v767
    %v932 = vpack.c.b16 %v772, %v768
    %v933 = vpack.c.b16 %v773, %v769
    %v934 = vpack.c.b16 %v774, %v770
    %v935 = vpack.c.b16 %v779, %v775
    %v936 = vpack.c.b16 %v780, %v776
    %v937 = vpack.c.b16 %v781, %v777
    %v938 = vpack.c.b16 %v782, %v778
    %v939 = vpack.c.b16 %v787, %v783
    %v940 = vpack.c.b16 %v788, %v784
    %v941 = vpack.c.b16 %v789, %v785
    %v942 = vpack.c.b16 %v790, %v786
    %v943 = vpack.c.b16 %v795, %v791
    %v944 = vpack.c.b16 %v796, %v792
    %v945 = vpack.c.b16 %v797, %v793
    %v946 = vpack.c.b16 %v798, %v794
    %v947 = vpack.c.b16 %v803, %v799
    %v948 = vpack.c.b16 %v804, %v800
    %v949 = vpack.c.b16 %v805, %v801
    %v950 = vpack.c.b16 %v806, %v802
    %v951 = vpack.c.b16 %v811, %v807
    %v952 = vpack.c.b16 %v812, %v808
    %v953 = vpack.c.b16 %v813, %v809
    %v954 = vpack.c.b16 %v814, %v810
    %v955 = vpack.c.b16 %v819, %v815
    %v956 = vpack.c.b16 %v820, %v816
    %v957 = vpack.c.b16 %v821, %v817
    %v958 = vpack.c.b16 %v822, %v818
    %v959 = vpack.c.b16 %v827, %v823
    %v960 = vpack.c.b16 %v828, %v824
    %v961 = vpack.c.b16 %v829, %v825
    %v962 = vpack.c.b16 %v830, %v826
    %v963 = vpack.c.b16 %v835, %v831
    %v964 = vpack.c.b16 %v836, %v832
    %v965 = vpack.c.b16 %v837, %v833
    %v966 = vpack.c.b16 %v838, %v834
    %1095 = vmatprep.subr.bf16.mxu0 %v868
    %1096 = vmatpush1.bf16.msra.mxu0 %v867
    %1097 = vmatprep.subr.bf16.mxu0 %v864
    %1098 = vmatpush1.bf16.msra.mxu0 %v863
    %1099 = vmatprep.subr.bf16.mxu0 %v860
    %1100 = vmatpush1.bf16.msra.mxu0 %v859
    %1101 = vmatprep.subr.bf16.mxu0 %v856
    %1102 = vmatpush1.bf16.msra.mxu0 %v855
    %1103 = vmatprep.subr.bf16.mxu0 %v852
    %1104 = vmatpush1.bf16.msra.mxu0 %v851
    %1105 = vmatprep.subr.bf16.mxu0 %v848
    %1106 = vmatpush1.bf16.msra.mxu0 %v847
    %1107 = vmatprep.subr.bf16.mxu0 %v844
    %1108 = vmatpush1.bf16.msra.mxu0 %v843
    %1109 = vmatprep.subr.bf16.mxu0 %v840
    %1110 = vmatpush1.bf16.msra.mxu0 %v839
    %1111 = vmatprep.subr.bf16.mxu0 %v900
    %1112 = vmatpush2.bf16.msra.mxu0 %v899
    %1113 = vmatprep.subr.bf16.mxu0 %v896
    %1114 = vmatpush2.bf16.msra.mxu0 %v895
    %1115 = vmatprep.subr.bf16.mxu0 %v892
    %1116 = vmatpush2.bf16.msra.mxu0 %v891
    %1117 = vmatprep.subr.bf16.mxu0 %v888
    %1118 = vmatpush2.bf16.msra.mxu0 %v887
    %1119 = vmatprep.subr.bf16.mxu0 %v884
    %1120 = vmatpush2.bf16.msra.mxu0 %v883
    %1121 = vmatprep.subr.bf16.mxu0 %v880
    %1122 = vmatpush2.bf16.msra.mxu0 %v879
    %1123 = vmatprep.subr.bf16.mxu0 %v876
    %1124 = vmatpush2.bf16.msra.mxu0 %v875
    %1125 = vmatprep.subr.bf16.mxu0 %v872
    %1126 = vmatpush2.bf16.msra.mxu0 %v871
    %1127 = vmatprep.mubr.bf16.mxu0 %v301
    %1128 = vmatmul.mubr.bf16.gmra.mxu0 %v300
    %v1129 = vpop.f32.mrf.mxu0
    %v1130 = vadd.f32 %v438, %v1129
    %v1131 = vpop.f32.mrf.mxu0
    %v1132 = vadd.f32 %v442, %v1131
    %v1133 = vpop.f32.mrf.mxu0
    %v1134 = vpop.f32.mrf.mxu0
    %1135 = vdwg.mxu0
    %1136 = vmatprep.subr.bf16.mxu0 %v932
    %1137 = vmatpush1.bf16.msra.mxu0 %v931
    %1138 = vmatprep.subr.bf16.mxu0 %v928
    %1139 = vmatpush1.bf16.msra.mxu0 %v927
    %1140 = vmatprep.subr.bf16.mxu0 %v924
    %1141 = vmatpush1.bf16.msra.mxu0 %v923
    %1142 = vmatprep.subr.bf16.mxu0 %v920
    %1143 = vmatpush1.bf16.msra.mxu0 %v919
    %1144 = vmatprep.subr.bf16.mxu0 %v916
    %1145 = vmatpush1.bf16.msra.mxu0 %v915
    %1146 = vmatprep.subr.bf16.mxu0 %v912
    %1147 = vmatpush1.bf16.msra.mxu0 %v911
    %1148 = vmatprep.subr.bf16.mxu0 %v908
    %1149 = vmatpush1.bf16.msra.mxu0 %v907
    %1150 = vmatprep.subr.bf16.mxu0 %v904
    %1151 = vmatpush1.bf16.msra.mxu0 %v903
    %1152 = vmatprep.subr.bf16.mxu0 %v964
    %1153 = vmatpush2.bf16.msra.mxu0 %v963
    %1154 = vmatprep.subr.bf16.mxu0 %v960
    %1155 = vmatpush2.bf16.msra.mxu0 %v959
    %1156 = vmatprep.subr.bf16.mxu0 %v956
    %1157 = vmatpush2.bf16.msra.mxu0 %v955
    %1158 = vmatprep.subr.bf16.mxu0 %v952
    %1159 = vmatpush2.bf16.msra.mxu0 %v951
    %1160 = vmatprep.subr.bf16.mxu0 %v948
    %1161 = vmatpush2.bf16.msra.mxu0 %v947
    %1162 = vmatprep.subr.bf16.mxu0 %v944
    %1163 = vmatpush2.bf16.msra.mxu0 %v943
    %1164 = vmatprep.subr.bf16.mxu0 %v940
    %1165 = vmatpush2.bf16.msra.mxu0 %v939
    %1166 = vmatprep.subr.bf16.mxu0 %v936
    %1167 = vmatpush2.bf16.msra.mxu0 %v935
    %1168 = vmatprep.mubr.bf16.mxu0 %v303
    %1169 = vmatmul.mubr.bf16.gmra.mxu0 %v302
    %v1170 = vpop.f32.mrf.mxu0
    %v1171 = vadd.f32 %v1130, %v1170
    %v1172 = vpop.f32.mrf.mxu0
    %v1173 = vadd.f32 %v1132, %v1172
    %v1174 = vpop.f32.mrf.mxu0
    %v1175 = vpop.f32.mrf.mxu0
    %1176 = vdwg.mxu0
    %1177 = vmatprep.subr.bf16.mxu0 %v870
    %1178 = vmatpush1.bf16.msra.mxu0 %v869
    %1179 = vmatprep.subr.bf16.mxu0 %v866
    %1180 = vmatpush1.bf16.msra.mxu0 %v865
    %1181 = vmatprep.subr.bf16.mxu0 %v862
    %1182 = vmatpush1.bf16.msra.mxu0 %v861
    %1183 = vmatprep.subr.bf16.mxu0 %v858
    %1184 = vmatpush1.bf16.msra.mxu0 %v857
    %1185 = vmatprep.subr.bf16.mxu0 %v854
    %1186 = vmatpush1.bf16.msra.mxu0 %v853
    %1187 = vmatprep.subr.bf16.mxu0 %v850
    %1188 = vmatpush1.bf16.msra.mxu0 %v849
    %1189 = vmatprep.subr.bf16.mxu0 %v846
    %1190 = vmatpush1.bf16.msra.mxu0 %v845
    %1191 = vmatprep.subr.bf16.mxu0 %v842
    %1192 = vmatpush1.bf16.msra.mxu0 %v841
    %1193 = vmatprep.subr.bf16.mxu0 %v902
    %1194 = vmatpush2.bf16.msra.mxu0 %v901
    %1195 = vmatprep.subr.bf16.mxu0 %v898
    %1196 = vmatpush2.bf16.msra.mxu0 %v897
    %1197 = vmatprep.subr.bf16.mxu0 %v894
    %1198 = vmatpush2.bf16.msra.mxu0 %v893
    %1199 = vmatprep.subr.bf16.mxu0 %v890
    %1200 = vmatpush2.bf16.msra.mxu0 %v889
    %1201 = vmatprep.subr.bf16.mxu0 %v886
    %1202 = vmatpush2.bf16.msra.mxu0 %v885
    %1203 = vmatprep.subr.bf16.mxu0 %v882
    %1204 = vmatpush2.bf16.msra.mxu0 %v881
    %1205 = vmatprep.subr.bf16.mxu0 %v878
    %1206 = vmatpush2.bf16.msra.mxu0 %v877
    %1207 = vmatprep.subr.bf16.mxu0 %v874
    %1208 = vmatpush2.bf16.msra.mxu0 %v873
    %1209 = vmatprep.mubr.bf16.mxu0 %v301
    %1210 = vmatmul.mubr.bf16.gmra.mxu0 %v300
    %v1211 = vpop.f32.mrf.mxu0
    %v1212 = vadd.f32 %v446, %v1211
    %v1213 = vpop.f32.mrf.mxu0
    %v1214 = vadd.f32 %v450, %v1213
    %v1215 = vpop.f32.mrf.mxu0
    %v1216 = vpop.f32.mrf.mxu0
    %1217 = vdwg.mxu0
    %1218 = vmatprep.subr.bf16.mxu0 %v934
    %1219 = vmatpush1.bf16.msra.mxu0 %v933
    %1220 = vmatprep.subr.bf16.mxu0 %v930
    %1221 = vmatpush1.bf16.msra.mxu0 %v929
    %1222 = vmatprep.subr.bf16.mxu0 %v926
    %1223 = vmatpush1.bf16.msra.mxu0 %v925
    %1224 = vmatprep.subr.bf16.mxu0 %v922
    %1225 = vmatpush1.bf16.msra.mxu0 %v921
    %1226 = vmatprep.subr.bf16.mxu0 %v918
    %1227 = vmatpush1.bf16.msra.mxu0 %v917
    %1228 = vmatprep.subr.bf16.mxu0 %v914
    %1229 = vmatpush1.bf16.msra.mxu0 %v913
    %1230 = vmatprep.subr.bf16.mxu0 %v910
    %1231 = vmatpush1.bf16.msra.mxu0 %v909
    %1232 = vmatprep.subr.bf16.mxu0 %v906
    %1233 = vmatpush1.bf16.msra.mxu0 %v905
    %1234 = vmatprep.subr.bf16.mxu0 %v966
    %1235 = vmatpush2.bf16.msra.mxu0 %v965
    %1236 = vmatprep.subr.bf16.mxu0 %v962
    %1237 = vmatpush2.bf16.msra.mxu0 %v961
    %1238 = vmatprep.subr.bf16.mxu0 %v958
    %1239 = vmatpush2.bf16.msra.mxu0 %v957
    %1240 = vmatprep.subr.bf16.mxu0 %v954
    %1241 = vmatpush2.bf16.msra.mxu0 %v953
    %1242 = vmatprep.subr.bf16.mxu0 %v950
    %1243 = vmatpush2.bf16.msra.mxu0 %v949
    %1244 = vmatprep.subr.bf16.mxu0 %v946
    %1245 = vmatpush2.bf16.msra.mxu0 %v945
    %1246 = vmatprep.subr.bf16.mxu0 %v942
    %1247 = vmatpush2.bf16.msra.mxu0 %v941
    %1248 = vmatprep.subr.bf16.mxu0 %v938
    %1249 = vmatpush2.bf16.msra.mxu0 %v937
    %1250 = vmatprep.mubr.bf16.mxu0 %v303
    %1251 = vmatmul.mubr.bf16.gmra.mxu0 %v302
    %v1252 = vpop.f32.mrf.mxu0
    %v1253 = vadd.f32 %v1212, %v1252
    %v1254 = vpop.f32.mrf.mxu0
    %v1255 = vadd.f32 %v1214, %v1254
    %v1256 = vpop.f32.mrf.mxu0
    %v1257 = vpop.f32.mrf.mxu0
    %1258 = vdwg.mxu0
    %v1259 = vmax.f32 %v1171, 0.0
    %v1260 = vmax.f32 %v1173, 0.0
    %v1261 = vmax.f32 %v1253, 0.0
    %v1262 = vmax.f32 %v1255, 0.0
    %v1263 = vpack.c.bf16 %v1259, %v1259
    %v1264 = vpack.c.bf16 %v1260, %v1260
    %v1265 = vpack.c.bf16 %v1261, %v1261
    %v1266 = vpack.c.bf16 %v1262, %v1262
    %s1267 = scalar_lea.vmem [#allocation7], 1024
    %v1268 = vld [vmem:[%s1267] sm:$0xff]
    %v1269 = vld [vmem:[%s1267 + $0x8] sm:$0xff]
    %v1270 = vld [vmem:[%s1267 + $0x10] sm:$0xff]
    %v1271 = vld [vmem:[%s1267 + $0x18] sm:$0xff]
    %v1272 = vld [vmem:[%s1267 + $0x20] sm:$0xff]
    %v1273 = vld [vmem:[%s1267 + $0x28] sm:$0xff]
    %v1274 = vld [vmem:[%s1267 + $0x30] sm:$0xff]
    %v1275 = vld [vmem:[%s1267 + $0x38] sm:$0xff]
    %v1276 = vld [vmem:[%s1267 + $0x40] sm:$0xff]
    %v1277 = vld [vmem:[%s1267 + $0x48] sm:$0xff]
    %v1278 = vld [vmem:[%s1267 + $0x50] sm:$0xff]
    %v1279 = vld [vmem:[%s1267 + $0x58] sm:$0xff]
    %v1280 = vld [vmem:[%s1267 + $0x60] sm:$0xff]
    %v1281 = vld [vmem:[%s1267 + $0x68] sm:$0xff]
    %v1282 = vld [vmem:[%s1267 + $0x70] sm:$0xff]
    %v1283 = vld [vmem:[%s1267 + $0x78] sm:$0xff]
    %v1284 = vld [vmem:[%s1267 + $0x80] sm:$0xff]
    %v1285 = vld [vmem:[%s1267 + $0x88] sm:$0xff]
    %v1286 = vld [vmem:[%s1267 + $0x90] sm:$0xff]
    %v1287 = vld [vmem:[%s1267 + $0x98] sm:$0xff]
    %v1288 = vld [vmem:[%s1267 + $0xa0] sm:$0xff]
    %v1289 = vld [vmem:[%s1267 + $0xa8] sm:$0xff]
    %v1290 = vld [vmem:[%s1267 + $0xb0] sm:$0xff]
    %v1291 = vld [vmem:[%s1267 + $0xb8] sm:$0xff]
    %v1292 = vld [vmem:[%s1267 + $0xc0] sm:$0xff]
    %v1293 = vld [vmem:[%s1267 + $0xc8] sm:$0xff]
    %v1294 = vld [vmem:[%s1267 + $0xd0] sm:$0xff]
    %v1295 = vld [vmem:[%s1267 + $0xd8] sm:$0xff]
    %v1296 = vld [vmem:[%s1267 + $0xe0] sm:$0xff]
    %v1297 = vld [vmem:[%s1267 + $0xe8] sm:$0xff]
    %v1298 = vld [vmem:[%s1267 + $0xf0] sm:$0xff]
    %v1299 = vld [vmem:[%s1267 + $0xf8] sm:$0xff]
    %v1300 = vld [vmem:[%s1267 + $0x100] sm:$0xff]
    %v1301 = vld [vmem:[%s1267 + $0x108] sm:$0xff]
    %v1302 = vld [vmem:[%s1267 + $0x110] sm:$0xff]
    %v1303 = vld [vmem:[%s1267 + $0x118] sm:$0xff]
    %v1304 = vld [vmem:[%s1267 + $0x120] sm:$0xff]
    %v1305 = vld [vmem:[%s1267 + $0x128] sm:$0xff]
    %v1306 = vld [vmem:[%s1267 + $0x130] sm:$0xff]
    %v1307 = vld [vmem:[%s1267 + $0x138] sm:$0xff]
    %v1308 = vld [vmem:[%s1267 + $0x140] sm:$0xff]
    %v1309 = vld [vmem:[%s1267 + $0x148] sm:$0xff]
    %v1310 = vld [vmem:[%s1267 + $0x150] sm:$0xff]
    %v1311 = vld [vmem:[%s1267 + $0x158] sm:$0xff]
    %v1312 = vld [vmem:[%s1267 + $0x160] sm:$0xff]
    %v1313 = vld [vmem:[%s1267 + $0x168] sm:$0xff]
    %v1314 = vld [vmem:[%s1267 + $0x170] sm:$0xff]
    %v1315 = vld [vmem:[%s1267 + $0x178] sm:$0xff]
    %v1316 = vld [vmem:[%s1267 + $0x180] sm:$0xff]
    %v1317 = vld [vmem:[%s1267 + $0x188] sm:$0xff]
    %v1318 = vld [vmem:[%s1267 + $0x190] sm:$0xff]
    %v1319 = vld [vmem:[%s1267 + $0x198] sm:$0xff]
    %v1320 = vld [vmem:[%s1267 + $0x1a0] sm:$0xff]
    %v1321 = vld [vmem:[%s1267 + $0x1a8] sm:$0xff]
    %v1322 = vld [vmem:[%s1267 + $0x1b0] sm:$0xff]
    %v1323 = vld [vmem:[%s1267 + $0x1b8] sm:$0xff]
    %v1324 = vld [vmem:[%s1267 + $0x1c0] sm:$0xff]
    %v1325 = vld [vmem:[%s1267 + $0x1c8] sm:$0xff]
    %v1326 = vld [vmem:[%s1267 + $0x1d0] sm:$0xff]
    %v1327 = vld [vmem:[%s1267 + $0x1d8] sm:$0xff]
    %v1328 = vld [vmem:[%s1267 + $0x1e0] sm:$0xff]
    %v1329 = vld [vmem:[%s1267 + $0x1e8] sm:$0xff]
    %v1330 = vld [vmem:[%s1267 + $0x1f0] sm:$0xff]
    %v1331 = vld [vmem:[%s1267 + $0x1f8] sm:$0xff]
    %v1332 = vld [vmem:[%s1267 + $0x200] sm:$0xff]
    %v1333 = vld [vmem:[%s1267 + $0x208] sm:$0xff]
    %v1334 = vld [vmem:[%s1267 + $0x210] sm:$0xff]
    %v1335 = vld [vmem:[%s1267 + $0x218] sm:$0xff]
    %v1336 = vld [vmem:[%s1267 + $0x220] sm:$0xff]
    %v1337 = vld [vmem:[%s1267 + $0x228] sm:$0xff]
    %v1338 = vld [vmem:[%s1267 + $0x230] sm:$0xff]
    %v1339 = vld [vmem:[%s1267 + $0x238] sm:$0xff]
    %v1340 = vld [vmem:[%s1267 + $0x240] sm:$0xff]
    %v1341 = vld [vmem:[%s1267 + $0x248] sm:$0xff]
    %v1342 = vld [vmem:[%s1267 + $0x250] sm:$0xff]
    %v1343 = vld [vmem:[%s1267 + $0x258] sm:$0xff]
    %v1344 = vld [vmem:[%s1267 + $0x260] sm:$0xff]
    %v1345 = vld [vmem:[%s1267 + $0x268] sm:$0xff]
    %v1346 = vld [vmem:[%s1267 + $0x270] sm:$0xff]
    %v1347 = vld [vmem:[%s1267 + $0x278] sm:$0xff]
    %v1348 = vld [vmem:[%s1267 + $0x280] sm:$0xff]
    %v1349 = vld [vmem:[%s1267 + $0x288] sm:$0xff]
    %v1350 = vld [vmem:[%s1267 + $0x290] sm:$0xff]
    %v1351 = vld [vmem:[%s1267 + $0x298] sm:$0xff]
    %v1352 = vld [vmem:[%s1267 + $0x2a0] sm:$0xff]
    %v1353 = vld [vmem:[%s1267 + $0x2a8] sm:$0xff]
    %v1354 = vld [vmem:[%s1267 + $0x2b0] sm:$0xff]
    %v1355 = vld [vmem:[%s1267 + $0x2b8] sm:$0xff]
    %v1356 = vld [vmem:[%s1267 + $0x2c0] sm:$0xff]
    %v1357 = vld [vmem:[%s1267 + $0x2c8] sm:$0xff]
    %v1358 = vld [vmem:[%s1267 + $0x2d0] sm:$0xff]
    %v1359 = vld [vmem:[%s1267 + $0x2d8] sm:$0xff]
    %v1360 = vld [vmem:[%s1267 + $0x2e0] sm:$0xff]
    %v1361 = vld [vmem:[%s1267 + $0x2e8] sm:$0xff]
    %v1362 = vld [vmem:[%s1267 + $0x2f0] sm:$0xff]
    %v1363 = vld [vmem:[%s1267 + $0x2f8] sm:$0xff]
    %v1364 = vld [vmem:[%s1267 + $0x300] sm:$0xff]
    %v1365 = vld [vmem:[%s1267 + $0x308] sm:$0xff]
    %v1366 = vld [vmem:[%s1267 + $0x310] sm:$0xff]
    %v1367 = vld [vmem:[%s1267 + $0x318] sm:$0xff]
    %v1368 = vld [vmem:[%s1267 + $0x320] sm:$0xff]
    %v1369 = vld [vmem:[%s1267 + $0x328] sm:$0xff]
    %v1370 = vld [vmem:[%s1267 + $0x330] sm:$0xff]
    %v1371 = vld [vmem:[%s1267 + $0x338] sm:$0xff]
    %v1372 = vld [vmem:[%s1267 + $0x340] sm:$0xff]
    %v1373 = vld [vmem:[%s1267 + $0x348] sm:$0xff]
    %v1374 = vld [vmem:[%s1267 + $0x350] sm:$0xff]
    %v1375 = vld [vmem:[%s1267 + $0x358] sm:$0xff]
    %v1376 = vld [vmem:[%s1267 + $0x360] sm:$0xff]
    %v1377 = vld [vmem:[%s1267 + $0x368] sm:$0xff]
    %v1378 = vld [vmem:[%s1267 + $0x370] sm:$0xff]
    %v1379 = vld [vmem:[%s1267 + $0x378] sm:$0xff]
    %v1380 = vld [vmem:[%s1267 + $0x380] sm:$0xff]
    %v1381 = vld [vmem:[%s1267 + $0x388] sm:$0xff]
    %v1382 = vld [vmem:[%s1267 + $0x390] sm:$0xff]
    %v1383 = vld [vmem:[%s1267 + $0x398] sm:$0xff]
    %v1384 = vld [vmem:[%s1267 + $0x3a0] sm:$0xff]
    %v1385 = vld [vmem:[%s1267 + $0x3a8] sm:$0xff]
    %v1386 = vld [vmem:[%s1267 + $0x3b0] sm:$0xff]
    %v1387 = vld [vmem:[%s1267 + $0x3b8] sm:$0xff]
    %v1388 = vld [vmem:[%s1267 + $0x3c0] sm:$0xff]
    %v1389 = vld [vmem:[%s1267 + $0x3c8] sm:$0xff]
    %v1390 = vld [vmem:[%s1267 + $0x3d0] sm:$0xff]
    %v1391 = vld [vmem:[%s1267 + $0x3d8] sm:$0xff]
    %v1392 = vld [vmem:[%s1267 + $0x3e0] sm:$0xff]
    %v1393 = vld [vmem:[%s1267 + $0x3e8] sm:$0xff]
    %v1394 = vld [vmem:[%s1267 + $0x3f0] sm:$0xff]
    %v1395 = vld [vmem:[%s1267 + $0x3f8] sm:$0xff]
    %s1396 = scalar_lea.vmem [#allocation14], 2
    %v1397 = vld [vmem:[%s1396] ss:$8 sm:$0xf]
    %v1399 = vlaneseq
    %v1400 = vshrl.u32 %v1399, 7
    %v1401 = vsub.s32 0, %v1400
    %v1402 = vrot.slane %v1397, %v1401
    %v1403 = vlaneseq
    %v1404 = vshrl.u32 %v1403, 7
    %v1405 = vsub.s32 1, %v1404
    %v1406 = vrot.slane %v1397, %v1405
    %v1407 = vlaneseq
    %v1408 = vshrl.u32 %v1407, 7
    %v1409 = vsub.s32 2, %v1408
    %v1410 = vrot.slane %v1397, %v1409
    %v1411 = vlaneseq
    %v1412 = vshrl.u32 %v1411, 7
    %v1413 = vsub.s32 3, %v1412
    %v1414 = vrot.slane %v1397, %v1413
    %v1547 = vunpack.c.l.b16 %v1268
    %v1548 = vunpack.c.h.b16 %v1268
    %v1549 = vunpack.c.l.b16 %v1269
    %v1550 = vunpack.c.h.b16 %v1269
    %v1551 = vunpack.c.l.b16 %v1270
    %v1552 = vunpack.c.h.b16 %v1270
    %v1553 = vunpack.c.l.b16 %v1271
    %v1554 = vunpack.c.h.b16 %v1271
    %v1555 = vunpack.c.l.b16 %v1272
    %v1556 = vunpack.c.h.b16 %v1272
    %v1557 = vunpack.c.l.b16 %v1273
    %v1558 = vunpack.c.h.b16 %v1273
    %v1559 = vunpack.c.l.b16 %v1274
    %v1560 = vunpack.c.h.b16 %v1274
    %v1561 = vunpack.c.l.b16 %v1275
    %v1562 = vunpack.c.h.b16 %v1275
    %v1563 = vunpack.c.l.b16 %v1276
    %v1564 = vunpack.c.h.b16 %v1276
    %v1565 = vunpack.c.l.b16 %v1277
    %v1566 = vunpack.c.h.b16 %v1277
    %v1567 = vunpack.c.l.b16 %v1278
    %v1568 = vunpack.c.h.b16 %v1278
    %v1569 = vunpack.c.l.b16 %v1279
    %v1570 = vunpack.c.h.b16 %v1279
    %v1571 = vunpack.c.l.b16 %v1280
    %v1572 = vunpack.c.h.b16 %v1280
    %v1573 = vunpack.c.l.b16 %v1281
    %v1574 = vunpack.c.h.b16 %v1281
    %v1575 = vunpack.c.l.b16 %v1282
    %v1576 = vunpack.c.h.b16 %v1282
    %v1577 = vunpack.c.l.b16 %v1283
    %v1578 = vunpack.c.h.b16 %v1283
    %v1579 = vunpack.c.l.b16 %v1284
    %v1580 = vunpack.c.h.b16 %v1284
    %v1581 = vunpack.c.l.b16 %v1285
    %v1582 = vunpack.c.h.b16 %v1285
    %v1583 = vunpack.c.l.b16 %v1286
    %v1584 = vunpack.c.h.b16 %v1286
    %v1585 = vunpack.c.l.b16 %v1287
    %v1586 = vunpack.c.h.b16 %v1287
    %v1587 = vunpack.c.l.b16 %v1288
    %v1588 = vunpack.c.h.b16 %v1288
    %v1589 = vunpack.c.l.b16 %v1289
    %v1590 = vunpack.c.h.b16 %v1289
    %v1591 = vunpack.c.l.b16 %v1290
    %v1592 = vunpack.c.h.b16 %v1290
    %v1593 = vunpack.c.l.b16 %v1291
    %v1594 = vunpack.c.h.b16 %v1291
    %v1595 = vunpack.c.l.b16 %v1292
    %v1596 = vunpack.c.h.b16 %v1292
    %v1597 = vunpack.c.l.b16 %v1293
    %v1598 = vunpack.c.h.b16 %v1293
    %v1599 = vunpack.c.l.b16 %v1294
    %v1600 = vunpack.c.h.b16 %v1294
    %v1601 = vunpack.c.l.b16 %v1295
    %v1602 = vunpack.c.h.b16 %v1295
    %v1603 = vunpack.c.l.b16 %v1296
    %v1604 = vunpack.c.h.b16 %v1296
    %v1605 = vunpack.c.l.b16 %v1297
    %v1606 = vunpack.c.h.b16 %v1297
    %v1607 = vunpack.c.l.b16 %v1298
    %v1608 = vunpack.c.h.b16 %v1298
    %v1609 = vunpack.c.l.b16 %v1299
    %v1610 = vunpack.c.h.b16 %v1299
    %v1611 = vunpack.c.l.b16 %v1300
    %v1612 = vunpack.c.h.b16 %v1300
    %v1613 = vunpack.c.l.b16 %v1301
    %v1614 = vunpack.c.h.b16 %v1301
    %v1615 = vunpack.c.l.b16 %v1302
    %v1616 = vunpack.c.h.b16 %v1302
    %v1617 = vunpack.c.l.b16 %v1303
    %v1618 = vunpack.c.h.b16 %v1303
    %v1619 = vunpack.c.l.b16 %v1304
    %v1620 = vunpack.c.h.b16 %v1304
    %v1621 = vunpack.c.l.b16 %v1305
    %v1622 = vunpack.c.h.b16 %v1305
    %v1623 = vunpack.c.l.b16 %v1306
    %v1624 = vunpack.c.h.b16 %v1306
    %v1625 = vunpack.c.l.b16 %v1307
    %v1626 = vunpack.c.h.b16 %v1307
    %v1627 = vunpack.c.l.b16 %v1308
    %v1628 = vunpack.c.h.b16 %v1308
    %v1629 = vunpack.c.l.b16 %v1309
    %v1630 = vunpack.c.h.b16 %v1309
    %v1631 = vunpack.c.l.b16 %v1310
    %v1632 = vunpack.c.h.b16 %v1310
    %v1633 = vunpack.c.l.b16 %v1311
    %v1634 = vunpack.c.h.b16 %v1311
    %v1635 = vunpack.c.l.b16 %v1312
    %v1636 = vunpack.c.h.b16 %v1312
    %v1637 = vunpack.c.l.b16 %v1313
    %v1638 = vunpack.c.h.b16 %v1313
    %v1639 = vunpack.c.l.b16 %v1314
    %v1640 = vunpack.c.h.b16 %v1314
    %v1641 = vunpack.c.l.b16 %v1315
    %v1642 = vunpack.c.h.b16 %v1315
    %v1643 = vunpack.c.l.b16 %v1316
    %v1644 = vunpack.c.h.b16 %v1316
    %v1645 = vunpack.c.l.b16 %v1317
    %v1646 = vunpack.c.h.b16 %v1317
    %v1647 = vunpack.c.l.b16 %v1318
    %v1648 = vunpack.c.h.b16 %v1318
    %v1649 = vunpack.c.l.b16 %v1319
    %v1650 = vunpack.c.h.b16 %v1319
    %v1651 = vunpack.c.l.b16 %v1320
    %v1652 = vunpack.c.h.b16 %v1320
    %v1653 = vunpack.c.l.b16 %v1321
    %v1654 = vunpack.c.h.b16 %v1321
    %v1655 = vunpack.c.l.b16 %v1322
    %v1656 = vunpack.c.h.b16 %v1322
    %v1657 = vunpack.c.l.b16 %v1323
    %v1658 = vunpack.c.h.b16 %v1323
    %v1659 = vunpack.c.l.b16 %v1324
    %v1660 = vunpack.c.h.b16 %v1324
    %v1661 = vunpack.c.l.b16 %v1325
    %v1662 = vunpack.c.h.b16 %v1325
    %v1663 = vunpack.c.l.b16 %v1326
    %v1664 = vunpack.c.h.b16 %v1326
    %v1665 = vunpack.c.l.b16 %v1327
    %v1666 = vunpack.c.h.b16 %v1327
    %v1667 = vunpack.c.l.b16 %v1328
    %v1668 = vunpack.c.h.b16 %v1328
    %v1669 = vunpack.c.l.b16 %v1329
    %v1670 = vunpack.c.h.b16 %v1329
    %v1671 = vunpack.c.l.b16 %v1330
    %v1672 = vunpack.c.h.b16 %v1330
    %v1673 = vunpack.c.l.b16 %v1331
    %v1674 = vunpack.c.h.b16 %v1331
    %v1675 = vunpack.c.l.b16 %v1332
    %v1676 = vunpack.c.h.b16 %v1332
    %v1677 = vunpack.c.l.b16 %v1333
    %v1678 = vunpack.c.h.b16 %v1333
    %v1679 = vunpack.c.l.b16 %v1334
    %v1680 = vunpack.c.h.b16 %v1334
    %v1681 = vunpack.c.l.b16 %v1335
    %v1682 = vunpack.c.h.b16 %v1335
    %v1683 = vunpack.c.l.b16 %v1336
    %v1684 = vunpack.c.h.b16 %v1336
    %v1685 = vunpack.c.l.b16 %v1337
    %v1686 = vunpack.c.h.b16 %v1337
    %v1687 = vunpack.c.l.b16 %v1338
    %v1688 = vunpack.c.h.b16 %v1338
    %v1689 = vunpack.c.l.b16 %v1339
    %v1690 = vunpack.c.h.b16 %v1339
    %v1691 = vunpack.c.l.b16 %v1340
    %v1692 = vunpack.c.h.b16 %v1340
    %v1693 = vunpack.c.l.b16 %v1341
    %v1694 = vunpack.c.h.b16 %v1341
    %v1695 = vunpack.c.l.b16 %v1342
    %v1696 = vunpack.c.h.b16 %v1342
    %v1697 = vunpack.c.l.b16 %v1343
    %v1698 = vunpack.c.h.b16 %v1343
    %v1699 = vunpack.c.l.b16 %v1344
    %v1700 = vunpack.c.h.b16 %v1344
    %v1701 = vunpack.c.l.b16 %v1345
    %v1702 = vunpack.c.h.b16 %v1345
    %v1703 = vunpack.c.l.b16 %v1346
    %v1704 = vunpack.c.h.b16 %v1346
    %v1705 = vunpack.c.l.b16 %v1347
    %v1706 = vunpack.c.h.b16 %v1347
    %v1707 = vunpack.c.l.b16 %v1348
    %v1708 = vunpack.c.h.b16 %v1348
    %v1709 = vunpack.c.l.b16 %v1349
    %v1710 = vunpack.c.h.b16 %v1349
    %v1711 = vunpack.c.l.b16 %v1350
    %v1712 = vunpack.c.h.b16 %v1350
    %v1713 = vunpack.c.l.b16 %v1351
    %v1714 = vunpack.c.h.b16 %v1351
    %v1715 = vunpack.c.l.b16 %v1352
    %v1716 = vunpack.c.h.b16 %v1352
    %v1717 = vunpack.c.l.b16 %v1353
    %v1718 = vunpack.c.h.b16 %v1353
    %v1719 = vunpack.c.l.b16 %v1354
    %v1720 = vunpack.c.h.b16 %v1354
    %v1721 = vunpack.c.l.b16 %v1355
    %v1722 = vunpack.c.h.b16 %v1355
    %v1723 = vunpack.c.l.b16 %v1356
    %v1724 = vunpack.c.h.b16 %v1356
    %v1725 = vunpack.c.l.b16 %v1357
    %v1726 = vunpack.c.h.b16 %v1357
    %v1727 = vunpack.c.l.b16 %v1358
    %v1728 = vunpack.c.h.b16 %v1358
    %v1729 = vunpack.c.l.b16 %v1359
    %v1730 = vunpack.c.h.b16 %v1359
    %v1731 = vunpack.c.l.b16 %v1360
    %v1732 = vunpack.c.h.b16 %v1360
    %v1733 = vunpack.c.l.b16 %v1361
    %v1734 = vunpack.c.h.b16 %v1361
    %v1735 = vunpack.c.l.b16 %v1362
    %v1736 = vunpack.c.h.b16 %v1362
    %v1737 = vunpack.c.l.b16 %v1363
    %v1738 = vunpack.c.h.b16 %v1363
    %v1739 = vunpack.c.l.b16 %v1364
    %v1740 = vunpack.c.h.b16 %v1364
    %v1741 = vunpack.c.l.b16 %v1365
    %v1742 = vunpack.c.h.b16 %v1365
    %v1743 = vunpack.c.l.b16 %v1366
    %v1744 = vunpack.c.h.b16 %v1366
    %v1745 = vunpack.c.l.b16 %v1367
    %v1746 = vunpack.c.h.b16 %v1367
    %v1747 = vunpack.c.l.b16 %v1368
    %v1748 = vunpack.c.h.b16 %v1368
    %v1749 = vunpack.c.l.b16 %v1369
    %v1750 = vunpack.c.h.b16 %v1369
    %v1751 = vunpack.c.l.b16 %v1370
    %v1752 = vunpack.c.h.b16 %v1370
    %v1753 = vunpack.c.l.b16 %v1371
    %v1754 = vunpack.c.h.b16 %v1371
    %v1755 = vunpack.c.l.b16 %v1372
    %v1756 = vunpack.c.h.b16 %v1372
    %v1757 = vunpack.c.l.b16 %v1373
    %v1758 = vunpack.c.h.b16 %v1373
    %v1759 = vunpack.c.l.b16 %v1374
    %v1760 = vunpack.c.h.b16 %v1374
    %v1761 = vunpack.c.l.b16 %v1375
    %v1762 = vunpack.c.h.b16 %v1375
    %v1763 = vunpack.c.l.b16 %v1376
    %v1764 = vunpack.c.h.b16 %v1376
    %v1765 = vunpack.c.l.b16 %v1377
    %v1766 = vunpack.c.h.b16 %v1377
    %v1767 = vunpack.c.l.b16 %v1378
    %v1768 = vunpack.c.h.b16 %v1378
    %v1769 = vunpack.c.l.b16 %v1379
    %v1770 = vunpack.c.h.b16 %v1379
    %v1771 = vunpack.c.l.b16 %v1380
    %v1772 = vunpack.c.h.b16 %v1380
    %v1773 = vunpack.c.l.b16 %v1381
    %v1774 = vunpack.c.h.b16 %v1381
    %v1775 = vunpack.c.l.b16 %v1382
    %v1776 = vunpack.c.h.b16 %v1382
    %v1777 = vunpack.c.l.b16 %v1383
    %v1778 = vunpack.c.h.b16 %v1383
    %v1779 = vunpack.c.l.b16 %v1384
    %v1780 = vunpack.c.h.b16 %v1384
    %v1781 = vunpack.c.l.b16 %v1385
    %v1782 = vunpack.c.h.b16 %v1385
    %v1783 = vunpack.c.l.b16 %v1386
    %v1784 = vunpack.c.h.b16 %v1386
    %v1785 = vunpack.c.l.b16 %v1387
    %v1786 = vunpack.c.h.b16 %v1387
    %v1787 = vunpack.c.l.b16 %v1388
    %v1788 = vunpack.c.h.b16 %v1388
    %v1789 = vunpack.c.l.b16 %v1389
    %v1790 = vunpack.c.h.b16 %v1389
    %v1791 = vunpack.c.l.b16 %v1390
    %v1792 = vunpack.c.h.b16 %v1390
    %v1793 = vunpack.c.l.b16 %v1391
    %v1794 = vunpack.c.h.b16 %v1391
    %v1795 = vunpack.c.l.b16 %v1392
    %v1796 = vunpack.c.h.b16 %v1392
    %v1797 = vunpack.c.l.b16 %v1393
    %v1798 = vunpack.c.h.b16 %v1393
    %v1799 = vunpack.c.l.b16 %v1394
    %v1800 = vunpack.c.h.b16 %v1394
    %v1801 = vunpack.c.l.b16 %v1395
    %v1802 = vunpack.c.h.b16 %v1395
    %v1803 = vpack.c.b16 %v1551, %v1547
    %v1804 = vpack.c.b16 %v1552, %v1548
    %v1805 = vpack.c.b16 %v1553, %v1549
    %v1806 = vpack.c.b16 %v1554, %v1550
    %v1807 = vpack.c.b16 %v1559, %v1555
    %v1808 = vpack.c.b16 %v1560, %v1556
    %v1809 = vpack.c.b16 %v1561, %v1557
    %v1810 = vpack.c.b16 %v1562, %v1558
    %v1811 = vpack.c.b16 %v1567, %v1563
    %v1812 = vpack.c.b16 %v1568, %v1564
    %v1813 = vpack.c.b16 %v1569, %v1565
    %v1814 = vpack.c.b16 %v1570, %v1566
    %v1815 = vpack.c.b16 %v1575, %v1571
    %v1816 = vpack.c.b16 %v1576, %v1572
    %v1817 = vpack.c.b16 %v1577, %v1573
    %v1818 = vpack.c.b16 %v1578, %v1574
    %v1819 = vpack.c.b16 %v1583, %v1579
    %v1820 = vpack.c.b16 %v1584, %v1580
    %v1821 = vpack.c.b16 %v1585, %v1581
    %v1822 = vpack.c.b16 %v1586, %v1582
    %v1823 = vpack.c.b16 %v1591, %v1587
    %v1824 = vpack.c.b16 %v1592, %v1588
    %v1825 = vpack.c.b16 %v1593, %v1589
    %v1826 = vpack.c.b16 %v1594, %v1590
    %v1827 = vpack.c.b16 %v1599, %v1595
    %v1828 = vpack.c.b16 %v1600, %v1596
    %v1829 = vpack.c.b16 %v1601, %v1597
    %v1830 = vpack.c.b16 %v1602, %v1598
    %v1831 = vpack.c.b16 %v1607, %v1603
    %v1832 = vpack.c.b16 %v1608, %v1604
    %v1833 = vpack.c.b16 %v1609, %v1605
    %v1834 = vpack.c.b16 %v1610, %v1606
    %v1835 = vpack.c.b16 %v1615, %v1611
    %v1836 = vpack.c.b16 %v1616, %v1612
    %v1837 = vpack.c.b16 %v1617, %v1613
    %v1838 = vpack.c.b16 %v1618, %v1614
    %v1839 = vpack.c.b16 %v1623, %v1619
    %v1840 = vpack.c.b16 %v1624, %v1620
    %v1841 = vpack.c.b16 %v1625, %v1621
    %v1842 = vpack.c.b16 %v1626, %v1622
    %v1843 = vpack.c.b16 %v1631, %v1627
    %v1844 = vpack.c.b16 %v1632, %v1628
    %v1845 = vpack.c.b16 %v1633, %v1629
    %v1846 = vpack.c.b16 %v1634, %v1630
    %v1847 = vpack.c.b16 %v1639, %v1635
    %v1848 = vpack.c.b16 %v1640, %v1636
    %v1849 = vpack.c.b16 %v1641, %v1637
    %v1850 = vpack.c.b16 %v1642, %v1638
    %v1851 = vpack.c.b16 %v1647, %v1643
    %v1852 = vpack.c.b16 %v1648, %v1644
    %v1853 = vpack.c.b16 %v1649, %v1645
    %v1854 = vpack.c.b16 %v1650, %v1646
    %v1855 = vpack.c.b16 %v1655, %v1651
    %v1856 = vpack.c.b16 %v1656, %v1652
    %v1857 = vpack.c.b16 %v1657, %v1653
    %v1858 = vpack.c.b16 %v1658, %v1654
    %v1859 = vpack.c.b16 %v1663, %v1659
    %v1860 = vpack.c.b16 %v1664, %v1660
    %v1861 = vpack.c.b16 %v1665, %v1661
    %v1862 = vpack.c.b16 %v1666, %v1662
    %v1863 = vpack.c.b16 %v1671, %v1667
    %v1864 = vpack.c.b16 %v1672, %v1668
    %v1865 = vpack.c.b16 %v1673, %v1669
    %v1866 = vpack.c.b16 %v1674, %v1670
    %v1867 = vpack.c.b16 %v1679, %v1675
    %v1868 = vpack.c.b16 %v1680, %v1676
    %v1869 = vpack.c.b16 %v1681, %v1677
    %v1870 = vpack.c.b16 %v1682, %v1678
    %v1871 = vpack.c.b16 %v1687, %v1683
    %v1872 = vpack.c.b16 %v1688, %v1684
    %v1873 = vpack.c.b16 %v1689, %v1685
    %v1874 = vpack.c.b16 %v1690, %v1686
    %v1875 = vpack.c.b16 %v1695, %v1691
    %v1876 = vpack.c.b16 %v1696, %v1692
    %v1877 = vpack.c.b16 %v1697, %v1693
    %v1878 = vpack.c.b16 %v1698, %v1694
    %v1879 = vpack.c.b16 %v1703, %v1699
    %v1880 = vpack.c.b16 %v1704, %v1700
    %v1881 = vpack.c.b16 %v1705, %v1701
    %v1882 = vpack.c.b16 %v1706, %v1702
    %v1883 = vpack.c.b16 %v1711, %v1707
    %v1884 = vpack.c.b16 %v1712, %v1708
    %v1885 = vpack.c.b16 %v1713, %v1709
    %v1886 = vpack.c.b16 %v1714, %v1710
    %v1887 = vpack.c.b16 %v1719, %v1715
    %v1888 = vpack.c.b16 %v1720, %v1716
    %v1889 = vpack.c.b16 %v1721, %v1717
    %v1890 = vpack.c.b16 %v1722, %v1718
    %v1891 = vpack.c.b16 %v1727, %v1723
    %v1892 = vpack.c.b16 %v1728, %v1724
    %v1893 = vpack.c.b16 %v1729, %v1725
    %v1894 = vpack.c.b16 %v1730, %v1726
    %v1895 = vpack.c.b16 %v1735, %v1731
    %v1896 = vpack.c.b16 %v1736, %v1732
    %v1897 = vpack.c.b16 %v1737, %v1733
    %v1898 = vpack.c.b16 %v1738, %v1734
    %v1899 = vpack.c.b16 %v1743, %v1739
    %v1900 = vpack.c.b16 %v1744, %v1740
    %v1901 = vpack.c.b16 %v1745, %v1741
    %v1902 = vpack.c.b16 %v1746, %v1742
    %v1903 = vpack.c.b16 %v1751, %v1747
    %v1904 = vpack.c.b16 %v1752, %v1748
    %v1905 = vpack.c.b16 %v1753, %v1749
    %v1906 = vpack.c.b16 %v1754, %v1750
    %v1907 = vpack.c.b16 %v1759, %v1755
    %v1908 = vpack.c.b16 %v1760, %v1756
    %v1909 = vpack.c.b16 %v1761, %v1757
    %v1910 = vpack.c.b16 %v1762, %v1758
    %v1911 = vpack.c.b16 %v1767, %v1763
    %v1912 = vpack.c.b16 %v1768, %v1764
    %v1913 = vpack.c.b16 %v1769, %v1765
    %v1914 = vpack.c.b16 %v1770, %v1766
    %v1915 = vpack.c.b16 %v1775, %v1771
    %v1916 = vpack.c.b16 %v1776, %v1772
    %v1917 = vpack.c.b16 %v1777, %v1773
    %v1918 = vpack.c.b16 %v1778, %v1774
    %v1919 = vpack.c.b16 %v1783, %v1779
    %v1920 = vpack.c.b16 %v1784, %v1780
    %v1921 = vpack.c.b16 %v1785, %v1781
    %v1922 = vpack.c.b16 %v1786, %v1782
    %v1923 = vpack.c.b16 %v1791, %v1787
    %v1924 = vpack.c.b16 %v1792, %v1788
    %v1925 = vpack.c.b16 %v1793, %v1789
    %v1926 = vpack.c.b16 %v1794, %v1790
    %v1927 = vpack.c.b16 %v1799, %v1795
    %v1928 = vpack.c.b16 %v1800, %v1796
    %v1929 = vpack.c.b16 %v1801, %v1797
    %v1930 = vpack.c.b16 %v1802, %v1798
    %2059 = vmatprep.subr.bf16.mxu0 %v1832
    %2060 = vmatpush1.bf16.msra.mxu0 %v1831
    %2061 = vmatprep.subr.bf16.mxu0 %v1828
    %2062 = vmatpush1.bf16.msra.mxu0 %v1827
    %2063 = vmatprep.subr.bf16.mxu0 %v1824
    %2064 = vmatpush1.bf16.msra.mxu0 %v1823
    %2065 = vmatprep.subr.bf16.mxu0 %v1820
    %2066 = vmatpush1.bf16.msra.mxu0 %v1819
    %2067 = vmatprep.subr.bf16.mxu0 %v1816
    %2068 = vmatpush1.bf16.msra.mxu0 %v1815
    %2069 = vmatprep.subr.bf16.mxu0 %v1812
    %2070 = vmatpush1.bf16.msra.mxu0 %v1811
    %2071 = vmatprep.subr.bf16.mxu0 %v1808
    %2072 = vmatpush1.bf16.msra.mxu0 %v1807
    %2073 = vmatprep.subr.bf16.mxu0 %v1804
    %2074 = vmatpush1.bf16.msra.mxu0 %v1803
    %2075 = vmatprep.subr.bf16.mxu0 %v1864
    %2076 = vmatpush2.bf16.msra.mxu0 %v1863
    %2077 = vmatprep.subr.bf16.mxu0 %v1860
    %2078 = vmatpush2.bf16.msra.mxu0 %v1859
    %2079 = vmatprep.subr.bf16.mxu0 %v1856
    %2080 = vmatpush2.bf16.msra.mxu0 %v1855
    %2081 = vmatprep.subr.bf16.mxu0 %v1852
    %2082 = vmatpush2.bf16.msra.mxu0 %v1851
    %2083 = vmatprep.subr.bf16.mxu0 %v1848
    %2084 = vmatpush2.bf16.msra.mxu0 %v1847
    %2085 = vmatprep.subr.bf16.mxu0 %v1844
    %2086 = vmatpush2.bf16.msra.mxu0 %v1843
    %2087 = vmatprep.subr.bf16.mxu0 %v1840
    %2088 = vmatpush2.bf16.msra.mxu0 %v1839
    %2089 = vmatprep.subr.bf16.mxu0 %v1836
    %2090 = vmatpush2.bf16.msra.mxu0 %v1835
    %2091 = vmatprep.mubr.bf16.mxu0 %v1264
    %2092 = vmatmul.mubr.bf16.gmra.mxu0 %v1263
    %v2093 = vpop.f32.mrf.mxu0
    %v2094 = vadd.f32 %v1402, %v2093
    %v2095 = vpop.f32.mrf.mxu0
    %v2096 = vadd.f32 %v1406, %v2095
    %v2097 = vpop.f32.mrf.mxu0
    %v2098 = vpop.f32.mrf.mxu0
    %2099 = vdwg.mxu0
    %2100 = vmatprep.subr.bf16.mxu0 %v1896
    %2101 = vmatpush1.bf16.msra.mxu0 %v1895
    %2102 = vmatprep.subr.bf16.mxu0 %v1892
    %2103 = vmatpush1.bf16.msra.mxu0 %v1891
    %2104 = vmatprep.subr.bf16.mxu0 %v1888
    %2105 = vmatpush1.bf16.msra.mxu0 %v1887
    %2106 = vmatprep.subr.bf16.mxu0 %v1884
    %2107 = vmatpush1.bf16.msra.mxu0 %v1883
    %2108 = vmatprep.subr.bf16.mxu0 %v1880
    %2109 = vmatpush1.bf16.msra.mxu0 %v1879
    %2110 = vmatprep.subr.bf16.mxu0 %v1876
    %2111 = vmatpush1.bf16.msra.mxu0 %v1875
    %2112 = vmatprep.subr.bf16.mxu0 %v1872
    %2113 = vmatpush1.bf16.msra.mxu0 %v1871
    %2114 = vmatprep.subr.bf16.mxu0 %v1868
    %2115 = vmatpush1.bf16.msra.mxu0 %v1867
    %2116 = vmatprep.subr.bf16.mxu0 %v1928
    %2117 = vmatpush2.bf16.msra.mxu0 %v1927
    %2118 = vmatprep.subr.bf16.mxu0 %v1924
    %2119 = vmatpush2.bf16.msra.mxu0 %v1923
    %2120 = vmatprep.subr.bf16.mxu0 %v1920
    %2121 = vmatpush2.bf16.msra.mxu0 %v1919
    %2122 = vmatprep.subr.bf16.mxu0 %v1916
    %2123 = vmatpush2.bf16.msra.mxu0 %v1915
    %2124 = vmatprep.subr.bf16.mxu0 %v1912
    %2125 = vmatpush2.bf16.msra.mxu0 %v1911
    %2126 = vmatprep.subr.bf16.mxu0 %v1908
    %2127 = vmatpush2.bf16.msra.mxu0 %v1907
    %2128 = vmatprep.subr.bf16.mxu0 %v1904
    %2129 = vmatpush2.bf16.msra.mxu0 %v1903
    %2130 = vmatprep.subr.bf16.mxu0 %v1900
    %2131 = vmatpush2.bf16.msra.mxu0 %v1899
    %2132 = vmatprep.mubr.bf16.mxu0 %v1266
    %2133 = vmatmul.mubr.bf16.gmra.mxu0 %v1265
    %v2134 = vpop.f32.mrf.mxu0
    %v2135 = vadd.f32 %v2094, %v2134
    %v2136 = vpop.f32.mrf.mxu0
    %v2137 = vadd.f32 %v2096, %v2136
    %v2138 = vpop.f32.mrf.mxu0
    %v2139 = vpop.f32.mrf.mxu0
    %2140 = vdwg.mxu0
    %2141 = vmatprep.subr.bf16.mxu0 %v1834
    %2142 = vmatpush1.bf16.msra.mxu0 %v1833
    %2143 = vmatprep.subr.bf16.mxu0 %v1830
    %2144 = vmatpush1.bf16.msra.mxu0 %v1829
    %2145 = vmatprep.subr.bf16.mxu0 %v1826
    %2146 = vmatpush1.bf16.msra.mxu0 %v1825
    %2147 = vmatprep.subr.bf16.mxu0 %v1822
    %2148 = vmatpush1.bf16.msra.mxu0 %v1821
    %2149 = vmatprep.subr.bf16.mxu0 %v1818
    %2150 = vmatpush1.bf16.msra.mxu0 %v1817
    %2151 = vmatprep.subr.bf16.mxu0 %v1814
    %2152 = vmatpush1.bf16.msra.mxu0 %v1813
    %2153 = vmatprep.subr.bf16.mxu0 %v1810
    %2154 = vmatpush1.bf16.msra.mxu0 %v1809
    %2155 = vmatprep.subr.bf16.mxu0 %v1806
    %2156 = vmatpush1.bf16.msra.mxu0 %v1805
    %2157 = vmatprep.subr.bf16.mxu0 %v1866
    %2158 = vmatpush2.bf16.msra.mxu0 %v1865
    %2159 = vmatprep.subr.bf16.mxu0 %v1862
    %2160 = vmatpush2.bf16.msra.mxu0 %v1861
    %2161 = vmatprep.subr.bf16.mxu0 %v1858
    %2162 = vmatpush2.bf16.msra.mxu0 %v1857
    %2163 = vmatprep.subr.bf16.mxu0 %v1854
    %2164 = vmatpush2.bf16.msra.mxu0 %v1853
    %2165 = vmatprep.subr.bf16.mxu0 %v1850
    %2166 = vmatpush2.bf16.msra.mxu0 %v1849
    %2167 = vmatprep.subr.bf16.mxu0 %v1846
    %2168 = vmatpush2.bf16.msra.mxu0 %v1845
    %2169 = vmatprep.subr.bf16.mxu0 %v1842
    %2170 = vmatpush2.bf16.msra.mxu0 %v1841
    %2171 = vmatprep.subr.bf16.mxu0 %v1838
    %2172 = vmatpush2.bf16.msra.mxu0 %v1837
    %2173 = vmatprep.mubr.bf16.mxu0 %v1264
    %2174 = vmatmul.mubr.bf16.gmra.mxu0 %v1263
    %v2175 = vpop.f32.mrf.mxu0
    %v2176 = vadd.f32 %v1410, %v2175
    %v2177 = vpop.f32.mrf.mxu0
    %v2178 = vadd.f32 %v1414, %v2177
    %v2179 = vpop.f32.mrf.mxu0
    %v2180 = vpop.f32.mrf.mxu0
    %2181 = vdwg.mxu0
    %2182 = vmatprep.subr.bf16.mxu0 %v1898
    %2183 = vmatpush1.bf16.msra.mxu0 %v1897
    %2184 = vmatprep.subr.bf16.mxu0 %v1894
    %2185 = vmatpush1.bf16.msra.mxu0 %v1893
    %2186 = vmatprep.subr.bf16.mxu0 %v1890
    %2187 = vmatpush1.bf16.msra.mxu0 %v1889
    %2188 = vmatprep.subr.bf16.mxu0 %v1886
    %2189 = vmatpush1.bf16.msra.mxu0 %v1885
    %2190 = vmatprep.subr.bf16.mxu0 %v1882
    %2191 = vmatpush1.bf16.msra.mxu0 %v1881
    %2192 = vmatprep.subr.bf16.mxu0 %v1878
    %2193 = vmatpush1.bf16.msra.mxu0 %v1877
    %2194 = vmatprep.subr.bf16.mxu0 %v1874
    %2195 = vmatpush1.bf16.msra.mxu0 %v1873
    %2196 = vmatprep.subr.bf16.mxu0 %v1870
    %2197 = vmatpush1.bf16.msra.mxu0 %v1869
    %2198 = vmatprep.subr.bf16.mxu0 %v1930
    %2199 = vmatpush2.bf16.msra.mxu0 %v1929
    %2200 = vmatprep.subr.bf16.mxu0 %v1926
    %2201 = vmatpush2.bf16.msra.mxu0 %v1925
    %2202 = vmatprep.subr.bf16.mxu0 %v1922
    %2203 = vmatpush2.bf16.msra.mxu0 %v1921
    %2204 = vmatprep.subr.bf16.mxu0 %v1918
    %2205 = vmatpush2.bf16.msra.mxu0 %v1917
    %2206 = vmatprep.subr.bf16.mxu0 %v1914
    %2207 = vmatpush2.bf16.msra.mxu0 %v1913
    %2208 = vmatprep.subr.bf16.mxu0 %v1910
    %2209 = vmatpush2.bf16.msra.mxu0 %v1909
    %2210 = vmatprep.subr.bf16.mxu0 %v1906
    %2211 = vmatpush2.bf16.msra.mxu0 %v1905
    %2212 = vmatprep.subr.bf16.mxu0 %v1902
    %2213 = vmatpush2.bf16.msra.mxu0 %v1901
    %2214 = vmatprep.mubr.bf16.mxu0 %v1266
    %2215 = vmatmul.mubr.bf16.gmra.mxu0 %v1265
    %v2216 = vpop.f32.mrf.mxu0
    %v2217 = vadd.f32 %v2176, %v2216
    %v2218 = vpop.f32.mrf.mxu0
    %v2219 = vadd.f32 %v2178, %v2218
    %v2220 = vpop.f32.mrf.mxu0
    %v2221 = vpop.f32.mrf.mxu0
    %2222 = vdwg.mxu0
    %v2223 = vmax.f32 %v2135, 0.0
    %v2224 = vmax.f32 %v2137, 0.0
    %v2225 = vmax.f32 %v2217, 0.0
    %v2226 = vmax.f32 %v2219, 0.0
    %v2227 = vpack.c.bf16 %v2223, %v2223
    %v2228 = vpack.c.bf16 %v2224, %v2224
    %v2229 = vpack.c.bf16 %v2225, %v2225
    %v2230 = vpack.c.bf16 %v2226, %v2226
    %s2231 = scalar_lea.vmem [#allocation7], 2048
    %v2232 = vld [vmem:[%s2231] sm:$0xff]
    %v2233 = vld [vmem:[%s2231 + $0x8] sm:$0xff]
    %v2234 = vld [vmem:[%s2231 + $0x10] sm:$0xff]
    %v2235 = vld [vmem:[%s2231 + $0x18] sm:$0xff]
    %v2236 = vld [vmem:[%s2231 + $0x20] sm:$0xff]
    %v2237 = vld [vmem:[%s2231 + $0x28] sm:$0xff]
    %v2238 = vld [vmem:[%s2231 + $0x30] sm:$0xff]
    %v2239 = vld [vmem:[%s2231 + $0x38] sm:$0xff]
    %v2240 = vld [vmem:[%s2231 + $0x40] sm:$0xff]
    %v2241 = vld [vmem:[%s2231 + $0x48] sm:$0xff]
    %v2242 = vld [vmem:[%s2231 + $0x50] sm:$0xff]
    %v2243 = vld [vmem:[%s2231 + $0x58] sm:$0xff]
    %v2244 = vld [vmem:[%s2231 + $0x60] sm:$0xff]
    %v2245 = vld [vmem:[%s2231 + $0x68] sm:$0xff]
    %v2246 = vld [vmem:[%s2231 + $0x70] sm:$0xff]
    %v2247 = vld [vmem:[%s2231 + $0x78] sm:$0xff]
    %v2248 = vld [vmem:[%s2231 + $0x80] sm:$0xff]
    %v2249 = vld [vmem:[%s2231 + $0x88] sm:$0xff]
    %v2250 = vld [vmem:[%s2231 + $0x90] sm:$0xff]
    %v2251 = vld [vmem:[%s2231 + $0x98] sm:$0xff]
    %v2252 = vld [vmem:[%s2231 + $0xa0] sm:$0xff]
    %v2253 = vld [vmem:[%s2231 + $0xa8] sm:$0xff]
    %v2254 = vld [vmem:[%s2231 + $0xb0] sm:$0xff]
    %v2255 = vld [vmem:[%s2231 + $0xb8] sm:$0xff]
    %v2256 = vld [vmem:[%s2231 + $0xc0] sm:$0xff]
    %v2257 = vld [vmem:[%s2231 + $0xc8] sm:$0xff]
    %v2258 = vld [vmem:[%s2231 + $0xd0] sm:$0xff]
    %v2259 = vld [vmem:[%s2231 + $0xd8] sm:$0xff]
    %v2260 = vld [vmem:[%s2231 + $0xe0] sm:$0xff]
    %v2261 = vld [vmem:[%s2231 + $0xe8] sm:$0xff]
    %v2262 = vld [vmem:[%s2231 + $0xf0] sm:$0xff]
    %v2263 = vld [vmem:[%s2231 + $0xf8] sm:$0xff]
    %v2264 = vld [vmem:[%s2231 + $0x100] sm:$0xff]
    %v2265 = vld [vmem:[%s2231 + $0x108] sm:$0xff]
    %v2266 = vld [vmem:[%s2231 + $0x110] sm:$0xff]
    %v2267 = vld [vmem:[%s2231 + $0x118] sm:$0xff]
    %v2268 = vld [vmem:[%s2231 + $0x120] sm:$0xff]
    %v2269 = vld [vmem:[%s2231 + $0x128] sm:$0xff]
    %v2270 = vld [vmem:[%s2231 + $0x130] sm:$0xff]
    %v2271 = vld [vmem:[%s2231 + $0x138] sm:$0xff]
    %v2272 = vld [vmem:[%s2231 + $0x140] sm:$0xff]
    %v2273 = vld [vmem:[%s2231 + $0x148] sm:$0xff]
    %v2274 = vld [vmem:[%s2231 + $0x150] sm:$0xff]
    %v2275 = vld [vmem:[%s2231 + $0x158] sm:$0xff]
    %v2276 = vld [vmem:[%s2231 + $0x160] sm:$0xff]
    %v2277 = vld [vmem:[%s2231 + $0x168] sm:$0xff]
    %v2278 = vld [vmem:[%s2231 + $0x170] sm:$0xff]
    %v2279 = vld [vmem:[%s2231 + $0x178] sm:$0xff]
    %v2280 = vld [vmem:[%s2231 + $0x180] sm:$0xff]
    %v2281 = vld [vmem:[%s2231 + $0x188] sm:$0xff]
    %v2282 = vld [vmem:[%s2231 + $0x190] sm:$0xff]
    %v2283 = vld [vmem:[%s2231 + $0x198] sm:$0xff]
    %v2284 = vld [vmem:[%s2231 + $0x1a0] sm:$0xff]
    %v2285 = vld [vmem:[%s2231 + $0x1a8] sm:$0xff]
    %v2286 = vld [vmem:[%s2231 + $0x1b0] sm:$0xff]
    %v2287 = vld [vmem:[%s2231 + $0x1b8] sm:$0xff]
    %v2288 = vld [vmem:[%s2231 + $0x1c0] sm:$0xff]
    %v2289 = vld [vmem:[%s2231 + $0x1c8] sm:$0xff]
    %v2290 = vld [vmem:[%s2231 + $0x1d0] sm:$0xff]
    %v2291 = vld [vmem:[%s2231 + $0x1d8] sm:$0xff]
    %v2292 = vld [vmem:[%s2231 + $0x1e0] sm:$0xff]
    %v2293 = vld [vmem:[%s2231 + $0x1e8] sm:$0xff]
    %v2294 = vld [vmem:[%s2231 + $0x1f0] sm:$0xff]
    %v2295 = vld [vmem:[%s2231 + $0x1f8] sm:$0xff]
    %v2296 = vld [vmem:[%s2231 + $0x200] sm:$0xff]
    %v2297 = vld [vmem:[%s2231 + $0x208] sm:$0xff]
    %v2298 = vld [vmem:[%s2231 + $0x210] sm:$0xff]
    %v2299 = vld [vmem:[%s2231 + $0x218] sm:$0xff]
    %v2300 = vld [vmem:[%s2231 + $0x220] sm:$0xff]
    %v2301 = vld [vmem:[%s2231 + $0x228] sm:$0xff]
    %v2302 = vld [vmem:[%s2231 + $0x230] sm:$0xff]
    %v2303 = vld [vmem:[%s2231 + $0x238] sm:$0xff]
    %v2304 = vld [vmem:[%s2231 + $0x240] sm:$0xff]
    %v2305 = vld [vmem:[%s2231 + $0x248] sm:$0xff]
    %v2306 = vld [vmem:[%s2231 + $0x250] sm:$0xff]
    %v2307 = vld [vmem:[%s2231 + $0x258] sm:$0xff]
    %v2308 = vld [vmem:[%s2231 + $0x260] sm:$0xff]
    %v2309 = vld [vmem:[%s2231 + $0x268] sm:$0xff]
    %v2310 = vld [vmem:[%s2231 + $0x270] sm:$0xff]
    %v2311 = vld [vmem:[%s2231 + $0x278] sm:$0xff]
    %v2312 = vld [vmem:[%s2231 + $0x280] sm:$0xff]
    %v2313 = vld [vmem:[%s2231 + $0x288] sm:$0xff]
    %v2314 = vld [vmem:[%s2231 + $0x290] sm:$0xff]
    %v2315 = vld [vmem:[%s2231 + $0x298] sm:$0xff]
    %v2316 = vld [vmem:[%s2231 + $0x2a0] sm:$0xff]
    %v2317 = vld [vmem:[%s2231 + $0x2a8] sm:$0xff]
    %v2318 = vld [vmem:[%s2231 + $0x2b0] sm:$0xff]
    %v2319 = vld [vmem:[%s2231 + $0x2b8] sm:$0xff]
    %v2320 = vld [vmem:[%s2231 + $0x2c0] sm:$0xff]
    %v2321 = vld [vmem:[%s2231 + $0x2c8] sm:$0xff]
    %v2322 = vld [vmem:[%s2231 + $0x2d0] sm:$0xff]
    %v2323 = vld [vmem:[%s2231 + $0x2d8] sm:$0xff]
    %v2324 = vld [vmem:[%s2231 + $0x2e0] sm:$0xff]
    %v2325 = vld [vmem:[%s2231 + $0x2e8] sm:$0xff]
    %v2326 = vld [vmem:[%s2231 + $0x2f0] sm:$0xff]
    %v2327 = vld [vmem:[%s2231 + $0x2f8] sm:$0xff]
    %v2328 = vld [vmem:[%s2231 + $0x300] sm:$0xff]
    %v2329 = vld [vmem:[%s2231 + $0x308] sm:$0xff]
    %v2330 = vld [vmem:[%s2231 + $0x310] sm:$0xff]
    %v2331 = vld [vmem:[%s2231 + $0x318] sm:$0xff]
    %v2332 = vld [vmem:[%s2231 + $0x320] sm:$0xff]
    %v2333 = vld [vmem:[%s2231 + $0x328] sm:$0xff]
    %v2334 = vld [vmem:[%s2231 + $0x330] sm:$0xff]
    %v2335 = vld [vmem:[%s2231 + $0x338] sm:$0xff]
    %v2336 = vld [vmem:[%s2231 + $0x340] sm:$0xff]
    %v2337 = vld [vmem:[%s2231 + $0x348] sm:$0xff]
    %v2338 = vld [vmem:[%s2231 + $0x350] sm:$0xff]
    %v2339 = vld [vmem:[%s2231 + $0x358] sm:$0xff]
    %v2340 = vld [vmem:[%s2231 + $0x360] sm:$0xff]
    %v2341 = vld [vmem:[%s2231 + $0x368] sm:$0xff]
    %v2342 = vld [vmem:[%s2231 + $0x370] sm:$0xff]
    %v2343 = vld [vmem:[%s2231 + $0x378] sm:$0xff]
    %v2344 = vld [vmem:[%s2231 + $0x380] sm:$0xff]
    %v2345 = vld [vmem:[%s2231 + $0x388] sm:$0xff]
    %v2346 = vld [vmem:[%s2231 + $0x390] sm:$0xff]
    %v2347 = vld [vmem:[%s2231 + $0x398] sm:$0xff]
    %v2348 = vld [vmem:[%s2231 + $0x3a0] sm:$0xff]
    %v2349 = vld [vmem:[%s2231 + $0x3a8] sm:$0xff]
    %v2350 = vld [vmem:[%s2231 + $0x3b0] sm:$0xff]
    %v2351 = vld [vmem:[%s2231 + $0x3b8] sm:$0xff]
    %v2352 = vld [vmem:[%s2231 + $0x3c0] sm:$0xff]
    %v2353 = vld [vmem:[%s2231 + $0x3c8] sm:$0xff]
    %v2354 = vld [vmem:[%s2231 + $0x3d0] sm:$0xff]
    %v2355 = vld [vmem:[%s2231 + $0x3d8] sm:$0xff]
    %v2356 = vld [vmem:[%s2231 + $0x3e0] sm:$0xff]
    %v2357 = vld [vmem:[%s2231 + $0x3e8] sm:$0xff]
    %v2358 = vld [vmem:[%s2231 + $0x3f0] sm:$0xff]
    %v2359 = vld [vmem:[%s2231 + $0x3f8] sm:$0xff]
    %s2360 = scalar_lea.vmem [#allocation14], 3
    %v2361 = vld [vmem:[%s2360] ss:$8 sm:$0xf]
    %v2363 = vlaneseq
    %v2364 = vshrl.u32 %v2363, 7
    %v2365 = vsub.s32 0, %v2364
    %v2366 = vrot.slane %v2361, %v2365
    %v2367 = vlaneseq
    %v2368 = vshrl.u32 %v2367, 7
    %v2369 = vsub.s32 1, %v2368
    %v2370 = vrot.slane %v2361, %v2369
    %v2371 = vlaneseq
    %v2372 = vshrl.u32 %v2371, 7
    %v2373 = vsub.s32 2, %v2372
    %v2374 = vrot.slane %v2361, %v2373
    %v2375 = vlaneseq
    %v2376 = vshrl.u32 %v2375, 7
    %v2377 = vsub.s32 3, %v2376
    %v2378 = vrot.slane %v2361, %v2377
    %v2511 = vunpack.c.l.b16 %v2232
    %v2512 = vunpack.c.h.b16 %v2232
    %v2513 = vunpack.c.l.b16 %v2233
    %v2514 = vunpack.c.h.b16 %v2233
    %v2515 = vunpack.c.l.b16 %v2234
    %v2516 = vunpack.c.h.b16 %v2234
    %v2517 = vunpack.c.l.b16 %v2235
    %v2518 = vunpack.c.h.b16 %v2235
    %v2519 = vunpack.c.l.b16 %v2236
    %v2520 = vunpack.c.h.b16 %v2236
    %v2521 = vunpack.c.l.b16 %v2237
    %v2522 = vunpack.c.h.b16 %v2237
    %v2523 = vunpack.c.l.b16 %v2238
    %v2524 = vunpack.c.h.b16 %v2238
    %v2525 = vunpack.c.l.b16 %v2239
    %v2526 = vunpack.c.h.b16 %v2239
    %v2527 = vunpack.c.l.b16 %v2240
    %v2528 = vunpack.c.h.b16 %v2240
    %v2529 = vunpack.c.l.b16 %v2241
    %v2530 = vunpack.c.h.b16 %v2241
    %v2531 = vunpack.c.l.b16 %v2242
    %v2532 = vunpack.c.h.b16 %v2242
    %v2533 = vunpack.c.l.b16 %v2243
    %v2534 = vunpack.c.h.b16 %v2243
    %v2535 = vunpack.c.l.b16 %v2244
    %v2536 = vunpack.c.h.b16 %v2244
    %v2537 = vunpack.c.l.b16 %v2245
    %v2538 = vunpack.c.h.b16 %v2245
    %v2539 = vunpack.c.l.b16 %v2246
    %v2540 = vunpack.c.h.b16 %v2246
    %v2541 = vunpack.c.l.b16 %v2247
    %v2542 = vunpack.c.h.b16 %v2247
    %v2543 = vunpack.c.l.b16 %v2248
    %v2544 = vunpack.c.h.b16 %v2248
    %v2545 = vunpack.c.l.b16 %v2249
    %v2546 = vunpack.c.h.b16 %v2249
    %v2547 = vunpack.c.l.b16 %v2250
    %v2548 = vunpack.c.h.b16 %v2250
    %v2549 = vunpack.c.l.b16 %v2251
    %v2550 = vunpack.c.h.b16 %v2251
    %v2551 = vunpack.c.l.b16 %v2252
    %v2552 = vunpack.c.h.b16 %v2252
    %v2553 = vunpack.c.l.b16 %v2253
    %v2554 = vunpack.c.h.b16 %v2253
    %v2555 = vunpack.c.l.b16 %v2254
    %v2556 = vunpack.c.h.b16 %v2254
    %v2557 = vunpack.c.l.b16 %v2255
    %v2558 = vunpack.c.h.b16 %v2255
    %v2559 = vunpack.c.l.b16 %v2256
    %v2560 = vunpack.c.h.b16 %v2256
    %v2561 = vunpack.c.l.b16 %v2257
    %v2562 = vunpack.c.h.b16 %v2257
    %v2563 = vunpack.c.l.b16 %v2258
    %v2564 = vunpack.c.h.b16 %v2258
    %v2565 = vunpack.c.l.b16 %v2259
    %v2566 = vunpack.c.h.b16 %v2259
    %v2567 = vunpack.c.l.b16 %v2260
    %v2568 = vunpack.c.h.b16 %v2260
    %v2569 = vunpack.c.l.b16 %v2261
    %v2570 = vunpack.c.h.b16 %v2261
    %v2571 = vunpack.c.l.b16 %v2262
    %v2572 = vunpack.c.h.b16 %v2262
    %v2573 = vunpack.c.l.b16 %v2263
    %v2574 = vunpack.c.h.b16 %v2263
    %v2575 = vunpack.c.l.b16 %v2264
    %v2576 = vunpack.c.h.b16 %v2264
    %v2577 = vunpack.c.l.b16 %v2265
    %v2578 = vunpack.c.h.b16 %v2265
    %v2579 = vunpack.c.l.b16 %v2266
    %v2580 = vunpack.c.h.b16 %v2266
    %v2581 = vunpack.c.l.b16 %v2267
    %v2582 = vunpack.c.h.b16 %v2267
    %v2583 = vunpack.c.l.b16 %v2268
    %v2584 = vunpack.c.h.b16 %v2268
    %v2585 = vunpack.c.l.b16 %v2269
    %v2586 = vunpack.c.h.b16 %v2269
    %v2587 = vunpack.c.l.b16 %v2270
    %v2588 = vunpack.c.h.b16 %v2270
    %v2589 = vunpack.c.l.b16 %v2271
    %v2590 = vunpack.c.h.b16 %v2271
    %v2591 = vunpack.c.l.b16 %v2272
    %v2592 = vunpack.c.h.b16 %v2272
    %v2593 = vunpack.c.l.b16 %v2273
    %v2594 = vunpack.c.h.b16 %v2273
    %v2595 = vunpack.c.l.b16 %v2274
    %v2596 = vunpack.c.h.b16 %v2274
    %v2597 = vunpack.c.l.b16 %v2275
    %v2598 = vunpack.c.h.b16 %v2275
    %v2599 = vunpack.c.l.b16 %v2276
    %v2600 = vunpack.c.h.b16 %v2276
    %v2601 = vunpack.c.l.b16 %v2277
    %v2602 = vunpack.c.h.b16 %v2277
    %v2603 = vunpack.c.l.b16 %v2278
    %v2604 = vunpack.c.h.b16 %v2278
    %v2605 = vunpack.c.l.b16 %v2279
    %v2606 = vunpack.c.h.b16 %v2279
    %v2607 = vunpack.c.l.b16 %v2280
    %v2608 = vunpack.c.h.b16 %v2280
    %v2609 = vunpack.c.l.b16 %v2281
    %v2610 = vunpack.c.h.b16 %v2281
    %v2611 = vunpack.c.l.b16 %v2282
    %v2612 = vunpack.c.h.b16 %v2282
    %v2613 = vunpack.c.l.b16 %v2283
    %v2614 = vunpack.c.h.b16 %v2283
    %v2615 = vunpack.c.l.b16 %v2284
    %v2616 = vunpack.c.h.b16 %v2284
    %v2617 = vunpack.c.l.b16 %v2285
    %v2618 = vunpack.c.h.b16 %v2285
    %v2619 = vunpack.c.l.b16 %v2286
    %v2620 = vunpack.c.h.b16 %v2286
    %v2621 = vunpack.c.l.b16 %v2287
    %v2622 = vunpack.c.h.b16 %v2287
    %v2623 = vunpack.c.l.b16 %v2288
    %v2624 = vunpack.c.h.b16 %v2288
    %v2625 = vunpack.c.l.b16 %v2289
    %v2626 = vunpack.c.h.b16 %v2289
    %v2627 = vunpack.c.l.b16 %v2290
    %v2628 = vunpack.c.h.b16 %v2290
    %v2629 = vunpack.c.l.b16 %v2291
    %v2630 = vunpack.c.h.b16 %v2291
    %v2631 = vunpack.c.l.b16 %v2292
    %v2632 = vunpack.c.h.b16 %v2292
    %v2633 = vunpack.c.l.b16 %v2293
    %v2634 = vunpack.c.h.b16 %v2293
    %v2635 = vunpack.c.l.b16 %v2294
    %v2636 = vunpack.c.h.b16 %v2294
    %v2637 = vunpack.c.l.b16 %v2295
    %v2638 = vunpack.c.h.b16 %v2295
    %v2639 = vunpack.c.l.b16 %v2296
    %v2640 = vunpack.c.h.b16 %v2296
    %v2641 = vunpack.c.l.b16 %v2297
    %v2642 = vunpack.c.h.b16 %v2297
    %v2643 = vunpack.c.l.b16 %v2298
    %v2644 = vunpack.c.h.b16 %v2298
    %v2645 = vunpack.c.l.b16 %v2299
    %v2646 = vunpack.c.h.b16 %v2299
    %v2647 = vunpack.c.l.b16 %v2300
    %v2648 = vunpack.c.h.b16 %v2300
    %v2649 = vunpack.c.l.b16 %v2301
    %v2650 = vunpack.c.h.b16 %v2301
    %v2651 = vunpack.c.l.b16 %v2302
    %v2652 = vunpack.c.h.b16 %v2302
    %v2653 = vunpack.c.l.b16 %v2303
    %v2654 = vunpack.c.h.b16 %v2303
    %v2655 = vunpack.c.l.b16 %v2304
    %v2656 = vunpack.c.h.b16 %v2304
    %v2657 = vunpack.c.l.b16 %v2305
    %v2658 = vunpack.c.h.b16 %v2305
    %v2659 = vunpack.c.l.b16 %v2306
    %v2660 = vunpack.c.h.b16 %v2306
    %v2661 = vunpack.c.l.b16 %v2307
    %v2662 = vunpack.c.h.b16 %v2307
    %v2663 = vunpack.c.l.b16 %v2308
    %v2664 = vunpack.c.h.b16 %v2308
    %v2665 = vunpack.c.l.b16 %v2309
    %v2666 = vunpack.c.h.b16 %v2309
    %v2667 = vunpack.c.l.b16 %v2310
    %v2668 = vunpack.c.h.b16 %v2310
    %v2669 = vunpack.c.l.b16 %v2311
    %v2670 = vunpack.c.h.b16 %v2311
    %v2671 = vunpack.c.l.b16 %v2312
    %v2672 = vunpack.c.h.b16 %v2312
    %v2673 = vunpack.c.l.b16 %v2313
    %v2674 = vunpack.c.h.b16 %v2313
    %v2675 = vunpack.c.l.b16 %v2314
    %v2676 = vunpack.c.h.b16 %v2314
    %v2677 = vunpack.c.l.b16 %v2315
    %v2678 = vunpack.c.h.b16 %v2315
    %v2679 = vunpack.c.l.b16 %v2316
    %v2680 = vunpack.c.h.b16 %v2316
    %v2681 = vunpack.c.l.b16 %v2317
    %v2682 = vunpack.c.h.b16 %v2317
    %v2683 = vunpack.c.l.b16 %v2318
    %v2684 = vunpack.c.h.b16 %v2318
    %v2685 = vunpack.c.l.b16 %v2319
    %v2686 = vunpack.c.h.b16 %v2319
    %v2687 = vunpack.c.l.b16 %v2320
    %v2688 = vunpack.c.h.b16 %v2320
    %v2689 = vunpack.c.l.b16 %v2321
    %v2690 = vunpack.c.h.b16 %v2321
    %v2691 = vunpack.c.l.b16 %v2322
    %v2692 = vunpack.c.h.b16 %v2322
    %v2693 = vunpack.c.l.b16 %v2323
    %v2694 = vunpack.c.h.b16 %v2323
    %v2695 = vunpack.c.l.b16 %v2324
    %v2696 = vunpack.c.h.b16 %v2324
    %v2697 = vunpack.c.l.b16 %v2325
    %v2698 = vunpack.c.h.b16 %v2325
    %v2699 = vunpack.c.l.b16 %v2326
    %v2700 = vunpack.c.h.b16 %v2326
    %v2701 = vunpack.c.l.b16 %v2327
    %v2702 = vunpack.c.h.b16 %v2327
    %v2703 = vunpack.c.l.b16 %v2328
    %v2704 = vunpack.c.h.b16 %v2328
    %v2705 = vunpack.c.l.b16 %v2329
    %v2706 = vunpack.c.h.b16 %v2329
    %v2707 = vunpack.c.l.b16 %v2330
    %v2708 = vunpack.c.h.b16 %v2330
    %v2709 = vunpack.c.l.b16 %v2331
    %v2710 = vunpack.c.h.b16 %v2331
    %v2711 = vunpack.c.l.b16 %v2332
    %v2712 = vunpack.c.h.b16 %v2332
    %v2713 = vunpack.c.l.b16 %v2333
    %v2714 = vunpack.c.h.b16 %v2333
    %v2715 = vunpack.c.l.b16 %v2334
    %v2716 = vunpack.c.h.b16 %v2334
    %v2717 = vunpack.c.l.b16 %v2335
    %v2718 = vunpack.c.h.b16 %v2335
    %v2719 = vunpack.c.l.b16 %v2336
    %v2720 = vunpack.c.h.b16 %v2336
    %v2721 = vunpack.c.l.b16 %v2337
    %v2722 = vunpack.c.h.b16 %v2337
    %v2723 = vunpack.c.l.b16 %v2338
    %v2724 = vunpack.c.h.b16 %v2338
    %v2725 = vunpack.c.l.b16 %v2339
    %v2726 = vunpack.c.h.b16 %v2339
    %v2727 = vunpack.c.l.b16 %v2340
    %v2728 = vunpack.c.h.b16 %v2340
    %v2729 = vunpack.c.l.b16 %v2341
    %v2730 = vunpack.c.h.b16 %v2341
    %v2731 = vunpack.c.l.b16 %v2342
    %v2732 = vunpack.c.h.b16 %v2342
    %v2733 = vunpack.c.l.b16 %v2343
    %v2734 = vunpack.c.h.b16 %v2343
    %v2735 = vunpack.c.l.b16 %v2344
    %v2736 = vunpack.c.h.b16 %v2344
    %v2737 = vunpack.c.l.b16 %v2345
    %v2738 = vunpack.c.h.b16 %v2345
    %v2739 = vunpack.c.l.b16 %v2346
    %v2740 = vunpack.c.h.b16 %v2346
    %v2741 = vunpack.c.l.b16 %v2347
    %v2742 = vunpack.c.h.b16 %v2347
    %v2743 = vunpack.c.l.b16 %v2348
    %v2744 = vunpack.c.h.b16 %v2348
    %v2745 = vunpack.c.l.b16 %v2349
    %v2746 = vunpack.c.h.b16 %v2349
    %v2747 = vunpack.c.l.b16 %v2350
    %v2748 = vunpack.c.h.b16 %v2350
    %v2749 = vunpack.c.l.b16 %v2351
    %v2750 = vunpack.c.h.b16 %v2351
    %v2751 = vunpack.c.l.b16 %v2352
    %v2752 = vunpack.c.h.b16 %v2352
    %v2753 = vunpack.c.l.b16 %v2353
    %v2754 = vunpack.c.h.b16 %v2353
    %v2755 = vunpack.c.l.b16 %v2354
    %v2756 = vunpack.c.h.b16 %v2354
    %v2757 = vunpack.c.l.b16 %v2355
    %v2758 = vunpack.c.h.b16 %v2355
    %v2759 = vunpack.c.l.b16 %v2356
    %v2760 = vunpack.c.h.b16 %v2356
    %v2761 = vunpack.c.l.b16 %v2357
    %v2762 = vunpack.c.h.b16 %v2357
    %v2763 = vunpack.c.l.b16 %v2358
    %v2764 = vunpack.c.h.b16 %v2358
    %v2765 = vunpack.c.l.b16 %v2359
    %v2766 = vunpack.c.h.b16 %v2359
    %v2767 = vpack.c.b16 %v2515, %v2511
    %v2768 = vpack.c.b16 %v2516, %v2512
    %v2769 = vpack.c.b16 %v2517, %v2513
    %v2770 = vpack.c.b16 %v2518, %v2514
    %v2771 = vpack.c.b16 %v2523, %v2519
    %v2772 = vpack.c.b16 %v2524, %v2520
    %v2773 = vpack.c.b16 %v2525, %v2521
    %v2774 = vpack.c.b16 %v2526, %v2522
    %v2775 = vpack.c.b16 %v2531, %v2527
    %v2776 = vpack.c.b16 %v2532, %v2528
    %v2777 = vpack.c.b16 %v2533, %v2529
    %v2778 = vpack.c.b16 %v2534, %v2530
    %v2779 = vpack.c.b16 %v2539, %v2535
    %v2780 = vpack.c.b16 %v2540, %v2536
    %v2781 = vpack.c.b16 %v2541, %v2537
    %v2782 = vpack.c.b16 %v2542, %v2538
    %v2783 = vpack.c.b16 %v2547, %v2543
    %v2784 = vpack.c.b16 %v2548, %v2544
    %v2785 = vpack.c.b16 %v2549, %v2545
    %v2786 = vpack.c.b16 %v2550, %v2546
    %v2787 = vpack.c.b16 %v2555, %v2551
    %v2788 = vpack.c.b16 %v2556, %v2552
    %v2789 = vpack.c.b16 %v2557, %v2553
    %v2790 = vpack.c.b16 %v2558, %v2554
    %v2791 = vpack.c.b16 %v2563, %v2559
    %v2792 = vpack.c.b16 %v2564, %v2560
    %v2793 = vpack.c.b16 %v2565, %v2561
    %v2794 = vpack.c.b16 %v2566, %v2562
    %v2795 = vpack.c.b16 %v2571, %v2567
    %v2796 = vpack.c.b16 %v2572, %v2568
    %v2797 = vpack.c.b16 %v2573, %v2569
    %v2798 = vpack.c.b16 %v2574, %v2570
    %v2799 = vpack.c.b16 %v2579, %v2575
    %v2800 = vpack.c.b16 %v2580, %v2576
    %v2801 = vpack.c.b16 %v2581, %v2577
    %v2802 = vpack.c.b16 %v2582, %v2578
    %v2803 = vpack.c.b16 %v2587, %v2583
    %v2804 = vpack.c.b16 %v2588, %v2584
    %v2805 = vpack.c.b16 %v2589, %v2585
    %v2806 = vpack.c.b16 %v2590, %v2586
    %v2807 = vpack.c.b16 %v2595, %v2591
    %v2808 = vpack.c.b16 %v2596, %v2592
    %v2809 = vpack.c.b16 %v2597, %v2593
    %v2810 = vpack.c.b16 %v2598, %v2594
    %v2811 = vpack.c.b16 %v2603, %v2599
    %v2812 = vpack.c.b16 %v2604, %v2600
    %v2813 = vpack.c.b16 %v2605, %v2601
    %v2814 = vpack.c.b16 %v2606, %v2602
    %v2815 = vpack.c.b16 %v2611, %v2607
    %v2816 = vpack.c.b16 %v2612, %v2608
    %v2817 = vpack.c.b16 %v2613, %v2609
    %v2818 = vpack.c.b16 %v2614, %v2610
    %v2819 = vpack.c.b16 %v2619, %v2615
    %v2820 = vpack.c.b16 %v2620, %v2616
    %v2821 = vpack.c.b16 %v2621, %v2617
    %v2822 = vpack.c.b16 %v2622, %v2618
    %v2823 = vpack.c.b16 %v2627, %v2623
    %v2824 = vpack.c.b16 %v2628, %v2624
    %v2825 = vpack.c.b16 %v2629, %v2625
    %v2826 = vpack.c.b16 %v2630, %v2626
    %v2827 = vpack.c.b16 %v2635, %v2631
    %v2828 = vpack.c.b16 %v2636, %v2632
    %v2829 = vpack.c.b16 %v2637, %v2633
    %v2830 = vpack.c.b16 %v2638, %v2634
    %v2831 = vpack.c.b16 %v2643, %v2639
    %v2832 = vpack.c.b16 %v2644, %v2640
    %v2833 = vpack.c.b16 %v2645, %v2641
    %v2834 = vpack.c.b16 %v2646, %v2642
    %v2835 = vpack.c.b16 %v2651, %v2647
    %v2836 = vpack.c.b16 %v2652, %v2648
    %v2837 = vpack.c.b16 %v2653, %v2649
    %v2838 = vpack.c.b16 %v2654, %v2650
    %v2839 = vpack.c.b16 %v2659, %v2655
    %v2840 = vpack.c.b16 %v2660, %v2656
    %v2841 = vpack.c.b16 %v2661, %v2657
    %v2842 = vpack.c.b16 %v2662, %v2658
    %v2843 = vpack.c.b16 %v2667, %v2663
    %v2844 = vpack.c.b16 %v2668, %v2664
    %v2845 = vpack.c.b16 %v2669, %v2665
    %v2846 = vpack.c.b16 %v2670, %v2666
    %v2847 = vpack.c.b16 %v2675, %v2671
    %v2848 = vpack.c.b16 %v2676, %v2672
    %v2849 = vpack.c.b16 %v2677, %v2673
    %v2850 = vpack.c.b16 %v2678, %v2674
    %v2851 = vpack.c.b16 %v2683, %v2679
    %v2852 = vpack.c.b16 %v2684, %v2680
    %v2853 = vpack.c.b16 %v2685, %v2681
    %v2854 = vpack.c.b16 %v2686, %v2682
    %v2855 = vpack.c.b16 %v2691, %v2687
    %v2856 = vpack.c.b16 %v2692, %v2688
    %v2857 = vpack.c.b16 %v2693, %v2689
    %v2858 = vpack.c.b16 %v2694, %v2690
    %v2859 = vpack.c.b16 %v2699, %v2695
    %v2860 = vpack.c.b16 %v2700, %v2696
    %v2861 = vpack.c.b16 %v2701, %v2697
    %v2862 = vpack.c.b16 %v2702, %v2698
    %v2863 = vpack.c.b16 %v2707, %v2703
    %v2864 = vpack.c.b16 %v2708, %v2704
    %v2865 = vpack.c.b16 %v2709, %v2705
    %v2866 = vpack.c.b16 %v2710, %v2706
    %v2867 = vpack.c.b16 %v2715, %v2711
    %v2868 = vpack.c.b16 %v2716, %v2712
    %v2869 = vpack.c.b16 %v2717, %v2713
    %v2870 = vpack.c.b16 %v2718, %v2714
    %v2871 = vpack.c.b16 %v2723, %v2719
    %v2872 = vpack.c.b16 %v2724, %v2720
    %v2873 = vpack.c.b16 %v2725, %v2721
    %v2874 = vpack.c.b16 %v2726, %v2722
    %v2875 = vpack.c.b16 %v2731, %v2727
    %v2876 = vpack.c.b16 %v2732, %v2728
    %v2877 = vpack.c.b16 %v2733, %v2729
    %v2878 = vpack.c.b16 %v2734, %v2730
    %v2879 = vpack.c.b16 %v2739, %v2735
    %v2880 = vpack.c.b16 %v2740, %v2736
    %v2881 = vpack.c.b16 %v2741, %v2737
    %v2882 = vpack.c.b16 %v2742, %v2738
    %v2883 = vpack.c.b16 %v2747, %v2743
    %v2884 = vpack.c.b16 %v2748, %v2744
    %v2885 = vpack.c.b16 %v2749, %v2745
    %v2886 = vpack.c.b16 %v2750, %v2746
    %v2887 = vpack.c.b16 %v2755, %v2751
    %v2888 = vpack.c.b16 %v2756, %v2752
    %v2889 = vpack.c.b16 %v2757, %v2753
    %v2890 = vpack.c.b16 %v2758, %v2754
    %v2891 = vpack.c.b16 %v2763, %v2759
    %v2892 = vpack.c.b16 %v2764, %v2760
    %v2893 = vpack.c.b16 %v2765, %v2761
    %v2894 = vpack.c.b16 %v2766, %v2762
    %3023 = vmatprep.subr.bf16.mxu0 %v2796
    %3024 = vmatpush1.bf16.msra.mxu0 %v2795
    %3025 = vmatprep.subr.bf16.mxu0 %v2792
    %3026 = vmatpush1.bf16.msra.mxu0 %v2791
    %3027 = vmatprep.subr.bf16.mxu0 %v2788
    %3028 = vmatpush1.bf16.msra.mxu0 %v2787
    %3029 = vmatprep.subr.bf16.mxu0 %v2784
    %3030 = vmatpush1.bf16.msra.mxu0 %v2783
    %3031 = vmatprep.subr.bf16.mxu0 %v2780
    %3032 = vmatpush1.bf16.msra.mxu0 %v2779
    %3033 = vmatprep.subr.bf16.mxu0 %v2776
    %3034 = vmatpush1.bf16.msra.mxu0 %v2775
    %3035 = vmatprep.subr.bf16.mxu0 %v2772
    %3036 = vmatpush1.bf16.msra.mxu0 %v2771
    %3037 = vmatprep.subr.bf16.mxu0 %v2768
    %3038 = vmatpush1.bf16.msra.mxu0 %v2767
    %3039 = vmatprep.subr.bf16.mxu0 %v2828
    %3040 = vmatpush2.bf16.msra.mxu0 %v2827
    %3041 = vmatprep.subr.bf16.mxu0 %v2824
    %3042 = vmatpush2.bf16.msra.mxu0 %v2823
    %3043 = vmatprep.subr.bf16.mxu0 %v2820
    %3044 = vmatpush2.bf16.msra.mxu0 %v2819
    %3045 = vmatprep.subr.bf16.mxu0 %v2816
    %3046 = vmatpush2.bf16.msra.mxu0 %v2815
    %3047 = vmatprep.subr.bf16.mxu0 %v2812
    %3048 = vmatpush2.bf16.msra.mxu0 %v2811
    %3049 = vmatprep.subr.bf16.mxu0 %v2808
    %3050 = vmatpush2.bf16.msra.mxu0 %v2807
    %3051 = vmatprep.subr.bf16.mxu0 %v2804
    %3052 = vmatpush2.bf16.msra.mxu0 %v2803
    %3053 = vmatprep.subr.bf16.mxu0 %v2800
    %3054 = vmatpush2.bf16.msra.mxu0 %v2799
    %3055 = vmatprep.mubr.bf16.mxu0 %v2228
    %3056 = vmatmul.mubr.bf16.gmra.mxu0 %v2227
    %v3057 = vpop.f32.mrf.mxu0
    %v3058 = vadd.f32 %v2366, %v3057
    %v3059 = vpop.f32.mrf.mxu0
    %v3060 = vadd.f32 %v2370, %v3059
    %v3061 = vpop.f32.mrf.mxu0
    %v3062 = vpop.f32.mrf.mxu0
    %3063 = vdwg.mxu0
    %3064 = vmatprep.subr.bf16.mxu0 %v2860
    %3065 = vmatpush1.bf16.msra.mxu0 %v2859
    %3066 = vmatprep.subr.bf16.mxu0 %v2856
    %3067 = vmatpush1.bf16.msra.mxu0 %v2855
    %3068 = vmatprep.subr.bf16.mxu0 %v2852
    %3069 = vmatpush1.bf16.msra.mxu0 %v2851
    %3070 = vmatprep.subr.bf16.mxu0 %v2848
    %3071 = vmatpush1.bf16.msra.mxu0 %v2847
    %3072 = vmatprep.subr.bf16.mxu0 %v2844
    %3073 = vmatpush1.bf16.msra.mxu0 %v2843
    %3074 = vmatprep.subr.bf16.mxu0 %v2840
    %3075 = vmatpush1.bf16.msra.mxu0 %v2839
    %3076 = vmatprep.subr.bf16.mxu0 %v2836
    %3077 = vmatpush1.bf16.msra.mxu0 %v2835
    %3078 = vmatprep.subr.bf16.mxu0 %v2832
    %3079 = vmatpush1.bf16.msra.mxu0 %v2831
    %3080 = vmatprep.subr.bf16.mxu0 %v2892
    %3081 = vmatpush2.bf16.msra.mxu0 %v2891
    %3082 = vmatprep.subr.bf16.mxu0 %v2888
    %3083 = vmatpush2.bf16.msra.mxu0 %v2887
    %3084 = vmatprep.subr.bf16.mxu0 %v2884
    %3085 = vmatpush2.bf16.msra.mxu0 %v2883
    %3086 = vmatprep.subr.bf16.mxu0 %v2880
    %3087 = vmatpush2.bf16.msra.mxu0 %v2879
    %3088 = vmatprep.subr.bf16.mxu0 %v2876
    %3089 = vmatpush2.bf16.msra.mxu0 %v2875
    %3090 = vmatprep.subr.bf16.mxu0 %v2872
    %3091 = vmatpush2.bf16.msra.mxu0 %v2871
    %3092 = vmatprep.subr.bf16.mxu0 %v2868
    %3093 = vmatpush2.bf16.msra.mxu0 %v2867
    %3094 = vmatprep.subr.bf16.mxu0 %v2864
    %3095 = vmatpush2.bf16.msra.mxu0 %v2863
    %3096 = vmatprep.mubr.bf16.mxu0 %v2230
    %3097 = vmatmul.mubr.bf16.gmra.mxu0 %v2229
    %v3098 = vpop.f32.mrf.mxu0
    %v3099 = vadd.f32 %v3058, %v3098
    %v3100 = vpop.f32.mrf.mxu0
    %v3101 = vadd.f32 %v3060, %v3100
    %v3102 = vpop.f32.mrf.mxu0
    %v3103 = vpop.f32.mrf.mxu0
    %3104 = vdwg.mxu0
    %3105 = vmatprep.subr.bf16.mxu0 %v2798
    %3106 = vmatpush1.bf16.msra.mxu0 %v2797
    %3107 = vmatprep.subr.bf16.mxu0 %v2794
    %3108 = vmatpush1.bf16.msra.mxu0 %v2793
    %3109 = vmatprep.subr.bf16.mxu0 %v2790
    %3110 = vmatpush1.bf16.msra.mxu0 %v2789
    %3111 = vmatprep.subr.bf16.mxu0 %v2786
    %3112 = vmatpush1.bf16.msra.mxu0 %v2785
    %3113 = vmatprep.subr.bf16.mxu0 %v2782
    %3114 = vmatpush1.bf16.msra.mxu0 %v2781
    %3115 = vmatprep.subr.bf16.mxu0 %v2778
    %3116 = vmatpush1.bf16.msra.mxu0 %v2777
    %3117 = vmatprep.subr.bf16.mxu0 %v2774
    %3118 = vmatpush1.bf16.msra.mxu0 %v2773
    %3119 = vmatprep.subr.bf16.mxu0 %v2770
    %3120 = vmatpush1.bf16.msra.mxu0 %v2769
    %3121 = vmatprep.subr.bf16.mxu0 %v2830
    %3122 = vmatpush2.bf16.msra.mxu0 %v2829
    %3123 = vmatprep.subr.bf16.mxu0 %v2826
    %3124 = vmatpush2.bf16.msra.mxu0 %v2825
    %3125 = vmatprep.subr.bf16.mxu0 %v2822
    %3126 = vmatpush2.bf16.msra.mxu0 %v2821
    %3127 = vmatprep.subr.bf16.mxu0 %v2818
    %3128 = vmatpush2.bf16.msra.mxu0 %v2817
    %3129 = vmatprep.subr.bf16.mxu0 %v2814
    %3130 = vmatpush2.bf16.msra.mxu0 %v2813
    %3131 = vmatprep.subr.bf16.mxu0 %v2810
    %3132 = vmatpush2.bf16.msra.mxu0 %v2809
    %3133 = vmatprep.subr.bf16.mxu0 %v2806
    %3134 = vmatpush2.bf16.msra.mxu0 %v2805
    %3135 = vmatprep.subr.bf16.mxu0 %v2802
    %3136 = vmatpush2.bf16.msra.mxu0 %v2801
    %3137 = vmatprep.mubr.bf16.mxu0 %v2228
    %3138 = vmatmul.mubr.bf16.gmra.mxu0 %v2227
    %v3139 = vpop.f32.mrf.mxu0
    %v3140 = vadd.f32 %v2374, %v3139
    %v3141 = vpop.f32.mrf.mxu0
    %v3142 = vadd.f32 %v2378, %v3141
    %v3143 = vpop.f32.mrf.mxu0
    %v3144 = vpop.f32.mrf.mxu0
    %3145 = vdwg.mxu0
    %3146 = vmatprep.subr.bf16.mxu0 %v2862
    %3147 = vmatpush1.bf16.msra.mxu0 %v2861
    %3148 = vmatprep.subr.bf16.mxu0 %v2858
    %3149 = vmatpush1.bf16.msra.mxu0 %v2857
    %3150 = vmatprep.subr.bf16.mxu0 %v2854
    %3151 = vmatpush1.bf16.msra.mxu0 %v2853
    %3152 = vmatprep.subr.bf16.mxu0 %v2850
    %3153 = vmatpush1.bf16.msra.mxu0 %v2849
    %3154 = vmatprep.subr.bf16.mxu0 %v2846
    %3155 = vmatpush1.bf16.msra.mxu0 %v2845
    %3156 = vmatprep.subr.bf16.mxu0 %v2842
    %3157 = vmatpush1.bf16.msra.mxu0 %v2841
    %3158 = vmatprep.subr.bf16.mxu0 %v2838
    %3159 = vmatpush1.bf16.msra.mxu0 %v2837
    %3160 = vmatprep.subr.bf16.mxu0 %v2834
    %3161 = vmatpush1.bf16.msra.mxu0 %v2833
    %3162 = vmatprep.subr.bf16.mxu0 %v2894
    %3163 = vmatpush2.bf16.msra.mxu0 %v2893
    %3164 = vmatprep.subr.bf16.mxu0 %v2890
    %3165 = vmatpush2.bf16.msra.mxu0 %v2889
    %3166 = vmatprep.subr.bf16.mxu0 %v2886
    %3167 = vmatpush2.bf16.msra.mxu0 %v2885
    %3168 = vmatprep.subr.bf16.mxu0 %v2882
    %3169 = vmatpush2.bf16.msra.mxu0 %v2881
    %3170 = vmatprep.subr.bf16.mxu0 %v2878
    %3171 = vmatpush2.bf16.msra.mxu0 %v2877
    %3172 = vmatprep.subr.bf16.mxu0 %v2874
    %3173 = vmatpush2.bf16.msra.mxu0 %v2873
    %3174 = vmatprep.subr.bf16.mxu0 %v2870
    %3175 = vmatpush2.bf16.msra.mxu0 %v2869
    %3176 = vmatprep.subr.bf16.mxu0 %v2866
    %3177 = vmatpush2.bf16.msra.mxu0 %v2865
    %3178 = vmatprep.mubr.bf16.mxu0 %v2230
    %3179 = vmatmul.mubr.bf16.gmra.mxu0 %v2229
    %v3180 = vpop.f32.mrf.mxu0
    %v3181 = vadd.f32 %v3140, %v3180
    %v3182 = vpop.f32.mrf.mxu0
    %v3183 = vadd.f32 %v3142, %v3182
    %v3184 = vpop.f32.mrf.mxu0
    %v3185 = vpop.f32.mrf.mxu0
    %3186 = vdwg.mxu0
    %v3187 = vmax.f32 %v3099, 0.0
    %v3188 = vmax.f32 %v3101, 0.0
    %v3189 = vmax.f32 %v3181, 0.0
    %v3190 = vmax.f32 %v3183, 0.0
    %v3191 = vpack.c.bf16 %v3187, %v3187
    %v3192 = vpack.c.bf16 %v3188, %v3188
    %v3193 = vpack.c.bf16 %v3189, %v3189
    %v3194 = vpack.c.bf16 %v3190, %v3190
    %v3195 = vld [vmem:[#allocation8] sm:$0xff]
    %v3196 = vld [vmem:[#allocation8 + $0x8] sm:$0xff]
    %v3197 = vld [vmem:[#allocation8 + $0x10] sm:$0xff]
    %v3198 = vld [vmem:[#allocation8 + $0x18] sm:$0xff]
    %v3199 = vld [vmem:[#allocation8 + $0x20] sm:$0xff]
    %v3200 = vld [vmem:[#allocation8 + $0x28] sm:$0xff]
    %v3201 = vld [vmem:[#allocation8 + $0x30] sm:$0xff]
    %v3202 = vld [vmem:[#allocation8 + $0x38] sm:$0xff]
    %v3203 = vld [vmem:[#allocation8 + $0x40] sm:$0xff]
    %v3204 = vld [vmem:[#allocation8 + $0x48] sm:$0xff]
    %v3205 = vld [vmem:[#allocation8 + $0x50] sm:$0xff]
    %v3206 = vld [vmem:[#allocation8 + $0x58] sm:$0xff]
    %v3207 = vld [vmem:[#allocation8 + $0x60] sm:$0xff]
    %v3208 = vld [vmem:[#allocation8 + $0x68] sm:$0xff]
    %v3209 = vld [vmem:[#allocation8 + $0x70] sm:$0xff]
    %v3210 = vld [vmem:[#allocation8 + $0x78] sm:$0xff]
    %v3211 = vld [vmem:[#allocation8 + $0x80] sm:$0xff]
    %v3212 = vld [vmem:[#allocation8 + $0x88] sm:$0xff]
    %v3213 = vld [vmem:[#allocation8 + $0x90] sm:$0xff]
    %v3214 = vld [vmem:[#allocation8 + $0x98] sm:$0xff]
    %v3215 = vld [vmem:[#allocation8 + $0xa0] sm:$0xff]
    %v3216 = vld [vmem:[#allocation8 + $0xa8] sm:$0xff]
    %v3217 = vld [vmem:[#allocation8 + $0xb0] sm:$0xff]
    %v3218 = vld [vmem:[#allocation8 + $0xb8] sm:$0xff]
    %v3219 = vld [vmem:[#allocation8 + $0xc0] sm:$0xff]
    %v3220 = vld [vmem:[#allocation8 + $0xc8] sm:$0xff]
    %v3221 = vld [vmem:[#allocation8 + $0xd0] sm:$0xff]
    %v3222 = vld [vmem:[#allocation8 + $0xd8] sm:$0xff]
    %v3223 = vld [vmem:[#allocation8 + $0xe0] sm:$0xff]
    %v3224 = vld [vmem:[#allocation8 + $0xe8] sm:$0xff]
    %v3225 = vld [vmem:[#allocation8 + $0xf0] sm:$0xff]
    %v3226 = vld [vmem:[#allocation8 + $0xf8] sm:$0xff]
    %v3227 = vld [vmem:[#allocation8 + $0x100] sm:$0xff]
    %v3228 = vld [vmem:[#allocation8 + $0x108] sm:$0xff]
    %v3229 = vld [vmem:[#allocation8 + $0x110] sm:$0xff]
    %v3230 = vld [vmem:[#allocation8 + $0x118] sm:$0xff]
    %v3231 = vld [vmem:[#allocation8 + $0x120] sm:$0xff]
    %v3232 = vld [vmem:[#allocation8 + $0x128] sm:$0xff]
    %v3233 = vld [vmem:[#allocation8 + $0x130] sm:$0xff]
    %v3234 = vld [vmem:[#allocation8 + $0x138] sm:$0xff]
    %v3235 = vld [vmem:[#allocation8 + $0x140] sm:$0xff]
    %v3236 = vld [vmem:[#allocation8 + $0x148] sm:$0xff]
    %v3237 = vld [vmem:[#allocation8 + $0x150] sm:$0xff]
    %v3238 = vld [vmem:[#allocation8 + $0x158] sm:$0xff]
    %v3239 = vld [vmem:[#allocation8 + $0x160] sm:$0xff]
    %v3240 = vld [vmem:[#allocation8 + $0x168] sm:$0xff]
    %v3241 = vld [vmem:[#allocation8 + $0x170] sm:$0xff]
    %v3242 = vld [vmem:[#allocation8 + $0x178] sm:$0xff]
    %v3243 = vld [vmem:[#allocation8 + $0x180] sm:$0xff]
    %v3244 = vld [vmem:[#allocation8 + $0x188] sm:$0xff]
    %v3245 = vld [vmem:[#allocation8 + $0x190] sm:$0xff]
    %v3246 = vld [vmem:[#allocation8 + $0x198] sm:$0xff]
    %v3247 = vld [vmem:[#allocation8 + $0x1a0] sm:$0xff]
    %v3248 = vld [vmem:[#allocation8 + $0x1a8] sm:$0xff]
    %v3249 = vld [vmem:[#allocation8 + $0x1b0] sm:$0xff]
    %v3250 = vld [vmem:[#allocation8 + $0x1b8] sm:$0xff]
    %v3251 = vld [vmem:[#allocation8 + $0x1c0] sm:$0xff]
    %v3252 = vld [vmem:[#allocation8 + $0x1c8] sm:$0xff]
    %v3253 = vld [vmem:[#allocation8 + $0x1d0] sm:$0xff]
    %v3254 = vld [vmem:[#allocation8 + $0x1d8] sm:$0xff]
    %v3255 = vld [vmem:[#allocation8 + $0x1e0] sm:$0xff]
    %v3256 = vld [vmem:[#allocation8 + $0x1e8] sm:$0xff]
    %v3257 = vld [vmem:[#allocation8 + $0x1f0] sm:$0xff]
    %v3258 = vld [vmem:[#allocation8 + $0x1f8] sm:$0xff]
    %s3259 = scalar_lea.vmem [#allocation14], 4
    %v3260 = vld [vmem:[%s3259] ss:$8 sm:$0x3]
    %v3262 = vlaneseq
    %v3263 = vshrl.u32 %v3262, 7
    %v3264 = vsub.s32 0, %v3263
    %v3265 = vrot.slane %v3260, %v3264
    %v3266 = vlaneseq
    %v3267 = vshrl.u32 %v3266, 7
    %v3268 = vsub.s32 1, %v3267
    %v3269 = vrot.slane %v3260, %v3268
    %v3336 = vunpack.c.l.b16 %v3195
    %v3337 = vunpack.c.h.b16 %v3195
    %v3338 = vunpack.c.l.b16 %v3196
    %v3339 = vunpack.c.h.b16 %v3196
    %v3340 = vunpack.c.l.b16 %v3197
    %v3341 = vunpack.c.h.b16 %v3197
    %v3342 = vunpack.c.l.b16 %v3198
    %v3343 = vunpack.c.h.b16 %v3198
    %v3344 = vunpack.c.l.b16 %v3199
    %v3345 = vunpack.c.h.b16 %v3199
    %v3346 = vunpack.c.l.b16 %v3200
    %v3347 = vunpack.c.h.b16 %v3200
    %v3348 = vunpack.c.l.b16 %v3201
    %v3349 = vunpack.c.h.b16 %v3201
    %v3350 = vunpack.c.l.b16 %v3202
    %v3351 = vunpack.c.h.b16 %v3202
    %v3352 = vunpack.c.l.b16 %v3203
    %v3353 = vunpack.c.h.b16 %v3203
    %v3354 = vunpack.c.l.b16 %v3204
    %v3355 = vunpack.c.h.b16 %v3204
    %v3356 = vunpack.c.l.b16 %v3205
    %v3357 = vunpack.c.h.b16 %v3205
    %v3358 = vunpack.c.l.b16 %v3206
    %v3359 = vunpack.c.h.b16 %v3206
    %v3360 = vunpack.c.l.b16 %v3207
    %v3361 = vunpack.c.h.b16 %v3207
    %v3362 = vunpack.c.l.b16 %v3208
    %v3363 = vunpack.c.h.b16 %v3208
    %v3364 = vunpack.c.l.b16 %v3209
    %v3365 = vunpack.c.h.b16 %v3209
    %v3366 = vunpack.c.l.b16 %v3210
    %v3367 = vunpack.c.h.b16 %v3210
    %v3368 = vunpack.c.l.b16 %v3211
    %v3369 = vunpack.c.h.b16 %v3211
    %v3370 = vunpack.c.l.b16 %v3212
    %v3371 = vunpack.c.h.b16 %v3212
    %v3372 = vunpack.c.l.b16 %v3213
    %v3373 = vunpack.c.h.b16 %v3213
    %v3374 = vunpack.c.l.b16 %v3214
    %v3375 = vunpack.c.h.b16 %v3214
    %v3376 = vunpack.c.l.b16 %v3215
    %v3377 = vunpack.c.h.b16 %v3215
    %v3378 = vunpack.c.l.b16 %v3216
    %v3379 = vunpack.c.h.b16 %v3216
    %v3380 = vunpack.c.l.b16 %v3217
    %v3381 = vunpack.c.h.b16 %v3217
    %v3382 = vunpack.c.l.b16 %v3218
    %v3383 = vunpack.c.h.b16 %v3218
    %v3384 = vunpack.c.l.b16 %v3219
    %v3385 = vunpack.c.h.b16 %v3219
    %v3386 = vunpack.c.l.b16 %v3220
    %v3387 = vunpack.c.h.b16 %v3220
    %v3388 = vunpack.c.l.b16 %v3221
    %v3389 = vunpack.c.h.b16 %v3221
    %v3390 = vunpack.c.l.b16 %v3222
    %v3391 = vunpack.c.h.b16 %v3222
    %v3392 = vunpack.c.l.b16 %v3223
    %v3393 = vunpack.c.h.b16 %v3223
    %v3394 = vunpack.c.l.b16 %v3224
    %v3395 = vunpack.c.h.b16 %v3224
    %v3396 = vunpack.c.l.b16 %v3225
    %v3397 = vunpack.c.h.b16 %v3225
    %v3398 = vunpack.c.l.b16 %v3226
    %v3399 = vunpack.c.h.b16 %v3226
    %v3400 = vunpack.c.l.b16 %v3227
    %v3401 = vunpack.c.h.b16 %v3227
    %v3402 = vunpack.c.l.b16 %v3228
    %v3403 = vunpack.c.h.b16 %v3228
    %v3404 = vunpack.c.l.b16 %v3229
    %v3405 = vunpack.c.h.b16 %v3229
    %v3406 = vunpack.c.l.b16 %v3230
    %v3407 = vunpack.c.h.b16 %v3230
    %v3408 = vunpack.c.l.b16 %v3231
    %v3409 = vunpack.c.h.b16 %v3231
    %v3410 = vunpack.c.l.b16 %v3232
    %v3411 = vunpack.c.h.b16 %v3232
    %v3412 = vunpack.c.l.b16 %v3233
    %v3413 = vunpack.c.h.b16 %v3233
    %v3414 = vunpack.c.l.b16 %v3234
    %v3415 = vunpack.c.h.b16 %v3234
    %v3416 = vunpack.c.l.b16 %v3235
    %v3417 = vunpack.c.h.b16 %v3235
    %v3418 = vunpack.c.l.b16 %v3236
    %v3419 = vunpack.c.h.b16 %v3236
    %v3420 = vunpack.c.l.b16 %v3237
    %v3421 = vunpack.c.h.b16 %v3237
    %v3422 = vunpack.c.l.b16 %v3238
    %v3423 = vunpack.c.h.b16 %v3238
    %v3424 = vunpack.c.l.b16 %v3239
    %v3425 = vunpack.c.h.b16 %v3239
    %v3426 = vunpack.c.l.b16 %v3240
    %v3427 = vunpack.c.h.b16 %v3240
    %v3428 = vunpack.c.l.b16 %v3241
    %v3429 = vunpack.c.h.b16 %v3241
    %v3430 = vunpack.c.l.b16 %v3242
    %v3431 = vunpack.c.h.b16 %v3242
    %v3432 = vunpack.c.l.b16 %v3243
    %v3433 = vunpack.c.h.b16 %v3243
    %v3434 = vunpack.c.l.b16 %v3244
    %v3435 = vunpack.c.h.b16 %v3244
    %v3436 = vunpack.c.l.b16 %v3245
    %v3437 = vunpack.c.h.b16 %v3245
    %v3438 = vunpack.c.l.b16 %v3246
    %v3439 = vunpack.c.h.b16 %v3246
    %v3440 = vunpack.c.l.b16 %v3247
    %v3441 = vunpack.c.h.b16 %v3247
    %v3442 = vunpack.c.l.b16 %v3248
    %v3443 = vunpack.c.h.b16 %v3248
    %v3444 = vunpack.c.l.b16 %v3249
    %v3445 = vunpack.c.h.b16 %v3249
    %v3446 = vunpack.c.l.b16 %v3250
    %v3447 = vunpack.c.h.b16 %v3250
    %v3448 = vunpack.c.l.b16 %v3251
    %v3449 = vunpack.c.h.b16 %v3251
    %v3450 = vunpack.c.l.b16 %v3252
    %v3451 = vunpack.c.h.b16 %v3252
    %v3452 = vunpack.c.l.b16 %v3253
    %v3453 = vunpack.c.h.b16 %v3253
    %v3454 = vunpack.c.l.b16 %v3254
    %v3455 = vunpack.c.h.b16 %v3254
    %v3456 = vunpack.c.l.b16 %v3255
    %v3457 = vunpack.c.h.b16 %v3255
    %v3458 = vunpack.c.l.b16 %v3256
    %v3459 = vunpack.c.h.b16 %v3256
    %v3460 = vunpack.c.l.b16 %v3257
    %v3461 = vunpack.c.h.b16 %v3257
    %v3462 = vunpack.c.l.b16 %v3258
    %v3463 = vunpack.c.h.b16 %v3258
    %v3464 = vpack.c.b16 %v3338, %v3336
    %v3465 = vpack.c.b16 %v3339, %v3337
    %v3466 = vpack.c.b16 %v3342, %v3340
    %v3467 = vpack.c.b16 %v3343, %v3341
    %v3468 = vpack.c.b16 %v3346, %v3344
    %v3469 = vpack.c.b16 %v3347, %v3345
    %v3470 = vpack.c.b16 %v3350, %v3348
    %v3471 = vpack.c.b16 %v3351, %v3349
    %v3472 = vpack.c.b16 %v3354, %v3352
    %v3473 = vpack.c.b16 %v3355, %v3353
    %v3474 = vpack.c.b16 %v3358, %v3356
    %v3475 = vpack.c.b16 %v3359, %v3357
    %v3476 = vpack.c.b16 %v3362, %v3360
    %v3477 = vpack.c.b16 %v3363, %v3361
    %v3478 = vpack.c.b16 %v3366, %v3364
    %v3479 = vpack.c.b16 %v3367, %v3365
    %v3480 = vpack.c.b16 %v3370, %v3368
    %v3481 = vpack.c.b16 %v3371, %v3369
    %v3482 = vpack.c.b16 %v3374, %v3372
    %v3483 = vpack.c.b16 %v3375, %v3373
    %v3484 = vpack.c.b16 %v3378, %v3376
    %v3485 = vpack.c.b16 %v3379, %v3377
    %v3486 = vpack.c.b16 %v3382, %v3380
    %v3487 = vpack.c.b16 %v3383, %v3381
    %v3488 = vpack.c.b16 %v3386, %v3384
    %v3489 = vpack.c.b16 %v3387, %v3385
    %v3490 = vpack.c.b16 %v3390, %v3388
    %v3491 = vpack.c.b16 %v3391, %v3389
    %v3492 = vpack.c.b16 %v3394, %v3392
    %v3493 = vpack.c.b16 %v3395, %v3393
    %v3494 = vpack.c.b16 %v3398, %v3396
    %v3495 = vpack.c.b16 %v3399, %v3397
    %v3496 = vpack.c.b16 %v3402, %v3400
    %v3497 = vpack.c.b16 %v3403, %v3401
    %v3498 = vpack.c.b16 %v3406, %v3404
    %v3499 = vpack.c.b16 %v3407, %v3405
    %v3500 = vpack.c.b16 %v3410, %v3408
    %v3501 = vpack.c.b16 %v3411, %v3409
    %v3502 = vpack.c.b16 %v3414, %v3412
    %v3503 = vpack.c.b16 %v3415, %v3413
    %v3504 = vpack.c.b16 %v3418, %v3416
    %v3505 = vpack.c.b16 %v3419, %v3417
    %v3506 = vpack.c.b16 %v3422, %v3420
    %v3507 = vpack.c.b16 %v3423, %v3421
    %v3508 = vpack.c.b16 %v3426, %v3424
    %v3509 = vpack.c.b16 %v3427, %v3425
    %v3510 = vpack.c.b16 %v3430, %v3428
    %v3511 = vpack.c.b16 %v3431, %v3429
    %v3512 = vpack.c.b16 %v3434, %v3432
    %v3513 = vpack.c.b16 %v3435, %v3433
    %v3514 = vpack.c.b16 %v3438, %v3436
    %v3515 = vpack.c.b16 %v3439, %v3437
    %v3516 = vpack.c.b16 %v3442, %v3440
    %v3517 = vpack.c.b16 %v3443, %v3441
    %v3518 = vpack.c.b16 %v3446, %v3444
    %v3519 = vpack.c.b16 %v3447, %v3445
    %v3520 = vpack.c.b16 %v3450, %v3448
    %v3521 = vpack.c.b16 %v3451, %v3449
    %v3522 = vpack.c.b16 %v3454, %v3452
    %v3523 = vpack.c.b16 %v3455, %v3453
    %v3524 = vpack.c.b16 %v3458, %v3456
    %v3525 = vpack.c.b16 %v3459, %v3457
    %v3526 = vpack.c.b16 %v3462, %v3460
    %v3527 = vpack.c.b16 %v3463, %v3461
    %3592 = vmatprep.subr.bf16.mxu0 %v3479
    %3593 = vmatpush1.bf16.msra.mxu0 %v3478
    %3594 = vmatprep.subr.bf16.mxu0 %v3477
    %3595 = vmatpush1.bf16.msra.mxu0 %v3476
    %3596 = vmatprep.subr.bf16.mxu0 %v3475
    %3597 = vmatpush1.bf16.msra.mxu0 %v3474
    %3598 = vmatprep.subr.bf16.mxu0 %v3473
    %3599 = vmatpush1.bf16.msra.mxu0 %v3472
    %3600 = vmatprep.subr.bf16.mxu0 %v3471
    %3601 = vmatpush1.bf16.msra.mxu0 %v3470
    %3602 = vmatprep.subr.bf16.mxu0 %v3469
    %3603 = vmatpush1.bf16.msra.mxu0 %v3468
    %3604 = vmatprep.subr.bf16.mxu0 %v3467
    %3605 = vmatpush1.bf16.msra.mxu0 %v3466
    %3606 = vmatprep.subr.bf16.mxu0 %v3465
    %3607 = vmatpush1.bf16.msra.mxu0 %v3464
    %3608 = vmatprep.subr.bf16.mxu0 %v3495
    %3609 = vmatpush2.bf16.msra.mxu0 %v3494
    %3610 = vmatprep.subr.bf16.mxu0 %v3493
    %3611 = vmatpush2.bf16.msra.mxu0 %v3492
    %3612 = vmatprep.subr.bf16.mxu0 %v3491
    %3613 = vmatpush2.bf16.msra.mxu0 %v3490
    %3614 = vmatprep.subr.bf16.mxu0 %v3489
    %3615 = vmatpush2.bf16.msra.mxu0 %v3488
    %3616 = vmatprep.subr.bf16.mxu0 %v3487
    %3617 = vmatpush2.bf16.msra.mxu0 %v3486
    %3618 = vmatprep.subr.bf16.mxu0 %v3485
    %3619 = vmatpush2.bf16.msra.mxu0 %v3484
    %3620 = vmatprep.subr.bf16.mxu0 %v3483
    %3621 = vmatpush2.bf16.msra.mxu0 %v3482
    %3622 = vmatprep.subr.bf16.mxu0 %v3481
    %3623 = vmatpush2.bf16.msra.mxu0 %v3480
    %3624 = vmatprep.mubr.bf16.mxu0 %v3192
    %3625 = vmatmul.mubr.bf16.gmra.mxu0 %v3191
    %v3626 = vpop.f32.mrf.mxu0
    %v3627 = vadd.f32 %v3265, %v3626
    %v3628 = vpop.f32.mrf.mxu0
    %v3629 = vadd.f32 %v3269, %v3628
    %v3630 = vpop.f32.mrf.mxu0
    %v3631 = vpop.f32.mrf.mxu0
    %3632 = vdwg.mxu0
    %3633 = vmatprep.subr.bf16.mxu0 %v3511
    %3634 = vmatpush1.bf16.msra.mxu0 %v3510
    %3635 = vmatprep.subr.bf16.mxu0 %v3509
    %3636 = vmatpush1.bf16.msra.mxu0 %v3508
    %3637 = vmatprep.subr.bf16.mxu0 %v3507
    %3638 = vmatpush1.bf16.msra.mxu0 %v3506
    %3639 = vmatprep.subr.bf16.mxu0 %v3505
    %3640 = vmatpush1.bf16.msra.mxu0 %v3504
    %3641 = vmatprep.subr.bf16.mxu0 %v3503
    %3642 = vmatpush1.bf16.msra.mxu0 %v3502
    %3643 = vmatprep.subr.bf16.mxu0 %v3501
    %3644 = vmatpush1.bf16.msra.mxu0 %v3500
    %3645 = vmatprep.subr.bf16.mxu0 %v3499
    %3646 = vmatpush1.bf16.msra.mxu0 %v3498
    %3647 = vmatprep.subr.bf16.mxu0 %v3497
    %3648 = vmatpush1.bf16.msra.mxu0 %v3496
    %3649 = vmatprep.subr.bf16.mxu0 %v3527
    %3650 = vmatpush2.bf16.msra.mxu0 %v3526
    %3651 = vmatprep.subr.bf16.mxu0 %v3525
    %3652 = vmatpush2.bf16.msra.mxu0 %v3524
    %3653 = vmatprep.subr.bf16.mxu0 %v3523
    %3654 = vmatpush2.bf16.msra.mxu0 %v3522
    %3655 = vmatprep.subr.bf16.mxu0 %v3521
    %3656 = vmatpush2.bf16.msra.mxu0 %v3520
    %3657 = vmatprep.subr.bf16.mxu0 %v3519
    %3658 = vmatpush2.bf16.msra.mxu0 %v3518
    %3659 = vmatprep.subr.bf16.mxu0 %v3517
    %3660 = vmatpush2.bf16.msra.mxu0 %v3516
    %3661 = vmatprep.subr.bf16.mxu0 %v3515
    %3662 = vmatpush2.bf16.msra.mxu0 %v3514
    %3663 = vmatprep.subr.bf16.mxu0 %v3513
    %3664 = vmatpush2.bf16.msra.mxu0 %v3512
    %3665 = vmatprep.mubr.bf16.mxu0 %v3194
    %3666 = vmatmul.mubr.bf16.gmra.mxu0 %v3193
    %v3667 = vpop.f32.mrf.mxu0
    %v3668 = vadd.f32 %v3627, %v3667
    %v3669 = vpop.f32.mrf.mxu0
    %v3670 = vadd.f32 %v3629, %v3669
    %v3671 = vpop.f32.mrf.mxu0
    %v3672 = vpop.f32.mrf.mxu0
    %3673 = vdwg.mxu0
    %v3674 = vpack.c.bf16 %v3668, %v3668
    %v3675 = vpack.c.bf16 %v3670, %v3670
    %v3676 = vld [vmem:[#allocation10] sm:$0xff]
    %v3677 = vld [vmem:[#allocation10 + $0x8] sm:$0xff]
    %v3678 = vld [vmem:[#allocation10 + $0x10] sm:$0xff]
    %v3679 = vld [vmem:[#allocation10 + $0x18] sm:$0xff]
    %v3680 = vld [vmem:[#allocation10 + $0x20] sm:$0xff]
    %v3681 = vld [vmem:[#allocation10 + $0x28] sm:$0xff]
    %v3682 = vld [vmem:[#allocation10 + $0x30] sm:$0xff]
    %v3683 = vld [vmem:[#allocation10 + $0x38] sm:$0xff]
    %v3684 = vld [vmem:[#allocation10 + $0x40] sm:$0xff]
    %v3685 = vld [vmem:[#allocation10 + $0x48] sm:$0xff]
    %v3686 = vld [vmem:[#allocation10 + $0x50] sm:$0xff]
    %v3687 = vld [vmem:[#allocation10 + $0x58] sm:$0xff]
    %v3688 = vld [vmem:[#allocation10 + $0x60] sm:$0xff]
    %v3689 = vld [vmem:[#allocation10 + $0x68] sm:$0xff]
    %v3690 = vld [vmem:[#allocation10 + $0x70] sm:$0xff]
    %v3691 = vld [vmem:[#allocation10 + $0x78] sm:$0xff]
    %v3692 = vld [vmem:[#allocation10 + $0x80] sm:$0xff]
    %v3693 = vld [vmem:[#allocation10 + $0x88] sm:$0xff]
    %v3694 = vld [vmem:[#allocation10 + $0x90] sm:$0xff]
    %v3695 = vld [vmem:[#allocation10 + $0x98] sm:$0xff]
    %v3696 = vld [vmem:[#allocation10 + $0xa0] sm:$0xff]
    %v3697 = vld [vmem:[#allocation10 + $0xa8] sm:$0xff]
    %v3698 = vld [vmem:[#allocation10 + $0xb0] sm:$0xff]
    %v3699 = vld [vmem:[#allocation10 + $0xb8] sm:$0xff]
    %v3700 = vld [vmem:[#allocation10 + $0xc0] sm:$0xff]
    %v3701 = vld [vmem:[#allocation10 + $0xc8] sm:$0xff]
    %v3702 = vld [vmem:[#allocation10 + $0xd0] sm:$0xff]
    %v3703 = vld [vmem:[#allocation10 + $0xd8] sm:$0xff]
    %v3704 = vld [vmem:[#allocation10 + $0xe0] sm:$0xff]
    %v3705 = vld [vmem:[#allocation10 + $0xe8] sm:$0xff]
    %v3706 = vld [vmem:[#allocation10 + $0xf0] sm:$0xff]
    %v3707 = vld [vmem:[#allocation10 + $0xf8] sm:$0xff]
    %v3708 = vld [vmem:[#allocation10 + $0x100] sm:$0xff]
    %v3709 = vld [vmem:[#allocation10 + $0x108] sm:$0xff]
    %v3710 = vld [vmem:[#allocation10 + $0x110] sm:$0xff]
    %v3711 = vld [vmem:[#allocation10 + $0x118] sm:$0xff]
    %v3712 = vld [vmem:[#allocation10 + $0x120] sm:$0xff]
    %v3713 = vld [vmem:[#allocation10 + $0x128] sm:$0xff]
    %v3714 = vld [vmem:[#allocation10 + $0x130] sm:$0xff]
    %v3715 = vld [vmem:[#allocation10 + $0x138] sm:$0xff]
    %v3716 = vld [vmem:[#allocation10 + $0x140] sm:$0xff]
    %v3717 = vld [vmem:[#allocation10 + $0x148] sm:$0xff]
    %v3718 = vld [vmem:[#allocation10 + $0x150] sm:$0xff]
    %v3719 = vld [vmem:[#allocation10 + $0x158] sm:$0xff]
    %v3720 = vld [vmem:[#allocation10 + $0x160] sm:$0xff]
    %v3721 = vld [vmem:[#allocation10 + $0x168] sm:$0xff]
    %v3722 = vld [vmem:[#allocation10 + $0x170] sm:$0xff]
    %v3723 = vld [vmem:[#allocation10 + $0x178] sm:$0xff]
    %v3724 = vld [vmem:[#allocation10 + $0x180] sm:$0xff]
    %v3725 = vld [vmem:[#allocation10 + $0x188] sm:$0xff]
    %v3726 = vld [vmem:[#allocation10 + $0x190] sm:$0xff]
    %v3727 = vld [vmem:[#allocation10 + $0x198] sm:$0xff]
    %v3728 = vld [vmem:[#allocation10 + $0x1a0] sm:$0xff]
    %v3729 = vld [vmem:[#allocation10 + $0x1a8] sm:$0xff]
    %v3730 = vld [vmem:[#allocation10 + $0x1b0] sm:$0xff]
    %v3731 = vld [vmem:[#allocation10 + $0x1b8] sm:$0xff]
    %v3732 = vld [vmem:[#allocation10 + $0x1c0] sm:$0xff]
    %v3733 = vld [vmem:[#allocation10 + $0x1c8] sm:$0xff]
    %v3734 = vld [vmem:[#allocation10 + $0x1d0] sm:$0xff]
    %v3735 = vld [vmem:[#allocation10 + $0x1d8] sm:$0xff]
    %v3736 = vld [vmem:[#allocation10 + $0x1e0] sm:$0xff]
    %v3737 = vld [vmem:[#allocation10 + $0x1e8] sm:$0xff]
    %v3738 = vld [vmem:[#allocation10 + $0x1f0] sm:$0xff]
    %v3739 = vld [vmem:[#allocation10 + $0x1f8] sm:$0xff]
    %v3740 = vld [vmem:[#allocation10 + $0x200] sm:$0xff]
    %v3741 = vld [vmem:[#allocation10 + $0x208] sm:$0xff]
    %v3742 = vld [vmem:[#allocation10 + $0x210] sm:$0xff]
    %v3743 = vld [vmem:[#allocation10 + $0x218] sm:$0xff]
    %v3744 = vld [vmem:[#allocation10 + $0x220] sm:$0xff]
    %v3745 = vld [vmem:[#allocation10 + $0x228] sm:$0xff]
    %v3746 = vld [vmem:[#allocation10 + $0x230] sm:$0xff]
    %v3747 = vld [vmem:[#allocation10 + $0x238] sm:$0xff]
    %v3748 = vld [vmem:[#allocation10 + $0x240] sm:$0xff]
    %v3749 = vld [vmem:[#allocation10 + $0x248] sm:$0xff]
    %v3750 = vld [vmem:[#allocation10 + $0x250] sm:$0xff]
    %v3751 = vld [vmem:[#allocation10 + $0x258] sm:$0xff]
    %v3752 = vld [vmem:[#allocation10 + $0x260] sm:$0xff]
    %v3753 = vld [vmem:[#allocation10 + $0x268] sm:$0xff]
    %v3754 = vld [vmem:[#allocation10 + $0x270] sm:$0xff]
    %v3755 = vld [vmem:[#allocation10 + $0x278] sm:$0xff]
    %v3756 = vld [vmem:[#allocation10 + $0x280] sm:$0xff]
    %v3757 = vld [vmem:[#allocation10 + $0x288] sm:$0xff]
    %v3758 = vld [vmem:[#allocation10 + $0x290] sm:$0xff]
    %v3759 = vld [vmem:[#allocation10 + $0x298] sm:$0xff]
    %v3760 = vld [vmem:[#allocation10 + $0x2a0] sm:$0xff]
    %v3761 = vld [vmem:[#allocation10 + $0x2a8] sm:$0xff]
    %v3762 = vld [vmem:[#allocation10 + $0x2b0] sm:$0xff]
    %v3763 = vld [vmem:[#allocation10 + $0x2b8] sm:$0xff]
    %v3764 = vld [vmem:[#allocation10 + $0x2c0] sm:$0xff]
    %v3765 = vld [vmem:[#allocation10 + $0x2c8] sm:$0xff]
    %v3766 = vld [vmem:[#allocation10 + $0x2d0] sm:$0xff]
    %v3767 = vld [vmem:[#allocation10 + $0x2d8] sm:$0xff]
    %v3768 = vld [vmem:[#allocation10 + $0x2e0] sm:$0xff]
    %v3769 = vld [vmem:[#allocation10 + $0x2e8] sm:$0xff]
    %v3770 = vld [vmem:[#allocation10 + $0x2f0] sm:$0xff]
    %v3771 = vld [vmem:[#allocation10 + $0x2f8] sm:$0xff]
    %s3772 = scalar_lea.vmem [#allocation14], 5
    %v3773 = vld [vmem:[%s3772] ss:$8 sm:$0xf]
    %v3774 = vld [vmem:[%s3772] ss:$8 sm:$0x30]
    %v3775 = vor.u32 %v3773, %v3774
    %v3777 = vlaneseq
    %v3778 = vshrl.u32 %v3777, 7
    %v3779 = vsub.s32 0, %v3778
    %v3780 = vrot.slane %v3775, %v3779
    %v3781 = vlaneseq
    %v3782 = vshrl.u32 %v3781, 7
    %v3783 = vsub.s32 1, %v3782
    %v3784 = vrot.slane %v3775, %v3783
    %v3785 = vlaneseq
    %v3786 = vshrl.u32 %v3785, 7
    %v3787 = vsub.s32 2, %v3786
    %v3788 = vrot.slane %v3775, %v3787
    %v3789 = vlaneseq
    %v3790 = vshrl.u32 %v3789, 7
    %v3791 = vsub.s32 3, %v3790
    %v3792 = vrot.slane %v3775, %v3791
    %v3793 = vlaneseq
    %v3794 = vshrl.u32 %v3793, 7
    %v3795 = vsub.s32 4, %v3794
    %v3796 = vrot.slane %v3775, %v3795
    %v3797 = vlaneseq
    %v3798 = vshrl.u32 %v3797, 7
    %v3799 = vsub.s32 5, %v3798
    %v3800 = vrot.slane %v3775, %v3799
    %v3903 = vunpack.c.l.b16 %v3676
    %v3904 = vunpack.c.h.b16 %v3676
    %v3905 = vunpack.c.l.b16 %v3677
    %v3906 = vunpack.c.h.b16 %v3677
    %v3907 = vunpack.c.l.b16 %v3678
    %v3908 = vunpack.c.h.b16 %v3678
    %v3909 = vunpack.c.l.b16 %v3679
    %v3910 = vunpack.c.h.b16 %v3679
    %v3911 = vunpack.c.l.b16 %v3680
    %v3912 = vunpack.c.h.b16 %v3680
    %v3913 = vunpack.c.l.b16 %v3681
    %v3914 = vunpack.c.h.b16 %v3681
    %v3915 = vunpack.c.l.b16 %v3682
    %v3916 = vunpack.c.h.b16 %v3682
    %v3917 = vunpack.c.l.b16 %v3683
    %v3918 = vunpack.c.h.b16 %v3683
    %v3919 = vunpack.c.l.b16 %v3684
    %v3920 = vunpack.c.h.b16 %v3684
    %v3921 = vunpack.c.l.b16 %v3685
    %v3922 = vunpack.c.h.b16 %v3685
    %v3923 = vunpack.c.l.b16 %v3686
    %v3924 = vunpack.c.h.b16 %v3686
    %v3925 = vunpack.c.l.b16 %v3687
    %v3926 = vunpack.c.h.b16 %v3687
    %v3927 = vunpack.c.l.b16 %v3688
    %v3928 = vunpack.c.h.b16 %v3688
    %v3929 = vunpack.c.l.b16 %v3689
    %v3930 = vunpack.c.h.b16 %v3689
    %v3931 = vunpack.c.l.b16 %v3690
    %v3932 = vunpack.c.h.b16 %v3690
    %v3933 = vunpack.c.l.b16 %v3691
    %v3934 = vunpack.c.h.b16 %v3691
    %v3935 = vunpack.c.l.b16 %v3692
    %v3936 = vunpack.c.h.b16 %v3692
    %v3937 = vunpack.c.l.b16 %v3693
    %v3938 = vunpack.c.h.b16 %v3693
    %v3939 = vunpack.c.l.b16 %v3694
    %v3940 = vunpack.c.h.b16 %v3694
    %v3941 = vunpack.c.l.b16 %v3695
    %v3942 = vunpack.c.h.b16 %v3695
    %v3943 = vunpack.c.l.b16 %v3696
    %v3944 = vunpack.c.h.b16 %v3696
    %v3945 = vunpack.c.l.b16 %v3697
    %v3946 = vunpack.c.h.b16 %v3697
    %v3947 = vunpack.c.l.b16 %v3698
    %v3948 = vunpack.c.h.b16 %v3698
    %v3949 = vunpack.c.l.b16 %v3699
    %v3950 = vunpack.c.h.b16 %v3699
    %v3951 = vunpack.c.l.b16 %v3700
    %v3952 = vunpack.c.h.b16 %v3700
    %v3953 = vunpack.c.l.b16 %v3701
    %v3954 = vunpack.c.h.b16 %v3701
    %v3955 = vunpack.c.l.b16 %v3702
    %v3956 = vunpack.c.h.b16 %v3702
    %v3957 = vunpack.c.l.b16 %v3703
    %v3958 = vunpack.c.h.b16 %v3703
    %v3959 = vunpack.c.l.b16 %v3704
    %v3960 = vunpack.c.h.b16 %v3704
    %v3961 = vunpack.c.l.b16 %v3705
    %v3962 = vunpack.c.h.b16 %v3705
    %v3963 = vunpack.c.l.b16 %v3706
    %v3964 = vunpack.c.h.b16 %v3706
    %v3965 = vunpack.c.l.b16 %v3707
    %v3966 = vunpack.c.h.b16 %v3707
    %v3967 = vunpack.c.l.b16 %v3708
    %v3968 = vunpack.c.h.b16 %v3708
    %v3969 = vunpack.c.l.b16 %v3709
    %v3970 = vunpack.c.h.b16 %v3709
    %v3971 = vunpack.c.l.b16 %v3710
    %v3972 = vunpack.c.h.b16 %v3710
    %v3973 = vunpack.c.l.b16 %v3711
    %v3974 = vunpack.c.h.b16 %v3711
    %v3975 = vunpack.c.l.b16 %v3712
    %v3976 = vunpack.c.h.b16 %v3712
    %v3977 = vunpack.c.l.b16 %v3713
    %v3978 = vunpack.c.h.b16 %v3713
    %v3979 = vunpack.c.l.b16 %v3714
    %v3980 = vunpack.c.h.b16 %v3714
    %v3981 = vunpack.c.l.b16 %v3715
    %v3982 = vunpack.c.h.b16 %v3715
    %v3983 = vunpack.c.l.b16 %v3716
    %v3984 = vunpack.c.h.b16 %v3716
    %v3985 = vunpack.c.l.b16 %v3717
    %v3986 = vunpack.c.h.b16 %v3717
    %v3987 = vunpack.c.l.b16 %v3718
    %v3988 = vunpack.c.h.b16 %v3718
    %v3989 = vunpack.c.l.b16 %v3719
    %v3990 = vunpack.c.h.b16 %v3719
    %v3991 = vunpack.c.l.b16 %v3720
    %v3992 = vunpack.c.h.b16 %v3720
    %v3993 = vunpack.c.l.b16 %v3721
    %v3994 = vunpack.c.h.b16 %v3721
    %v3995 = vunpack.c.l.b16 %v3722
    %v3996 = vunpack.c.h.b16 %v3722
    %v3997 = vunpack.c.l.b16 %v3723
    %v3998 = vunpack.c.h.b16 %v3723
    %v3999 = vunpack.c.l.b16 %v3724
    %v4000 = vunpack.c.h.b16 %v3724
    %v4001 = vunpack.c.l.b16 %v3725
    %v4002 = vunpack.c.h.b16 %v3725
    %v4003 = vunpack.c.l.b16 %v3726
    %v4004 = vunpack.c.h.b16 %v3726
    %v4005 = vunpack.c.l.b16 %v3727
    %v4006 = vunpack.c.h.b16 %v3727
    %v4007 = vunpack.c.l.b16 %v3728
    %v4008 = vunpack.c.h.b16 %v3728
    %v4009 = vunpack.c.l.b16 %v3729
    %v4010 = vunpack.c.h.b16 %v3729
    %v4011 = vunpack.c.l.b16 %v3730
    %v4012 = vunpack.c.h.b16 %v3730
    %v4013 = vunpack.c.l.b16 %v3731
    %v4014 = vunpack.c.h.b16 %v3731
    %v4015 = vunpack.c.l.b16 %v3732
    %v4016 = vunpack.c.h.b16 %v3732
    %v4017 = vunpack.c.l.b16 %v3733
    %v4018 = vunpack.c.h.b16 %v3733
    %v4019 = vunpack.c.l.b16 %v3734
    %v4020 = vunpack.c.h.b16 %v3734
    %v4021 = vunpack.c.l.b16 %v3735
    %v4022 = vunpack.c.h.b16 %v3735
    %v4023 = vunpack.c.l.b16 %v3736
    %v4024 = vunpack.c.h.b16 %v3736
    %v4025 = vunpack.c.l.b16 %v3737
    %v4026 = vunpack.c.h.b16 %v3737
    %v4027 = vunpack.c.l.b16 %v3738
    %v4028 = vunpack.c.h.b16 %v3738
    %v4029 = vunpack.c.l.b16 %v3739
    %v4030 = vunpack.c.h.b16 %v3739
    %v4031 = vunpack.c.l.b16 %v3740
    %v4032 = vunpack.c.h.b16 %v3740
    %v4033 = vunpack.c.l.b16 %v3741
    %v4034 = vunpack.c.h.b16 %v3741
    %v4035 = vunpack.c.l.b16 %v3742
    %v4036 = vunpack.c.h.b16 %v3742
    %v4037 = vunpack.c.l.b16 %v3743
    %v4038 = vunpack.c.h.b16 %v3743
    %v4039 = vunpack.c.l.b16 %v3744
    %v4040 = vunpack.c.h.b16 %v3744
    %v4041 = vunpack.c.l.b16 %v3745
    %v4042 = vunpack.c.h.b16 %v3745
    %v4043 = vunpack.c.l.b16 %v3746
    %v4044 = vunpack.c.h.b16 %v3746
    %v4045 = vunpack.c.l.b16 %v3747
    %v4046 = vunpack.c.h.b16 %v3747
    %v4047 = vunpack.c.l.b16 %v3748
    %v4048 = vunpack.c.h.b16 %v3748
    %v4049 = vunpack.c.l.b16 %v3749
    %v4050 = vunpack.c.h.b16 %v3749
    %v4051 = vunpack.c.l.b16 %v3750
    %v4052 = vunpack.c.h.b16 %v3750
    %v4053 = vunpack.c.l.b16 %v3751
    %v4054 = vunpack.c.h.b16 %v3751
    %v4055 = vunpack.c.l.b16 %v3752
    %v4056 = vunpack.c.h.b16 %v3752
    %v4057 = vunpack.c.l.b16 %v3753
    %v4058 = vunpack.c.h.b16 %v3753
    %v4059 = vunpack.c.l.b16 %v3754
    %v4060 = vunpack.c.h.b16 %v3754
    %v4061 = vunpack.c.l.b16 %v3755
    %v4062 = vunpack.c.h.b16 %v3755
    %v4063 = vunpack.c.l.b16 %v3756
    %v4064 = vunpack.c.h.b16 %v3756
    %v4065 = vunpack.c.l.b16 %v3757
    %v4066 = vunpack.c.h.b16 %v3757
    %v4067 = vunpack.c.l.b16 %v3758
    %v4068 = vunpack.c.h.b16 %v3758
    %v4069 = vunpack.c.l.b16 %v3759
    %v4070 = vunpack.c.h.b16 %v3759
    %v4071 = vunpack.c.l.b16 %v3760
    %v4072 = vunpack.c.h.b16 %v3760
    %v4073 = vunpack.c.l.b16 %v3761
    %v4074 = vunpack.c.h.b16 %v3761
    %v4075 = vunpack.c.l.b16 %v3762
    %v4076 = vunpack.c.h.b16 %v3762
    %v4077 = vunpack.c.l.b16 %v3763
    %v4078 = vunpack.c.h.b16 %v3763
    %v4079 = vunpack.c.l.b16 %v3764
    %v4080 = vunpack.c.h.b16 %v3764
    %v4081 = vunpack.c.l.b16 %v3765
    %v4082 = vunpack.c.h.b16 %v3765
    %v4083 = vunpack.c.l.b16 %v3766
    %v4084 = vunpack.c.h.b16 %v3766
    %v4085 = vunpack.c.l.b16 %v3767
    %v4086 = vunpack.c.h.b16 %v3767
    %v4087 = vunpack.c.l.b16 %v3768
    %v4088 = vunpack.c.h.b16 %v3768
    %v4089 = vunpack.c.l.b16 %v3769
    %v4090 = vunpack.c.h.b16 %v3769
    %v4091 = vunpack.c.l.b16 %v3770
    %v4092 = vunpack.c.h.b16 %v3770
    %v4093 = vunpack.c.l.b16 %v3771
    %v4094 = vunpack.c.h.b16 %v3771
    %v4095 = vpack.c.b16 %v3909, %v3903
    %v4096 = vpack.c.b16 %v3910, %v3904
    %v4097 = vpack.c.b16 %v3911, %v3905
    %v4098 = vpack.c.b16 %v3912, %v3906
    %v4099 = vpack.c.b16 %v3913, %v3907
    %v4100 = vpack.c.b16 %v3914, %v3908
    %v4101 = vpack.c.b16 %v3921, %v3915
    %v4102 = vpack.c.b16 %v3922, %v3916
    %v4103 = vpack.c.b16 %v3923, %v3917
    %v4104 = vpack.c.b16 %v3924, %v3918
    %v4105 = vpack.c.b16 %v3925, %v3919
    %v4106 = vpack.c.b16 %v3926, %v3920
    %v4107 = vpack.c.b16 %v3933, %v3927
    %v4108 = vpack.c.b16 %v3934, %v3928
    %v4109 = vpack.c.b16 %v3935, %v3929
    %v4110 = vpack.c.b16 %v3936, %v3930
    %v4111 = vpack.c.b16 %v3937, %v3931
    %v4112 = vpack.c.b16 %v3938, %v3932
    %v4113 = vpack.c.b16 %v3945, %v3939
    %v4114 = vpack.c.b16 %v3946, %v3940
    %v4115 = vpack.c.b16 %v3947, %v3941
    %v4116 = vpack.c.b16 %v3948, %v3942
    %v4117 = vpack.c.b16 %v3949, %v3943
    %v4118 = vpack.c.b16 %v3950, %v3944
    %v4119 = vpack.c.b16 %v3957, %v3951
    %v4120 = vpack.c.b16 %v3958, %v3952
    %v4121 = vpack.c.b16 %v3959, %v3953
    %v4122 = vpack.c.b16 %v3960, %v3954
    %v4123 = vpack.c.b16 %v3961, %v3955
    %v4124 = vpack.c.b16 %v3962, %v3956
    %v4125 = vpack.c.b16 %v3969, %v3963
    %v4126 = vpack.c.b16 %v3970, %v3964
    %v4127 = vpack.c.b16 %v3971, %v3965
    %v4128 = vpack.c.b16 %v3972, %v3966
    %v4129 = vpack.c.b16 %v3973, %v3967
    %v4130 = vpack.c.b16 %v3974, %v3968
    %v4131 = vpack.c.b16 %v3981, %v3975
    %v4132 = vpack.c.b16 %v3982, %v3976
    %v4133 = vpack.c.b16 %v3983, %v3977
    %v4134 = vpack.c.b16 %v3984, %v3978
    %v4135 = vpack.c.b16 %v3985, %v3979
    %v4136 = vpack.c.b16 %v3986, %v3980
    %v4137 = vpack.c.b16 %v3993, %v3987
    %v4138 = vpack.c.b16 %v3994, %v3988
    %v4139 = vpack.c.b16 %v3995, %v3989
    %v4140 = vpack.c.b16 %v3996, %v3990
    %v4141 = vpack.c.b16 %v3997, %v3991
    %v4142 = vpack.c.b16 %v3998, %v3992
    %v4143 = vpack.c.b16 %v4005, %v3999
    %v4144 = vpack.c.b16 %v4006, %v4000
    %v4145 = vpack.c.b16 %v4007, %v4001
    %v4146 = vpack.c.b16 %v4008, %v4002
    %v4147 = vpack.c.b16 %v4009, %v4003
    %v4148 = vpack.c.b16 %v4010, %v4004
    %v4149 = vpack.c.b16 %v4017, %v4011
    %v4150 = vpack.c.b16 %v4018, %v4012
    %v4151 = vpack.c.b16 %v4019, %v4013
    %v4152 = vpack.c.b16 %v4020, %v4014
    %v4153 = vpack.c.b16 %v4021, %v4015
    %v4154 = vpack.c.b16 %v4022, %v4016
    %v4155 = vpack.c.b16 %v4029, %v4023
    %v4156 = vpack.c.b16 %v4030, %v4024
    %v4157 = vpack.c.b16 %v4031, %v4025
    %v4158 = vpack.c.b16 %v4032, %v4026
    %v4159 = vpack.c.b16 %v4033, %v4027
    %v4160 = vpack.c.b16 %v4034, %v4028
    %v4161 = vpack.c.b16 %v4041, %v4035
    %v4162 = vpack.c.b16 %v4042, %v4036
    %v4163 = vpack.c.b16 %v4043, %v4037
    %v4164 = vpack.c.b16 %v4044, %v4038
    %v4165 = vpack.c.b16 %v4045, %v4039
    %v4166 = vpack.c.b16 %v4046, %v4040
    %v4167 = vpack.c.b16 %v4053, %v4047
    %v4168 = vpack.c.b16 %v4054, %v4048
    %v4169 = vpack.c.b16 %v4055, %v4049
    %v4170 = vpack.c.b16 %v4056, %v4050
    %v4171 = vpack.c.b16 %v4057, %v4051
    %v4172 = vpack.c.b16 %v4058, %v4052
    %v4173 = vpack.c.b16 %v4065, %v4059
    %v4174 = vpack.c.b16 %v4066, %v4060
    %v4175 = vpack.c.b16 %v4067, %v4061
    %v4176 = vpack.c.b16 %v4068, %v4062
    %v4177 = vpack.c.b16 %v4069, %v4063
    %v4178 = vpack.c.b16 %v4070, %v4064
    %v4179 = vpack.c.b16 %v4077, %v4071
    %v4180 = vpack.c.b16 %v4078, %v4072
    %v4181 = vpack.c.b16 %v4079, %v4073
    %v4182 = vpack.c.b16 %v4080, %v4074
    %v4183 = vpack.c.b16 %v4081, %v4075
    %v4184 = vpack.c.b16 %v4082, %v4076
    %v4185 = vpack.c.b16 %v4089, %v4083
    %v4186 = vpack.c.b16 %v4090, %v4084
    %v4187 = vpack.c.b16 %v4091, %v4085
    %v4188 = vpack.c.b16 %v4092, %v4086
    %v4189 = vpack.c.b16 %v4093, %v4087
    %v4190 = vpack.c.b16 %v4094, %v4088
    %4287 = vmatprep.subr.bf16.mxu0 %v4138
    %4288 = vmatpush1.bf16.msra.mxu0 %v4137
    %4289 = vmatprep.subr.bf16.mxu0 %v4132
    %4290 = vmatpush1.bf16.msra.mxu0 %v4131
    %4291 = vmatprep.subr.bf16.mxu0 %v4126
    %4292 = vmatpush1.bf16.msra.mxu0 %v4125
    %4293 = vmatprep.subr.bf16.mxu0 %v4120
    %4294 = vmatpush1.bf16.msra.mxu0 %v4119
    %4295 = vmatprep.subr.bf16.mxu0 %v4114
    %4296 = vmatpush1.bf16.msra.mxu0 %v4113
    %4297 = vmatprep.subr.bf16.mxu0 %v4108
    %4298 = vmatpush1.bf16.msra.mxu0 %v4107
    %4299 = vmatprep.subr.bf16.mxu0 %v4102
    %4300 = vmatpush1.bf16.msra.mxu0 %v4101
    %4301 = vmatprep.subr.bf16.mxu0 %v4096
    %4302 = vmatpush1.bf16.msra.mxu0 %v4095
    %4303 = vmatprep.subr.bf16.mxu0 %v4186
    %4304 = vmatpush2.bf16.msra.mxu0 %v4185
    %4305 = vmatprep.subr.bf16.mxu0 %v4180
    %4306 = vmatpush2.bf16.msra.mxu0 %v4179
    %4307 = vmatprep.subr.bf16.mxu0 %v4174
    %4308 = vmatpush2.bf16.msra.mxu0 %v4173
    %4309 = vmatprep.subr.bf16.mxu0 %v4168
    %4310 = vmatpush2.bf16.msra.mxu0 %v4167
    %4311 = vmatprep.subr.bf16.mxu0 %v4162
    %4312 = vmatpush2.bf16.msra.mxu0 %v4161
    %4313 = vmatprep.subr.bf16.mxu0 %v4156
    %4314 = vmatpush2.bf16.msra.mxu0 %v4155
    %4315 = vmatprep.subr.bf16.mxu0 %v4150
    %4316 = vmatpush2.bf16.msra.mxu0 %v4149
    %4317 = vmatprep.subr.bf16.mxu0 %v4144
    %4318 = vmatpush2.bf16.msra.mxu0 %v4143
    %4319 = vmatprep.mubr.bf16.mxu0 %v3675
    %4320 = vmatmul.mubr.bf16.gmra.mxu0 %v3674
    %v4321 = vpop.f32.mrf.mxu0
    %v4322 = vadd.f32 %v3780, %v4321
    %v4323 = vpop.f32.mrf.mxu0
    %v4324 = vadd.f32 %v3784, %v4323
    %v4325 = vpop.f32.mrf.mxu0
    %v4326 = vpop.f32.mrf.mxu0
    %4327 = vdwg.mxu0
    %4328 = vmatprep.subr.bf16.mxu0 %v4140
    %4329 = vmatpush1.bf16.msra.mxu0 %v4139
    %4330 = vmatprep.subr.bf16.mxu0 %v4134
    %4331 = vmatpush1.bf16.msra.mxu0 %v4133
    %4332 = vmatprep.subr.bf16.mxu0 %v4128
    %4333 = vmatpush1.bf16.msra.mxu0 %v4127
    %4334 = vmatprep.subr.bf16.mxu0 %v4122
    %4335 = vmatpush1.bf16.msra.mxu0 %v4121
    %4336 = vmatprep.subr.bf16.mxu0 %v4116
    %4337 = vmatpush1.bf16.msra.mxu0 %v4115
    %4338 = vmatprep.subr.bf16.mxu0 %v4110
    %4339 = vmatpush1.bf16.msra.mxu0 %v4109
    %4340 = vmatprep.subr.bf16.mxu0 %v4104
    %4341 = vmatpush1.bf16.msra.mxu0 %v4103
    %4342 = vmatprep.subr.bf16.mxu0 %v4098
    %4343 = vmatpush1.bf16.msra.mxu0 %v4097
    %4344 = vmatprep.subr.bf16.mxu0 %v4188
    %4345 = vmatpush2.bf16.msra.mxu0 %v4187
    %4346 = vmatprep.subr.bf16.mxu0 %v4182
    %4347 = vmatpush2.bf16.msra.mxu0 %v4181
    %4348 = vmatprep.subr.bf16.mxu0 %v4176
    %4349 = vmatpush2.bf16.msra.mxu0 %v4175
    %4350 = vmatprep.subr.bf16.mxu0 %v4170
    %4351 = vmatpush2.bf16.msra.mxu0 %v4169
    %4352 = vmatprep.subr.bf16.mxu0 %v4164
    %4353 = vmatpush2.bf16.msra.mxu0 %v4163
    %4354 = vmatprep.subr.bf16.mxu0 %v4158
    %4355 = vmatpush2.bf16.msra.mxu0 %v4157
    %4356 = vmatprep.subr.bf16.mxu0 %v4152
    %4357 = vmatpush2.bf16.msra.mxu0 %v4151
    %4358 = vmatprep.subr.bf16.mxu0 %v4146
    %4359 = vmatpush2.bf16.msra.mxu0 %v4145
    %4360 = vmatprep.mubr.bf16.mxu0 %v3675
    %4361 = vmatmul.mubr.bf16.gmra.mxu0 %v3674
    %v4362 = vpop.f32.mrf.mxu0
    %v4363 = vadd.f32 %v3788, %v4362
    %v4364 = vpop.f32.mrf.mxu0
    %v4365 = vadd.f32 %v3792, %v4364
    %v4366 = vpop.f32.mrf.mxu0
    %v4367 = vpop.f32.mrf.mxu0
    %4368 = vdwg.mxu0
    %4369 = vmatprep.subr.bf16.mxu0 %v4142
    %4370 = vmatpush1.bf16.msra.mxu0 %v4141
    %4371 = vmatprep.subr.bf16.mxu0 %v4136
    %4372 = vmatpush1.bf16.msra.mxu0 %v4135
    %4373 = vmatprep.subr.bf16.mxu0 %v4130
    %4374 = vmatpush1.bf16.msra.mxu0 %v4129
    %4375 = vmatprep.subr.bf16.mxu0 %v4124
    %4376 = vmatpush1.bf16.msra.mxu0 %v4123
    %4377 = vmatprep.subr.bf16.mxu0 %v4118
    %4378 = vmatpush1.bf16.msra.mxu0 %v4117
    %4379 = vmatprep.subr.bf16.mxu0 %v4112
    %4380 = vmatpush1.bf16.msra.mxu0 %v4111
    %4381 = vmatprep.subr.bf16.mxu0 %v4106
    %4382 = vmatpush1.bf16.msra.mxu0 %v4105
    %4383 = vmatprep.subr.bf16.mxu0 %v4100
    %4384 = vmatpush1.bf16.msra.mxu0 %v4099
    %4385 = vmatprep.subr.bf16.mxu0 %v4190
    %4386 = vmatpush2.bf16.msra.mxu0 %v4189
    %4387 = vmatprep.subr.bf16.mxu0 %v4184
    %4388 = vmatpush2.bf16.msra.mxu0 %v4183
    %4389 = vmatprep.subr.bf16.mxu0 %v4178
    %4390 = vmatpush2.bf16.msra.mxu0 %v4177
    %4391 = vmatprep.subr.bf16.mxu0 %v4172
    %4392 = vmatpush2.bf16.msra.mxu0 %v4171
    %4393 = vmatprep.subr.bf16.mxu0 %v4166
    %4394 = vmatpush2.bf16.msra.mxu0 %v4165
    %4395 = vmatprep.subr.bf16.mxu0 %v4160
    %4396 = vmatpush2.bf16.msra.mxu0 %v4159
    %4397 = vmatprep.subr.bf16.mxu0 %v4154
    %4398 = vmatpush2.bf16.msra.mxu0 %v4153
    %4399 = vmatprep.subr.bf16.mxu0 %v4148
    %4400 = vmatpush2.bf16.msra.mxu0 %v4147
    %4401 = vmatprep.mubr.bf16.mxu0 %v3675
    %4402 = vmatmul.mubr.bf16.gmra.mxu0 %v3674
    %v4403 = vpop.f32.mrf.mxu0
    %v4404 = vadd.f32 %v3796, %v4403
    %v4405 = vpop.f32.mrf.mxu0
    %v4406 = vadd.f32 %v3800, %v4405
    %v4407 = vpop.f32.mrf.mxu0
    %v4408 = vpop.f32.mrf.mxu0
    %4409 = vdwg.mxu0
    %v4410 = vmul.f32 %v4322, 0.01
    %v4411 = vmul.f32 %v4324, 0.01
    %v4412 = vmax.f32 %v4322, %v4410
    %v4413 = vmax.f32 %v4324, %v4411
    %v4414 = vpack.c.bf16 %v4412, %v4412
    %v4415 = vpack.c.bf16 %v4413, %v4413
    %v4416 = vmax.f32 %v4363, 0.0
    %v4417 = vmax.f32 %v4365, 0.0
    %v4418 = vpack.c.bf16 %v4416, %v4416
    %v4419 = vpack.c.bf16 %v4417, %v4417
    %v4420 = vmax.f32 %v4404, 0.0
    %v4421 = vmax.f32 %v4406, 0.0
    %v4422 = vpack.c.bf16 %v4420, %v4420
    %v4423 = vpack.c.bf16 %v4421, %v4421
    %v4424 = vld [vmem:[#allocation11] sm:$0xff]
    %v4425 = vld [vmem:[#allocation11 + $0x8] sm:$0xff]
    %v4426 = vld [vmem:[#allocation11 + $0x10] sm:$0xff]
    %v4427 = vld [vmem:[#allocation11 + $0x18] sm:$0xff]
    %v4428 = vld [vmem:[#allocation11 + $0x20] sm:$0xff]
    %v4429 = vld [vmem:[#allocation11 + $0x28] sm:$0xff]
    %v4430 = vld [vmem:[#allocation11 + $0x30] sm:$0xff]
    %v4431 = vld [vmem:[#allocation11 + $0x38] sm:$0xff]
    %v4432 = vld [vmem:[#allocation11 + $0x40] sm:$0xff]
    %v4433 = vld [vmem:[#allocation11 + $0x48] sm:$0xff]
    %v4434 = vld [vmem:[#allocation11 + $0x50] sm:$0xff]
    %v4435 = vld [vmem:[#allocation11 + $0x58] sm:$0xff]
    %v4436 = vld [vmem:[#allocation11 + $0x60] sm:$0xff]
    %v4437 = vld [vmem:[#allocation11 + $0x68] sm:$0xff]
    %v4438 = vld [vmem:[#allocation11 + $0x70] sm:$0xff]
    %v4439 = vld [vmem:[#allocation11 + $0x78] sm:$0xff]
    %v4440 = vld [vmem:[#allocation11 + $0x80] sm:$0xff]
    %v4441 = vld [vmem:[#allocation11 + $0x88] sm:$0xff]
    %v4442 = vld [vmem:[#allocation11 + $0x90] sm:$0xff]
    %v4443 = vld [vmem:[#allocation11 + $0x98] sm:$0xff]
    %v4444 = vld [vmem:[#allocation11 + $0xa0] sm:$0xff]
    %v4445 = vld [vmem:[#allocation11 + $0xa8] sm:$0xff]
    %v4446 = vld [vmem:[#allocation11 + $0xb0] sm:$0xff]
    %v4447 = vld [vmem:[#allocation11 + $0xb8] sm:$0xff]
    %v4448 = vld [vmem:[#allocation11 + $0xc0] sm:$0xff]
    %v4449 = vld [vmem:[#allocation11 + $0xc8] sm:$0xff]
    %v4450 = vld [vmem:[#allocation11 + $0xd0] sm:$0xff]
    %v4451 = vld [vmem:[#allocation11 + $0xd8] sm:$0xff]
    %v4452 = vld [vmem:[#allocation11 + $0xe0] sm:$0xff]
    %v4453 = vld [vmem:[#allocation11 + $0xe8] sm:$0xff]
    %v4454 = vld [vmem:[#allocation11 + $0xf0] sm:$0xff]
    %v4455 = vld [vmem:[#allocation11 + $0xf8] sm:$0xff]
    %s4456 = scalar_lea.vmem [#allocation14], 6
    %v4457 = vld [vmem:[%s4456] ss:$8 sm:$0x3]
    %v4459 = vlaneseq
    %v4460 = vshrl.u32 %v4459, 7
    %v4461 = vsub.s32 0, %v4460
    %v4462 = vrot.slane %v4457, %v4461
    %v4463 = vlaneseq
    %v4464 = vshrl.u32 %v4463, 7
    %v4465 = vsub.s32 1, %v4464
    %v4466 = vrot.slane %v4457, %v4465
    %v4501 = vunpack.c.l.b16 %v4424
    %v4502 = vunpack.c.h.b16 %v4424
    %v4503 = vunpack.c.l.b16 %v4425
    %v4504 = vunpack.c.h.b16 %v4425
    %v4505 = vunpack.c.l.b16 %v4426
    %v4506 = vunpack.c.h.b16 %v4426
    %v4507 = vunpack.c.l.b16 %v4427
    %v4508 = vunpack.c.h.b16 %v4427
    %v4509 = vunpack.c.l.b16 %v4428
    %v4510 = vunpack.c.h.b16 %v4428
    %v4511 = vunpack.c.l.b16 %v4429
    %v4512 = vunpack.c.h.b16 %v4429
    %v4513 = vunpack.c.l.b16 %v4430
    %v4514 = vunpack.c.h.b16 %v4430
    %v4515 = vunpack.c.l.b16 %v4431
    %v4516 = vunpack.c.h.b16 %v4431
    %v4517 = vunpack.c.l.b16 %v4432
    %v4518 = vunpack.c.h.b16 %v4432
    %v4519 = vunpack.c.l.b16 %v4433
    %v4520 = vunpack.c.h.b16 %v4433
    %v4521 = vunpack.c.l.b16 %v4434
    %v4522 = vunpack.c.h.b16 %v4434
    %v4523 = vunpack.c.l.b16 %v4435
    %v4524 = vunpack.c.h.b16 %v4435
    %v4525 = vunpack.c.l.b16 %v4436
    %v4526 = vunpack.c.h.b16 %v4436
    %v4527 = vunpack.c.l.b16 %v4437
    %v4528 = vunpack.c.h.b16 %v4437
    %v4529 = vunpack.c.l.b16 %v4438
    %v4530 = vunpack.c.h.b16 %v4438
    %v4531 = vunpack.c.l.b16 %v4439
    %v4532 = vunpack.c.h.b16 %v4439
    %v4533 = vunpack.c.l.b16 %v4440
    %v4534 = vunpack.c.h.b16 %v4440
    %v4535 = vunpack.c.l.b16 %v4441
    %v4536 = vunpack.c.h.b16 %v4441
    %v4537 = vunpack.c.l.b16 %v4442
    %v4538 = vunpack.c.h.b16 %v4442
    %v4539 = vunpack.c.l.b16 %v4443
    %v4540 = vunpack.c.h.b16 %v4443
    %v4541 = vunpack.c.l.b16 %v4444
    %v4542 = vunpack.c.h.b16 %v4444
    %v4543 = vunpack.c.l.b16 %v4445
    %v4544 = vunpack.c.h.b16 %v4445
    %v4545 = vunpack.c.l.b16 %v4446
    %v4546 = vunpack.c.h.b16 %v4446
    %v4547 = vunpack.c.l.b16 %v4447
    %v4548 = vunpack.c.h.b16 %v4447
    %v4549 = vunpack.c.l.b16 %v4448
    %v4550 = vunpack.c.h.b16 %v4448
    %v4551 = vunpack.c.l.b16 %v4449
    %v4552 = vunpack.c.h.b16 %v4449
    %v4553 = vunpack.c.l.b16 %v4450
    %v4554 = vunpack.c.h.b16 %v4450
    %v4555 = vunpack.c.l.b16 %v4451
    %v4556 = vunpack.c.h.b16 %v4451
    %v4557 = vunpack.c.l.b16 %v4452
    %v4558 = vunpack.c.h.b16 %v4452
    %v4559 = vunpack.c.l.b16 %v4453
    %v4560 = vunpack.c.h.b16 %v4453
    %v4561 = vunpack.c.l.b16 %v4454
    %v4562 = vunpack.c.h.b16 %v4454
    %v4563 = vunpack.c.l.b16 %v4455
    %v4564 = vunpack.c.h.b16 %v4455
    %v4565 = vpack.c.b16 %v4503, %v4501
    %v4566 = vpack.c.b16 %v4504, %v4502
    %v4567 = vpack.c.b16 %v4507, %v4505
    %v4568 = vpack.c.b16 %v4508, %v4506
    %v4569 = vpack.c.b16 %v4511, %v4509
    %v4570 = vpack.c.b16 %v4512, %v4510
    %v4571 = vpack.c.b16 %v4515, %v4513
    %v4572 = vpack.c.b16 %v4516, %v4514
    %v4573 = vpack.c.b16 %v4519, %v4517
    %v4574 = vpack.c.b16 %v4520, %v4518
    %v4575 = vpack.c.b16 %v4523, %v4521
    %v4576 = vpack.c.b16 %v4524, %v4522
    %v4577 = vpack.c.b16 %v4527, %v4525
    %v4578 = vpack.c.b16 %v4528, %v4526
    %v4579 = vpack.c.b16 %v4531, %v4529
    %v4580 = vpack.c.b16 %v4532, %v4530
    %v4581 = vpack.c.b16 %v4535, %v4533
    %v4582 = vpack.c.b16 %v4536, %v4534
    %v4583 = vpack.c.b16 %v4539, %v4537
    %v4584 = vpack.c.b16 %v4540, %v4538
    %v4585 = vpack.c.b16 %v4543, %v4541
    %v4586 = vpack.c.b16 %v4544, %v4542
    %v4587 = vpack.c.b16 %v4547, %v4545
    %v4588 = vpack.c.b16 %v4548, %v4546
    %v4589 = vpack.c.b16 %v4551, %v4549
    %v4590 = vpack.c.b16 %v4552, %v4550
    %v4591 = vpack.c.b16 %v4555, %v4553
    %v4592 = vpack.c.b16 %v4556, %v4554
    %v4593 = vpack.c.b16 %v4559, %v4557
    %v4594 = vpack.c.b16 %v4560, %v4558
    %v4595 = vpack.c.b16 %v4563, %v4561
    %v4596 = vpack.c.b16 %v4564, %v4562
    %4629 = vmatprep.subr.bf16.mxu0 %v4580
    %4630 = vmatpush1.bf16.msra.mxu0 %v4579
    %4631 = vmatprep.subr.bf16.mxu0 %v4578
    %4632 = vmatpush1.bf16.msra.mxu0 %v4577
    %4633 = vmatprep.subr.bf16.mxu0 %v4576
    %4634 = vmatpush1.bf16.msra.mxu0 %v4575
    %4635 = vmatprep.subr.bf16.mxu0 %v4574
    %4636 = vmatpush1.bf16.msra.mxu0 %v4573
    %4637 = vmatprep.subr.bf16.mxu0 %v4572
    %4638 = vmatpush1.bf16.msra.mxu0 %v4571
    %4639 = vmatprep.subr.bf16.mxu0 %v4570
    %4640 = vmatpush1.bf16.msra.mxu0 %v4569
    %4641 = vmatprep.subr.bf16.mxu0 %v4568
    %4642 = vmatpush1.bf16.msra.mxu0 %v4567
    %4643 = vmatprep.subr.bf16.mxu0 %v4566
    %4644 = vmatpush1.bf16.msra.mxu0 %v4565
    %4645 = vmatprep.subr.bf16.mxu0 %v4596
    %4646 = vmatpush2.bf16.msra.mxu0 %v4595
    %4647 = vmatprep.subr.bf16.mxu0 %v4594
    %4648 = vmatpush2.bf16.msra.mxu0 %v4593
    %4649 = vmatprep.subr.bf16.mxu0 %v4592
    %4650 = vmatpush2.bf16.msra.mxu0 %v4591
    %4651 = vmatprep.subr.bf16.mxu0 %v4590
    %4652 = vmatpush2.bf16.msra.mxu0 %v4589
    %4653 = vmatprep.subr.bf16.mxu0 %v4588
    %4654 = vmatpush2.bf16.msra.mxu0 %v4587
    %4655 = vmatprep.subr.bf16.mxu0 %v4586
    %4656 = vmatpush2.bf16.msra.mxu0 %v4585
    %4657 = vmatprep.subr.bf16.mxu0 %v4584
    %4658 = vmatpush2.bf16.msra.mxu0 %v4583
    %4659 = vmatprep.subr.bf16.mxu0 %v4582
    %4660 = vmatpush2.bf16.msra.mxu0 %v4581
    %4661 = vmatprep.mubr.bf16.mxu0 %v4419
    %4662 = vmatmul.mubr.bf16.gmra.mxu0 %v4418
    %v4663 = vpop.f32.mrf.mxu0
    %v4664 = vadd.f32 %v4462, %v4663
    %v4665 = vpop.f32.mrf.mxu0
    %v4666 = vadd.f32 %v4466, %v4665
    %v4667 = vpop.f32.mrf.mxu0
    %v4668 = vpop.f32.mrf.mxu0
    %4669 = vdwg.mxu0
    %v4670 = vmax.f32 %v4664, 0.0
    %v4671 = vmax.f32 %v4666, 0.0
    %v4672 = vpack.c.bf16 %v4670, %v4670
    %v4673 = vpack.c.bf16 %v4671, %v4671
    %s4674 = scalar_lea.vmem [#allocation11], 256
    %v4675 = vld [vmem:[%s4674] sm:$0xff]
    %v4676 = vld [vmem:[%s4674 + $0x8] sm:$0xff]
    %v4677 = vld [vmem:[%s4674 + $0x10] sm:$0xff]
    %v4678 = vld [vmem:[%s4674 + $0x18] sm:$0xff]
    %v4679 = vld [vmem:[%s4674 + $0x20] sm:$0xff]
    %v4680 = vld [vmem:[%s4674 + $0x28] sm:$0xff]
    %v4681 = vld [vmem:[%s4674 + $0x30] sm:$0xff]
    %v4682 = vld [vmem:[%s4674 + $0x38] sm:$0xff]
    %v4683 = vld [vmem:[%s4674 + $0x40] sm:$0xff]
    %v4684 = vld [vmem:[%s4674 + $0x48] sm:$0xff]
    %v4685 = vld [vmem:[%s4674 + $0x50] sm:$0xff]
    %v4686 = vld [vmem:[%s4674 + $0x58] sm:$0xff]
    %v4687 = vld [vmem:[%s4674 + $0x60] sm:$0xff]
    %v4688 = vld [vmem:[%s4674 + $0x68] sm:$0xff]
    %v4689 = vld [vmem:[%s4674 + $0x70] sm:$0xff]
    %v4690 = vld [vmem:[%s4674 + $0x78] sm:$0xff]
    %v4691 = vld [vmem:[%s4674 + $0x80] sm:$0xff]
    %v4692 = vld [vmem:[%s4674 + $0x88] sm:$0xff]
    %v4693 = vld [vmem:[%s4674 + $0x90] sm:$0xff]
    %v4694 = vld [vmem:[%s4674 + $0x98] sm:$0xff]
    %v4695 = vld [vmem:[%s4674 + $0xa0] sm:$0xff]
    %v4696 = vld [vmem:[%s4674 + $0xa8] sm:$0xff]
    %v4697 = vld [vmem:[%s4674 + $0xb0] sm:$0xff]
    %v4698 = vld [vmem:[%s4674 + $0xb8] sm:$0xff]
    %v4699 = vld [vmem:[%s4674 + $0xc0] sm:$0xff]
    %v4700 = vld [vmem:[%s4674 + $0xc8] sm:$0xff]
    %v4701 = vld [vmem:[%s4674 + $0xd0] sm:$0xff]
    %v4702 = vld [vmem:[%s4674 + $0xd8] sm:$0xff]
    %v4703 = vld [vmem:[%s4674 + $0xe0] sm:$0xff]
    %v4704 = vld [vmem:[%s4674 + $0xe8] sm:$0xff]
    %v4705 = vld [vmem:[%s4674 + $0xf0] sm:$0xff]
    %v4706 = vld [vmem:[%s4674 + $0xf8] sm:$0xff]
    %s4707 = scalar_lea.vmem [#allocation14], 7
    %v4708 = vld [vmem:[%s4707] ss:$8 sm:$0x3]
    %v4710 = vlaneseq
    %v4711 = vshrl.u32 %v4710, 7
    %v4712 = vsub.s32 0, %v4711
    %v4713 = vrot.slane %v4708, %v4712
    %v4714 = vlaneseq
    %v4715 = vshrl.u32 %v4714, 7
    %v4716 = vsub.s32 1, %v4715
    %v4717 = vrot.slane %v4708, %v4716
    %v4752 = vunpack.c.l.b16 %v4675
    %v4753 = vunpack.c.h.b16 %v4675
    %v4754 = vunpack.c.l.b16 %v4676
    %v4755 = vunpack.c.h.b16 %v4676
    %v4756 = vunpack.c.l.b16 %v4677
    %v4757 = vunpack.c.h.b16 %v4677
    %v4758 = vunpack.c.l.b16 %v4678
    %v4759 = vunpack.c.h.b16 %v4678
    %v4760 = vunpack.c.l.b16 %v4679
    %v4761 = vunpack.c.h.b16 %v4679
    %v4762 = vunpack.c.l.b16 %v4680
    %v4763 = vunpack.c.h.b16 %v4680
    %v4764 = vunpack.c.l.b16 %v4681
    %v4765 = vunpack.c.h.b16 %v4681
    %v4766 = vunpack.c.l.b16 %v4682
    %v4767 = vunpack.c.h.b16 %v4682
    %v4768 = vunpack.c.l.b16 %v4683
    %v4769 = vunpack.c.h.b16 %v4683
    %v4770 = vunpack.c.l.b16 %v4684
    %v4771 = vunpack.c.h.b16 %v4684
    %v4772 = vunpack.c.l.b16 %v4685
    %v4773 = vunpack.c.h.b16 %v4685
    %v4774 = vunpack.c.l.b16 %v4686
    %v4775 = vunpack.c.h.b16 %v4686
    %v4776 = vunpack.c.l.b16 %v4687
    %v4777 = vunpack.c.h.b16 %v4687
    %v4778 = vunpack.c.l.b16 %v4688
    %v4779 = vunpack.c.h.b16 %v4688
    %v4780 = vunpack.c.l.b16 %v4689
    %v4781 = vunpack.c.h.b16 %v4689
    %v4782 = vunpack.c.l.b16 %v4690
    %v4783 = vunpack.c.h.b16 %v4690
    %v4784 = vunpack.c.l.b16 %v4691
    %v4785 = vunpack.c.h.b16 %v4691
    %v4786 = vunpack.c.l.b16 %v4692
    %v4787 = vunpack.c.h.b16 %v4692
    %v4788 = vunpack.c.l.b16 %v4693
    %v4789 = vunpack.c.h.b16 %v4693
    %v4790 = vunpack.c.l.b16 %v4694
    %v4791 = vunpack.c.h.b16 %v4694
    %v4792 = vunpack.c.l.b16 %v4695
    %v4793 = vunpack.c.h.b16 %v4695
    %v4794 = vunpack.c.l.b16 %v4696
    %v4795 = vunpack.c.h.b16 %v4696
    %v4796 = vunpack.c.l.b16 %v4697
    %v4797 = vunpack.c.h.b16 %v4697
    %v4798 = vunpack.c.l.b16 %v4698
    %v4799 = vunpack.c.h.b16 %v4698
    %v4800 = vunpack.c.l.b16 %v4699
    %v4801 = vunpack.c.h.b16 %v4699
    %v4802 = vunpack.c.l.b16 %v4700
    %v4803 = vunpack.c.h.b16 %v4700
    %v4804 = vunpack.c.l.b16 %v4701
    %v4805 = vunpack.c.h.b16 %v4701
    %v4806 = vunpack.c.l.b16 %v4702
    %v4807 = vunpack.c.h.b16 %v4702
    %v4808 = vunpack.c.l.b16 %v4703
    %v4809 = vunpack.c.h.b16 %v4703
    %v4810 = vunpack.c.l.b16 %v4704
    %v4811 = vunpack.c.h.b16 %v4704
    %v4812 = vunpack.c.l.b16 %v4705
    %v4813 = vunpack.c.h.b16 %v4705
    %v4814 = vunpack.c.l.b16 %v4706
    %v4815 = vunpack.c.h.b16 %v4706
    %v4816 = vpack.c.b16 %v4754, %v4752
    %v4817 = vpack.c.b16 %v4755, %v4753
    %v4818 = vpack.c.b16 %v4758, %v4756
    %v4819 = vpack.c.b16 %v4759, %v4757
    %v4820 = vpack.c.b16 %v4762, %v4760
    %v4821 = vpack.c.b16 %v4763, %v4761
    %v4822 = vpack.c.b16 %v4766, %v4764
    %v4823 = vpack.c.b16 %v4767, %v4765
    %v4824 = vpack.c.b16 %v4770, %v4768
    %v4825 = vpack.c.b16 %v4771, %v4769
    %v4826 = vpack.c.b16 %v4774, %v4772
    %v4827 = vpack.c.b16 %v4775, %v4773
    %v4828 = vpack.c.b16 %v4778, %v4776
    %v4829 = vpack.c.b16 %v4779, %v4777
    %v4830 = vpack.c.b16 %v4782, %v4780
    %v4831 = vpack.c.b16 %v4783, %v4781
    %v4832 = vpack.c.b16 %v4786, %v4784
    %v4833 = vpack.c.b16 %v4787, %v4785
    %v4834 = vpack.c.b16 %v4790, %v4788
    %v4835 = vpack.c.b16 %v4791, %v4789
    %v4836 = vpack.c.b16 %v4794, %v4792
    %v4837 = vpack.c.b16 %v4795, %v4793
    %v4838 = vpack.c.b16 %v4798, %v4796
    %v4839 = vpack.c.b16 %v4799, %v4797
    %v4840 = vpack.c.b16 %v4802, %v4800
    %v4841 = vpack.c.b16 %v4803, %v4801
    %v4842 = vpack.c.b16 %v4806, %v4804
    %v4843 = vpack.c.b16 %v4807, %v4805
    %v4844 = vpack.c.b16 %v4810, %v4808
    %v4845 = vpack.c.b16 %v4811, %v4809
    %v4846 = vpack.c.b16 %v4814, %v4812
    %v4847 = vpack.c.b16 %v4815, %v4813
    %4880 = vmatprep.subr.bf16.mxu0 %v4831
    %4881 = vmatpush1.bf16.msra.mxu0 %v4830
    %4882 = vmatprep.subr.bf16.mxu0 %v4829
    %4883 = vmatpush1.bf16.msra.mxu0 %v4828
    %4884 = vmatprep.subr.bf16.mxu0 %v4827
    %4885 = vmatpush1.bf16.msra.mxu0 %v4826
    %4886 = vmatprep.subr.bf16.mxu0 %v4825
    %4887 = vmatpush1.bf16.msra.mxu0 %v4824
    %4888 = vmatprep.subr.bf16.mxu0 %v4823
    %4889 = vmatpush1.bf16.msra.mxu0 %v4822
    %4890 = vmatprep.subr.bf16.mxu0 %v4821
    %4891 = vmatpush1.bf16.msra.mxu0 %v4820
    %4892 = vmatprep.subr.bf16.mxu0 %v4819
    %4893 = vmatpush1.bf16.msra.mxu0 %v4818
    %4894 = vmatprep.subr.bf16.mxu0 %v4817
    %4895 = vmatpush1.bf16.msra.mxu0 %v4816
    %4896 = vmatprep.subr.bf16.mxu0 %v4847
    %4897 = vmatpush2.bf16.msra.mxu0 %v4846
    %4898 = vmatprep.subr.bf16.mxu0 %v4845
    %4899 = vmatpush2.bf16.msra.mxu0 %v4844
    %4900 = vmatprep.subr.bf16.mxu0 %v4843
    %4901 = vmatpush2.bf16.msra.mxu0 %v4842
    %4902 = vmatprep.subr.bf16.mxu0 %v4841
    %4903 = vmatpush2.bf16.msra.mxu0 %v4840
    %4904 = vmatprep.subr.bf16.mxu0 %v4839
    %4905 = vmatpush2.bf16.msra.mxu0 %v4838
    %4906 = vmatprep.subr.bf16.mxu0 %v4837
    %4907 = vmatpush2.bf16.msra.mxu0 %v4836
    %4908 = vmatprep.subr.bf16.mxu0 %v4835
    %4909 = vmatpush2.bf16.msra.mxu0 %v4834
    %4910 = vmatprep.subr.bf16.mxu0 %v4833
    %4911 = vmatpush2.bf16.msra.mxu0 %v4832
    %4912 = vmatprep.mubr.bf16.mxu0 %v4673
    %4913 = vmatmul.mubr.bf16.gmra.mxu0 %v4672
    %v4914 = vpop.f32.mrf.mxu0
    %v4915 = vadd.f32 %v4713, %v4914
    %v4916 = vpop.f32.mrf.mxu0
    %v4917 = vadd.f32 %v4717, %v4916
    %v4918 = vpop.f32.mrf.mxu0
    %v4919 = vpop.f32.mrf.mxu0
    %4920 = vdwg.mxu0
    %v4921 = vmax.f32 %v4915, 0.0
    %v4922 = vmax.f32 %v4917, 0.0
    %v4923 = vpack.c.bf16 %v4921, %v4921
    %v4924 = vpack.c.bf16 %v4922, %v4922
    %s4925 = scalar_lea.vmem [#allocation11], 512
    %v4926 = vld [vmem:[%s4925] sm:$0xff]
    %v4927 = vld [vmem:[%s4925 + $0x8] sm:$0xff]
    %v4928 = vld [vmem:[%s4925 + $0x10] sm:$0xff]
    %v4929 = vld [vmem:[%s4925 + $0x18] sm:$0xff]
    %v4930 = vld [vmem:[%s4925 + $0x20] sm:$0xff]
    %v4931 = vld [vmem:[%s4925 + $0x28] sm:$0xff]
    %v4932 = vld [vmem:[%s4925 + $0x30] sm:$0xff]
    %v4933 = vld [vmem:[%s4925 + $0x38] sm:$0xff]
    %v4934 = vld [vmem:[%s4925 + $0x40] sm:$0xff]
    %v4935 = vld [vmem:[%s4925 + $0x48] sm:$0xff]
    %v4936 = vld [vmem:[%s4925 + $0x50] sm:$0xff]
    %v4937 = vld [vmem:[%s4925 + $0x58] sm:$0xff]
    %v4938 = vld [vmem:[%s4925 + $0x60] sm:$0xff]
    %v4939 = vld [vmem:[%s4925 + $0x68] sm:$0xff]
    %v4940 = vld [vmem:[%s4925 + $0x70] sm:$0xff]
    %v4941 = vld [vmem:[%s4925 + $0x78] sm:$0xff]
    %v4942 = vld [vmem:[%s4925 + $0x80] sm:$0xff]
    %v4943 = vld [vmem:[%s4925 + $0x88] sm:$0xff]
    %v4944 = vld [vmem:[%s4925 + $0x90] sm:$0xff]
    %v4945 = vld [vmem:[%s4925 + $0x98] sm:$0xff]
    %v4946 = vld [vmem:[%s4925 + $0xa0] sm:$0xff]
    %v4947 = vld [vmem:[%s4925 + $0xa8] sm:$0xff]
    %v4948 = vld [vmem:[%s4925 + $0xb0] sm:$0xff]
    %v4949 = vld [vmem:[%s4925 + $0xb8] sm:$0xff]
    %v4950 = vld [vmem:[%s4925 + $0xc0] sm:$0xff]
    %v4951 = vld [vmem:[%s4925 + $0xc8] sm:$0xff]
    %v4952 = vld [vmem:[%s4925 + $0xd0] sm:$0xff]
    %v4953 = vld [vmem:[%s4925 + $0xd8] sm:$0xff]
    %v4954 = vld [vmem:[%s4925 + $0xe0] sm:$0xff]
    %v4955 = vld [vmem:[%s4925 + $0xe8] sm:$0xff]
    %v4956 = vld [vmem:[%s4925 + $0xf0] sm:$0xff]
    %v4957 = vld [vmem:[%s4925 + $0xf8] sm:$0xff]
    %s4958 = scalar_lea.vmem [#allocation14], 48
    %v4959 = vld [vmem:[%s4958] ss:$8 sm:$0x3]
    %v4961 = vlaneseq
    %v4962 = vshrl.u32 %v4961, 7
    %v4963 = vsub.s32 0, %v4962
    %v4964 = vrot.slane %v4959, %v4963
    %v4965 = vlaneseq
    %v4966 = vshrl.u32 %v4965, 7
    %v4967 = vsub.s32 1, %v4966
    %v4968 = vrot.slane %v4959, %v4967
    %v5003 = vunpack.c.l.b16 %v4926
    %v5004 = vunpack.c.h.b16 %v4926
    %v5005 = vunpack.c.l.b16 %v4927
    %v5006 = vunpack.c.h.b16 %v4927
    %v5007 = vunpack.c.l.b16 %v4928
    %v5008 = vunpack.c.h.b16 %v4928
    %v5009 = vunpack.c.l.b16 %v4929
    %v5010 = vunpack.c.h.b16 %v4929
    %v5011 = vunpack.c.l.b16 %v4930
    %v5012 = vunpack.c.h.b16 %v4930
    %v5013 = vunpack.c.l.b16 %v4931
    %v5014 = vunpack.c.h.b16 %v4931
    %v5015 = vunpack.c.l.b16 %v4932
    %v5016 = vunpack.c.h.b16 %v4932
    %v5017 = vunpack.c.l.b16 %v4933
    %v5018 = vunpack.c.h.b16 %v4933
    %v5019 = vunpack.c.l.b16 %v4934
    %v5020 = vunpack.c.h.b16 %v4934
    %v5021 = vunpack.c.l.b16 %v4935
    %v5022 = vunpack.c.h.b16 %v4935
    %v5023 = vunpack.c.l.b16 %v4936
    %v5024 = vunpack.c.h.b16 %v4936
    %v5025 = vunpack.c.l.b16 %v4937
    %v5026 = vunpack.c.h.b16 %v4937
    %v5027 = vunpack.c.l.b16 %v4938
    %v5028 = vunpack.c.h.b16 %v4938
    %v5029 = vunpack.c.l.b16 %v4939
    %v5030 = vunpack.c.h.b16 %v4939
    %v5031 = vunpack.c.l.b16 %v4940
    %v5032 = vunpack.c.h.b16 %v4940
    %v5033 = vunpack.c.l.b16 %v4941
    %v5034 = vunpack.c.h.b16 %v4941
    %v5035 = vunpack.c.l.b16 %v4942
    %v5036 = vunpack.c.h.b16 %v4942
    %v5037 = vunpack.c.l.b16 %v4943
    %v5038 = vunpack.c.h.b16 %v4943
    %v5039 = vunpack.c.l.b16 %v4944
    %v5040 = vunpack.c.h.b16 %v4944
    %v5041 = vunpack.c.l.b16 %v4945
    %v5042 = vunpack.c.h.b16 %v4945
    %v5043 = vunpack.c.l.b16 %v4946
    %v5044 = vunpack.c.h.b16 %v4946
    %v5045 = vunpack.c.l.b16 %v4947
    %v5046 = vunpack.c.h.b16 %v4947
    %v5047 = vunpack.c.l.b16 %v4948
    %v5048 = vunpack.c.h.b16 %v4948
    %v5049 = vunpack.c.l.b16 %v4949
    %v5050 = vunpack.c.h.b16 %v4949
    %v5051 = vunpack.c.l.b16 %v4950
    %v5052 = vunpack.c.h.b16 %v4950
    %v5053 = vunpack.c.l.b16 %v4951
    %v5054 = vunpack.c.h.b16 %v4951
    %v5055 = vunpack.c.l.b16 %v4952
    %v5056 = vunpack.c.h.b16 %v4952
    %v5057 = vunpack.c.l.b16 %v4953
    %v5058 = vunpack.c.h.b16 %v4953
    %v5059 = vunpack.c.l.b16 %v4954
    %v5060 = vunpack.c.h.b16 %v4954
    %v5061 = vunpack.c.l.b16 %v4955
    %v5062 = vunpack.c.h.b16 %v4955
    %v5063 = vunpack.c.l.b16 %v4956
    %v5064 = vunpack.c.h.b16 %v4956
    %v5065 = vunpack.c.l.b16 %v4957
    %v5066 = vunpack.c.h.b16 %v4957
    %v5067 = vpack.c.b16 %v5005, %v5003
    %v5068 = vpack.c.b16 %v5006, %v5004
    %v5069 = vpack.c.b16 %v5009, %v5007
    %v5070 = vpack.c.b16 %v5010, %v5008
    %v5071 = vpack.c.b16 %v5013, %v5011
    %v5072 = vpack.c.b16 %v5014, %v5012
    %v5073 = vpack.c.b16 %v5017, %v5015
    %v5074 = vpack.c.b16 %v5018, %v5016
    %v5075 = vpack.c.b16 %v5021, %v5019
    %v5076 = vpack.c.b16 %v5022, %v5020
    %v5077 = vpack.c.b16 %v5025, %v5023
    %v5078 = vpack.c.b16 %v5026, %v5024
    %v5079 = vpack.c.b16 %v5029, %v5027
    %v5080 = vpack.c.b16 %v5030, %v5028
    %v5081 = vpack.c.b16 %v5033, %v5031
    %v5082 = vpack.c.b16 %v5034, %v5032
    %v5083 = vpack.c.b16 %v5037, %v5035
    %v5084 = vpack.c.b16 %v5038, %v5036
    %v5085 = vpack.c.b16 %v5041, %v5039
    %v5086 = vpack.c.b16 %v5042, %v5040
    %v5087 = vpack.c.b16 %v5045, %v5043
    %v5088 = vpack.c.b16 %v5046, %v5044
    %v5089 = vpack.c.b16 %v5049, %v5047
    %v5090 = vpack.c.b16 %v5050, %v5048
    %v5091 = vpack.c.b16 %v5053, %v5051
    %v5092 = vpack.c.b16 %v5054, %v5052
    %v5093 = vpack.c.b16 %v5057, %v5055
    %v5094 = vpack.c.b16 %v5058, %v5056
    %v5095 = vpack.c.b16 %v5061, %v5059
    %v5096 = vpack.c.b16 %v5062, %v5060
    %v5097 = vpack.c.b16 %v5065, %v5063
    %v5098 = vpack.c.b16 %v5066, %v5064
    %5131 = vmatprep.subr.bf16.mxu0 %v5082
    %5132 = vmatpush1.bf16.msra.mxu0 %v5081
    %5133 = vmatprep.subr.bf16.mxu0 %v5080
    %5134 = vmatpush1.bf16.msra.mxu0 %v5079
    %5135 = vmatprep.subr.bf16.mxu0 %v5078
    %5136 = vmatpush1.bf16.msra.mxu0 %v5077
    %5137 = vmatprep.subr.bf16.mxu0 %v5076
    %5138 = vmatpush1.bf16.msra.mxu0 %v5075
    %5139 = vmatprep.subr.bf16.mxu0 %v5074
    %5140 = vmatpush1.bf16.msra.mxu0 %v5073
    %5141 = vmatprep.subr.bf16.mxu0 %v5072
    %5142 = vmatpush1.bf16.msra.mxu0 %v5071
    %5143 = vmatprep.subr.bf16.mxu0 %v5070
    %5144 = vmatpush1.bf16.msra.mxu0 %v5069
    %5145 = vmatprep.subr.bf16.mxu0 %v5068
    %5146 = vmatpush1.bf16.msra.mxu0 %v5067
    %5147 = vmatprep.subr.bf16.mxu0 %v5098
    %5148 = vmatpush2.bf16.msra.mxu0 %v5097
    %5149 = vmatprep.subr.bf16.mxu0 %v5096
    %5150 = vmatpush2.bf16.msra.mxu0 %v5095
    %5151 = vmatprep.subr.bf16.mxu0 %v5094
    %5152 = vmatpush2.bf16.msra.mxu0 %v5093
    %5153 = vmatprep.subr.bf16.mxu0 %v5092
    %5154 = vmatpush2.bf16.msra.mxu0 %v5091
    %5155 = vmatprep.subr.bf16.mxu0 %v5090
    %5156 = vmatpush2.bf16.msra.mxu0 %v5089
    %5157 = vmatprep.subr.bf16.mxu0 %v5088
    %5158 = vmatpush2.bf16.msra.mxu0 %v5087
    %5159 = vmatprep.subr.bf16.mxu0 %v5086
    %5160 = vmatpush2.bf16.msra.mxu0 %v5085
    %5161 = vmatprep.subr.bf16.mxu0 %v5084
    %5162 = vmatpush2.bf16.msra.mxu0 %v5083
    %5163 = vmatprep.mubr.bf16.mxu0 %v4924
    %5164 = vmatmul.mubr.bf16.gmra.mxu0 %v4923
    %v5165 = vpop.f32.mrf.mxu0
    %v5166 = vadd.f32 %v4964, %v5165
    %v5167 = vpop.f32.mrf.mxu0
    %v5168 = vadd.f32 %v4968, %v5167
    %v5169 = vpop.f32.mrf.mxu0
    %v5170 = vpop.f32.mrf.mxu0
    %5171 = vdwg.mxu0
    %v5172 = vmax.f32 %v5166, 0.0
    %v5173 = vmax.f32 %v5168, 0.0
    %v5174 = vpack.c.bf16 %v5172, %v5172
    %v5175 = vpack.c.bf16 %v5173, %v5173
    %s5176 = scalar_lea.vmem [#allocation11], 768
    %v5177 = vld [vmem:[%s5176] sm:$0xff]
    %v5178 = vld [vmem:[%s5176 + $0x8] sm:$0xff]
    %v5179 = vld [vmem:[%s5176 + $0x10] sm:$0xff]
    %v5180 = vld [vmem:[%s5176 + $0x18] sm:$0xff]
    %v5181 = vld [vmem:[%s5176 + $0x20] sm:$0xff]
    %v5182 = vld [vmem:[%s5176 + $0x28] sm:$0xff]
    %v5183 = vld [vmem:[%s5176 + $0x30] sm:$0xff]
    %v5184 = vld [vmem:[%s5176 + $0x38] sm:$0xff]
    %v5185 = vld [vmem:[%s5176 + $0x40] sm:$0xff]
    %v5186 = vld [vmem:[%s5176 + $0x48] sm:$0xff]
    %v5187 = vld [vmem:[%s5176 + $0x50] sm:$0xff]
    %v5188 = vld [vmem:[%s5176 + $0x58] sm:$0xff]
    %v5189 = vld [vmem:[%s5176 + $0x60] sm:$0xff]
    %v5190 = vld [vmem:[%s5176 + $0x68] sm:$0xff]
    %v5191 = vld [vmem:[%s5176 + $0x70] sm:$0xff]
    %v5192 = vld [vmem:[%s5176 + $0x78] sm:$0xff]
    %v5193 = vld [vmem:[%s5176 + $0x80] sm:$0xff]
    %v5194 = vld [vmem:[%s5176 + $0x88] sm:$0xff]
    %v5195 = vld [vmem:[%s5176 + $0x90] sm:$0xff]
    %v5196 = vld [vmem:[%s5176 + $0x98] sm:$0xff]
    %v5197 = vld [vmem:[%s5176 + $0xa0] sm:$0xff]
    %v5198 = vld [vmem:[%s5176 + $0xa8] sm:$0xff]
    %v5199 = vld [vmem:[%s5176 + $0xb0] sm:$0xff]
    %v5200 = vld [vmem:[%s5176 + $0xb8] sm:$0xff]
    %v5201 = vld [vmem:[%s5176 + $0xc0] sm:$0xff]
    %v5202 = vld [vmem:[%s5176 + $0xc8] sm:$0xff]
    %v5203 = vld [vmem:[%s5176 + $0xd0] sm:$0xff]
    %v5204 = vld [vmem:[%s5176 + $0xd8] sm:$0xff]
    %v5205 = vld [vmem:[%s5176 + $0xe0] sm:$0xff]
    %v5206 = vld [vmem:[%s5176 + $0xe8] sm:$0xff]
    %v5207 = vld [vmem:[%s5176 + $0xf0] sm:$0xff]
    %v5208 = vld [vmem:[%s5176 + $0xf8] sm:$0xff]
    %s5209 = scalar_lea.vmem [#allocation14], 49
    %v5210 = vld [vmem:[%s5209] ss:$8 sm:$0x3]
    %v5212 = vlaneseq
    %v5213 = vshrl.u32 %v5212, 7
    %v5214 = vsub.s32 0, %v5213
    %v5215 = vrot.slane %v5210, %v5214
    %v5216 = vlaneseq
    %v5217 = vshrl.u32 %v5216, 7
    %v5218 = vsub.s32 1, %v5217
    %v5219 = vrot.slane %v5210, %v5218
    %v5254 = vunpack.c.l.b16 %v5177
    %v5255 = vunpack.c.h.b16 %v5177
    %v5256 = vunpack.c.l.b16 %v5178
    %v5257 = vunpack.c.h.b16 %v5178
    %v5258 = vunpack.c.l.b16 %v5179
    %v5259 = vunpack.c.h.b16 %v5179
    %v5260 = vunpack.c.l.b16 %v5180
    %v5261 = vunpack.c.h.b16 %v5180
    %v5262 = vunpack.c.l.b16 %v5181
    %v5263 = vunpack.c.h.b16 %v5181
    %v5264 = vunpack.c.l.b16 %v5182
    %v5265 = vunpack.c.h.b16 %v5182
    %v5266 = vunpack.c.l.b16 %v5183
    %v5267 = vunpack.c.h.b16 %v5183
    %v5268 = vunpack.c.l.b16 %v5184
    %v5269 = vunpack.c.h.b16 %v5184
    %v5270 = vunpack.c.l.b16 %v5185
    %v5271 = vunpack.c.h.b16 %v5185
    %v5272 = vunpack.c.l.b16 %v5186
    %v5273 = vunpack.c.h.b16 %v5186
    %v5274 = vunpack.c.l.b16 %v5187
    %v5275 = vunpack.c.h.b16 %v5187
    %v5276 = vunpack.c.l.b16 %v5188
    %v5277 = vunpack.c.h.b16 %v5188
    %v5278 = vunpack.c.l.b16 %v5189
    %v5279 = vunpack.c.h.b16 %v5189
    %v5280 = vunpack.c.l.b16 %v5190
    %v5281 = vunpack.c.h.b16 %v5190
    %v5282 = vunpack.c.l.b16 %v5191
    %v5283 = vunpack.c.h.b16 %v5191
    %v5284 = vunpack.c.l.b16 %v5192
    %v5285 = vunpack.c.h.b16 %v5192
    %v5286 = vunpack.c.l.b16 %v5193
    %v5287 = vunpack.c.h.b16 %v5193
    %v5288 = vunpack.c.l.b16 %v5194
    %v5289 = vunpack.c.h.b16 %v5194
    %v5290 = vunpack.c.l.b16 %v5195
    %v5291 = vunpack.c.h.b16 %v5195
    %v5292 = vunpack.c.l.b16 %v5196
    %v5293 = vunpack.c.h.b16 %v5196
    %v5294 = vunpack.c.l.b16 %v5197
    %v5295 = vunpack.c.h.b16 %v5197
    %v5296 = vunpack.c.l.b16 %v5198
    %v5297 = vunpack.c.h.b16 %v5198
    %v5298 = vunpack.c.l.b16 %v5199
    %v5299 = vunpack.c.h.b16 %v5199
    %v5300 = vunpack.c.l.b16 %v5200
    %v5301 = vunpack.c.h.b16 %v5200
    %v5302 = vunpack.c.l.b16 %v5201
    %v5303 = vunpack.c.h.b16 %v5201
    %v5304 = vunpack.c.l.b16 %v5202
    %v5305 = vunpack.c.h.b16 %v5202
    %v5306 = vunpack.c.l.b16 %v5203
    %v5307 = vunpack.c.h.b16 %v5203
    %v5308 = vunpack.c.l.b16 %v5204
    %v5309 = vunpack.c.h.b16 %v5204
    %v5310 = vunpack.c.l.b16 %v5205
    %v5311 = vunpack.c.h.b16 %v5205
    %v5312 = vunpack.c.l.b16 %v5206
    %v5313 = vunpack.c.h.b16 %v5206
    %v5314 = vunpack.c.l.b16 %v5207
    %v5315 = vunpack.c.h.b16 %v5207
    %v5316 = vunpack.c.l.b16 %v5208
    %v5317 = vunpack.c.h.b16 %v5208
    %v5318 = vpack.c.b16 %v5256, %v5254
    %v5319 = vpack.c.b16 %v5257, %v5255
    %v5320 = vpack.c.b16 %v5260, %v5258
    %v5321 = vpack.c.b16 %v5261, %v5259
    %v5322 = vpack.c.b16 %v5264, %v5262
    %v5323 = vpack.c.b16 %v5265, %v5263
    %v5324 = vpack.c.b16 %v5268, %v5266
    %v5325 = vpack.c.b16 %v5269, %v5267
    %v5326 = vpack.c.b16 %v5272, %v5270
    %v5327 = vpack.c.b16 %v5273, %v5271
    %v5328 = vpack.c.b16 %v5276, %v5274
    %v5329 = vpack.c.b16 %v5277, %v5275
    %v5330 = vpack.c.b16 %v5280, %v5278
    %v5331 = vpack.c.b16 %v5281, %v5279
    %v5332 = vpack.c.b16 %v5284, %v5282
    %v5333 = vpack.c.b16 %v5285, %v5283
    %v5334 = vpack.c.b16 %v5288, %v5286
    %v5335 = vpack.c.b16 %v5289, %v5287
    %v5336 = vpack.c.b16 %v5292, %v5290
    %v5337 = vpack.c.b16 %v5293, %v5291
    %v5338 = vpack.c.b16 %v5296, %v5294
    %v5339 = vpack.c.b16 %v5297, %v5295
    %v5340 = vpack.c.b16 %v5300, %v5298
    %v5341 = vpack.c.b16 %v5301, %v5299
    %v5342 = vpack.c.b16 %v5304, %v5302
    %v5343 = vpack.c.b16 %v5305, %v5303
    %v5344 = vpack.c.b16 %v5308, %v5306
    %v5345 = vpack.c.b16 %v5309, %v5307
    %v5346 = vpack.c.b16 %v5312, %v5310
    %v5347 = vpack.c.b16 %v5313, %v5311
    %v5348 = vpack.c.b16 %v5316, %v5314
    %v5349 = vpack.c.b16 %v5317, %v5315
    %5382 = vmatprep.subr.bf16.mxu0 %v5333
    %5383 = vmatpush1.bf16.msra.mxu0 %v5332
    %5384 = vmatprep.subr.bf16.mxu0 %v5331
    %5385 = vmatpush1.bf16.msra.mxu0 %v5330
    %5386 = vmatprep.subr.bf16.mxu0 %v5329
    %5387 = vmatpush1.bf16.msra.mxu0 %v5328
    %5388 = vmatprep.subr.bf16.mxu0 %v5327
    %5389 = vmatpush1.bf16.msra.mxu0 %v5326
    %5390 = vmatprep.subr.bf16.mxu0 %v5325
    %5391 = vmatpush1.bf16.msra.mxu0 %v5324
    %5392 = vmatprep.subr.bf16.mxu0 %v5323
    %5393 = vmatpush1.bf16.msra.mxu0 %v5322
    %5394 = vmatprep.subr.bf16.mxu0 %v5321
    %5395 = vmatpush1.bf16.msra.mxu0 %v5320
    %5396 = vmatprep.subr.bf16.mxu0 %v5319
    %5397 = vmatpush1.bf16.msra.mxu0 %v5318
    %5398 = vmatprep.subr.bf16.mxu0 %v5349
    %5399 = vmatpush2.bf16.msra.mxu0 %v5348
    %5400 = vmatprep.subr.bf16.mxu0 %v5347
    %5401 = vmatpush2.bf16.msra.mxu0 %v5346
    %5402 = vmatprep.subr.bf16.mxu0 %v5345
    %5403 = vmatpush2.bf16.msra.mxu0 %v5344
    %5404 = vmatprep.subr.bf16.mxu0 %v5343
    %5405 = vmatpush2.bf16.msra.mxu0 %v5342
    %5406 = vmatprep.subr.bf16.mxu0 %v5341
    %5407 = vmatpush2.bf16.msra.mxu0 %v5340
    %5408 = vmatprep.subr.bf16.mxu0 %v5339
    %5409 = vmatpush2.bf16.msra.mxu0 %v5338
    %5410 = vmatprep.subr.bf16.mxu0 %v5337
    %5411 = vmatpush2.bf16.msra.mxu0 %v5336
    %5412 = vmatprep.subr.bf16.mxu0 %v5335
    %5413 = vmatpush2.bf16.msra.mxu0 %v5334
    %5414 = vmatprep.mubr.bf16.mxu0 %v4423
    %5415 = vmatmul.mubr.bf16.gmra.mxu0 %v4422
    %v5416 = vpop.f32.mrf.mxu0
    %v5417 = vadd.f32 %v5215, %v5416
    %v5418 = vpop.f32.mrf.mxu0
    %v5419 = vadd.f32 %v5219, %v5418
    %v5420 = vpop.f32.mrf.mxu0
    %v5421 = vpop.f32.mrf.mxu0
    %5422 = vdwg.mxu0
    %v5423 = vmax.f32 %v5417, 0.0
    %v5424 = vmax.f32 %v5419, 0.0
    %v5425 = vpack.c.bf16 %v5423, %v5423
    %v5426 = vpack.c.bf16 %v5424, %v5424
    %s5427 = scalar_lea.vmem [#allocation11], 1024
    %v5428 = vld [vmem:[%s5427] sm:$0xff]
    %v5429 = vld [vmem:[%s5427 + $0x8] sm:$0xff]
    %v5430 = vld [vmem:[%s5427 + $0x10] sm:$0xff]
    %v5431 = vld [vmem:[%s5427 + $0x18] sm:$0xff]
    %v5432 = vld [vmem:[%s5427 + $0x20] sm:$0xff]
    %v5433 = vld [vmem:[%s5427 + $0x28] sm:$0xff]
    %v5434 = vld [vmem:[%s5427 + $0x30] sm:$0xff]
    %v5435 = vld [vmem:[%s5427 + $0x38] sm:$0xff]
    %v5436 = vld [vmem:[%s5427 + $0x40] sm:$0xff]
    %v5437 = vld [vmem:[%s5427 + $0x48] sm:$0xff]
    %v5438 = vld [vmem:[%s5427 + $0x50] sm:$0xff]
    %v5439 = vld [vmem:[%s5427 + $0x58] sm:$0xff]
    %v5440 = vld [vmem:[%s5427 + $0x60] sm:$0xff]
    %v5441 = vld [vmem:[%s5427 + $0x68] sm:$0xff]
    %v5442 = vld [vmem:[%s5427 + $0x70] sm:$0xff]
    %v5443 = vld [vmem:[%s5427 + $0x78] sm:$0xff]
    %v5444 = vld [vmem:[%s5427 + $0x80] sm:$0xff]
    %v5445 = vld [vmem:[%s5427 + $0x88] sm:$0xff]
    %v5446 = vld [vmem:[%s5427 + $0x90] sm:$0xff]
    %v5447 = vld [vmem:[%s5427 + $0x98] sm:$0xff]
    %v5448 = vld [vmem:[%s5427 + $0xa0] sm:$0xff]
    %v5449 = vld [vmem:[%s5427 + $0xa8] sm:$0xff]
    %v5450 = vld [vmem:[%s5427 + $0xb0] sm:$0xff]
    %v5451 = vld [vmem:[%s5427 + $0xb8] sm:$0xff]
    %v5452 = vld [vmem:[%s5427 + $0xc0] sm:$0xff]
    %v5453 = vld [vmem:[%s5427 + $0xc8] sm:$0xff]
    %v5454 = vld [vmem:[%s5427 + $0xd0] sm:$0xff]
    %v5455 = vld [vmem:[%s5427 + $0xd8] sm:$0xff]
    %v5456 = vld [vmem:[%s5427 + $0xe0] sm:$0xff]
    %v5457 = vld [vmem:[%s5427 + $0xe8] sm:$0xff]
    %v5458 = vld [vmem:[%s5427 + $0xf0] sm:$0xff]
    %v5459 = vld [vmem:[%s5427 + $0xf8] sm:$0xff]
    %s5460 = scalar_lea.vmem [#allocation14], 50
    %v5461 = vld [vmem:[%s5460] ss:$8 sm:$0x3]
    %v5463 = vlaneseq
    %v5464 = vshrl.u32 %v5463, 7
    %v5465 = vsub.s32 0, %v5464
    %v5466 = vrot.slane %v5461, %v5465
    %v5467 = vlaneseq
    %v5468 = vshrl.u32 %v5467, 7
    %v5469 = vsub.s32 1, %v5468
    %v5470 = vrot.slane %v5461, %v5469
    %v5505 = vunpack.c.l.b16 %v5428
    %v5506 = vunpack.c.h.b16 %v5428
    %v5507 = vunpack.c.l.b16 %v5429
    %v5508 = vunpack.c.h.b16 %v5429
    %v5509 = vunpack.c.l.b16 %v5430
    %v5510 = vunpack.c.h.b16 %v5430
    %v5511 = vunpack.c.l.b16 %v5431
    %v5512 = vunpack.c.h.b16 %v5431
    %v5513 = vunpack.c.l.b16 %v5432
    %v5514 = vunpack.c.h.b16 %v5432
    %v5515 = vunpack.c.l.b16 %v5433
    %v5516 = vunpack.c.h.b16 %v5433
    %v5517 = vunpack.c.l.b16 %v5434
    %v5518 = vunpack.c.h.b16 %v5434
    %v5519 = vunpack.c.l.b16 %v5435
    %v5520 = vunpack.c.h.b16 %v5435
    %v5521 = vunpack.c.l.b16 %v5436
    %v5522 = vunpack.c.h.b16 %v5436
    %v5523 = vunpack.c.l.b16 %v5437
    %v5524 = vunpack.c.h.b16 %v5437
    %v5525 = vunpack.c.l.b16 %v5438
    %v5526 = vunpack.c.h.b16 %v5438
    %v5527 = vunpack.c.l.b16 %v5439
    %v5528 = vunpack.c.h.b16 %v5439
    %v5529 = vunpack.c.l.b16 %v5440
    %v5530 = vunpack.c.h.b16 %v5440
    %v5531 = vunpack.c.l.b16 %v5441
    %v5532 = vunpack.c.h.b16 %v5441
    %v5533 = vunpack.c.l.b16 %v5442
    %v5534 = vunpack.c.h.b16 %v5442
    %v5535 = vunpack.c.l.b16 %v5443
    %v5536 = vunpack.c.h.b16 %v5443
    %v5537 = vunpack.c.l.b16 %v5444
    %v5538 = vunpack.c.h.b16 %v5444
    %v5539 = vunpack.c.l.b16 %v5445
    %v5540 = vunpack.c.h.b16 %v5445
    %v5541 = vunpack.c.l.b16 %v5446
    %v5542 = vunpack.c.h.b16 %v5446
    %v5543 = vunpack.c.l.b16 %v5447
    %v5544 = vunpack.c.h.b16 %v5447
    %v5545 = vunpack.c.l.b16 %v5448
    %v5546 = vunpack.c.h.b16 %v5448
    %v5547 = vunpack.c.l.b16 %v5449
    %v5548 = vunpack.c.h.b16 %v5449
    %v5549 = vunpack.c.l.b16 %v5450
    %v5550 = vunpack.c.h.b16 %v5450
    %v5551 = vunpack.c.l.b16 %v5451
    %v5552 = vunpack.c.h.b16 %v5451
    %v5553 = vunpack.c.l.b16 %v5452
    %v5554 = vunpack.c.h.b16 %v5452
    %v5555 = vunpack.c.l.b16 %v5453
    %v5556 = vunpack.c.h.b16 %v5453
    %v5557 = vunpack.c.l.b16 %v5454
    %v5558 = vunpack.c.h.b16 %v5454
    %v5559 = vunpack.c.l.b16 %v5455
    %v5560 = vunpack.c.h.b16 %v5455
    %v5561 = vunpack.c.l.b16 %v5456
    %v5562 = vunpack.c.h.b16 %v5456
    %v5563 = vunpack.c.l.b16 %v5457
    %v5564 = vunpack.c.h.b16 %v5457
    %v5565 = vunpack.c.l.b16 %v5458
    %v5566 = vunpack.c.h.b16 %v5458
    %v5567 = vunpack.c.l.b16 %v5459
    %v5568 = vunpack.c.h.b16 %v5459
    %v5569 = vpack.c.b16 %v5507, %v5505
    %v5570 = vpack.c.b16 %v5508, %v5506
    %v5571 = vpack.c.b16 %v5511, %v5509
    %v5572 = vpack.c.b16 %v5512, %v5510
    %v5573 = vpack.c.b16 %v5515, %v5513
    %v5574 = vpack.c.b16 %v5516, %v5514
    %v5575 = vpack.c.b16 %v5519, %v5517
    %v5576 = vpack.c.b16 %v5520, %v5518
    %v5577 = vpack.c.b16 %v5523, %v5521
    %v5578 = vpack.c.b16 %v5524, %v5522
    %v5579 = vpack.c.b16 %v5527, %v5525
    %v5580 = vpack.c.b16 %v5528, %v5526
    %v5581 = vpack.c.b16 %v5531, %v5529
    %v5582 = vpack.c.b16 %v5532, %v5530
    %v5583 = vpack.c.b16 %v5535, %v5533
    %v5584 = vpack.c.b16 %v5536, %v5534
    %v5585 = vpack.c.b16 %v5539, %v5537
    %v5586 = vpack.c.b16 %v5540, %v5538
    %v5587 = vpack.c.b16 %v5543, %v5541
    %v5588 = vpack.c.b16 %v5544, %v5542
    %v5589 = vpack.c.b16 %v5547, %v5545
    %v5590 = vpack.c.b16 %v5548, %v5546
    %v5591 = vpack.c.b16 %v5551, %v5549
    %v5592 = vpack.c.b16 %v5552, %v5550
    %v5593 = vpack.c.b16 %v5555, %v5553
    %v5594 = vpack.c.b16 %v5556, %v5554
    %v5595 = vpack.c.b16 %v5559, %v5557
    %v5596 = vpack.c.b16 %v5560, %v5558
    %v5597 = vpack.c.b16 %v5563, %v5561
    %v5598 = vpack.c.b16 %v5564, %v5562
    %v5599 = vpack.c.b16 %v5567, %v5565
    %v5600 = vpack.c.b16 %v5568, %v5566
    %5633 = vmatprep.subr.bf16.mxu0 %v5584
    %5634 = vmatpush1.bf16.msra.mxu0 %v5583
    %5635 = vmatprep.subr.bf16.mxu0 %v5582
    %5636 = vmatpush1.bf16.msra.mxu0 %v5581
    %5637 = vmatprep.subr.bf16.mxu0 %v5580
    %5638 = vmatpush1.bf16.msra.mxu0 %v5579
    %5639 = vmatprep.subr.bf16.mxu0 %v5578
    %5640 = vmatpush1.bf16.msra.mxu0 %v5577
    %5641 = vmatprep.subr.bf16.mxu0 %v5576
    %5642 = vmatpush1.bf16.msra.mxu0 %v5575
    %5643 = vmatprep.subr.bf16.mxu0 %v5574
    %5644 = vmatpush1.bf16.msra.mxu0 %v5573
    %5645 = vmatprep.subr.bf16.mxu0 %v5572
    %5646 = vmatpush1.bf16.msra.mxu0 %v5571
    %5647 = vmatprep.subr.bf16.mxu0 %v5570
    %5648 = vmatpush1.bf16.msra.mxu0 %v5569
    %5649 = vmatprep.subr.bf16.mxu0 %v5600
    %5650 = vmatpush2.bf16.msra.mxu0 %v5599
    %5651 = vmatprep.subr.bf16.mxu0 %v5598
    %5652 = vmatpush2.bf16.msra.mxu0 %v5597
    %5653 = vmatprep.subr.bf16.mxu0 %v5596
    %5654 = vmatpush2.bf16.msra.mxu0 %v5595
    %5655 = vmatprep.subr.bf16.mxu0 %v5594
    %5656 = vmatpush2.bf16.msra.mxu0 %v5593
    %5657 = vmatprep.subr.bf16.mxu0 %v5592
    %5658 = vmatpush2.bf16.msra.mxu0 %v5591
    %5659 = vmatprep.subr.bf16.mxu0 %v5590
    %5660 = vmatpush2.bf16.msra.mxu0 %v5589
    %5661 = vmatprep.subr.bf16.mxu0 %v5588
    %5662 = vmatpush2.bf16.msra.mxu0 %v5587
    %5663 = vmatprep.subr.bf16.mxu0 %v5586
    %5664 = vmatpush2.bf16.msra.mxu0 %v5585
    %5665 = vmatprep.mubr.bf16.mxu0 %v5426
    %5666 = vmatmul.mubr.bf16.gmra.mxu0 %v5425
    %v5667 = vpop.f32.mrf.mxu0
    %v5668 = vadd.f32 %v5466, %v5667
    %v5669 = vpop.f32.mrf.mxu0
    %v5670 = vadd.f32 %v5470, %v5669
    %v5671 = vpop.f32.mrf.mxu0
    %v5672 = vpop.f32.mrf.mxu0
    %5673 = vdwg.mxu0
    %v5674 = vmax.f32 %v5668, 0.0
    %v5675 = vmax.f32 %v5670, 0.0
    %v5676 = vpack.c.bf16 %v5674, %v5674
    %v5677 = vpack.c.bf16 %v5675, %v5675
    %s5678 = scalar_lea.vmem [#allocation11], 1280
    %v5679 = vld [vmem:[%s5678] sm:$0xff]
    %v5680 = vld [vmem:[%s5678 + $0x8] sm:$0xff]
    %v5681 = vld [vmem:[%s5678 + $0x10] sm:$0xff]
    %v5682 = vld [vmem:[%s5678 + $0x18] sm:$0xff]
    %v5683 = vld [vmem:[%s5678 + $0x20] sm:$0xff]
    %v5684 = vld [vmem:[%s5678 + $0x28] sm:$0xff]
    %v5685 = vld [vmem:[%s5678 + $0x30] sm:$0xff]
    %v5686 = vld [vmem:[%s5678 + $0x38] sm:$0xff]
    %v5687 = vld [vmem:[%s5678 + $0x40] sm:$0xff]
    %v5688 = vld [vmem:[%s5678 + $0x48] sm:$0xff]
    %v5689 = vld [vmem:[%s5678 + $0x50] sm:$0xff]
    %v5690 = vld [vmem:[%s5678 + $0x58] sm:$0xff]
    %v5691 = vld [vmem:[%s5678 + $0x60] sm:$0xff]
    %v5692 = vld [vmem:[%s5678 + $0x68] sm:$0xff]
    %v5693 = vld [vmem:[%s5678 + $0x70] sm:$0xff]
    %v5694 = vld [vmem:[%s5678 + $0x78] sm:$0xff]
    %v5695 = vld [vmem:[%s5678 + $0x80] sm:$0xff]
    %v5696 = vld [vmem:[%s5678 + $0x88] sm:$0xff]
    %v5697 = vld [vmem:[%s5678 + $0x90] sm:$0xff]
    %v5698 = vld [vmem:[%s5678 + $0x98] sm:$0xff]
    %v5699 = vld [vmem:[%s5678 + $0xa0] sm:$0xff]
    %v5700 = vld [vmem:[%s5678 + $0xa8] sm:$0xff]
    %v5701 = vld [vmem:[%s5678 + $0xb0] sm:$0xff]
    %v5702 = vld [vmem:[%s5678 + $0xb8] sm:$0xff]
    %v5703 = vld [vmem:[%s5678 + $0xc0] sm:$0xff]
    %v5704 = vld [vmem:[%s5678 + $0xc8] sm:$0xff]
    %v5705 = vld [vmem:[%s5678 + $0xd0] sm:$0xff]
    %v5706 = vld [vmem:[%s5678 + $0xd8] sm:$0xff]
    %v5707 = vld [vmem:[%s5678 + $0xe0] sm:$0xff]
    %v5708 = vld [vmem:[%s5678 + $0xe8] sm:$0xff]
    %v5709 = vld [vmem:[%s5678 + $0xf0] sm:$0xff]
    %v5710 = vld [vmem:[%s5678 + $0xf8] sm:$0xff]
    %s5711 = scalar_lea.vmem [#allocation14], 51
    %v5712 = vld [vmem:[%s5711] ss:$8 sm:$0x3]
    %v5714 = vlaneseq
    %v5715 = vshrl.u32 %v5714, 7
    %v5716 = vsub.s32 0, %v5715
    %v5717 = vrot.slane %v5712, %v5716
    %v5718 = vlaneseq
    %v5719 = vshrl.u32 %v5718, 7
    %v5720 = vsub.s32 1, %v5719
    %v5721 = vrot.slane %v5712, %v5720
    %v5756 = vunpack.c.l.b16 %v5679
    %v5757 = vunpack.c.h.b16 %v5679
    %v5758 = vunpack.c.l.b16 %v5680
    %v5759 = vunpack.c.h.b16 %v5680
    %v5760 = vunpack.c.l.b16 %v5681
    %v5761 = vunpack.c.h.b16 %v5681
    %v5762 = vunpack.c.l.b16 %v5682
    %v5763 = vunpack.c.h.b16 %v5682
    %v5764 = vunpack.c.l.b16 %v5683
    %v5765 = vunpack.c.h.b16 %v5683
    %v5766 = vunpack.c.l.b16 %v5684
    %v5767 = vunpack.c.h.b16 %v5684
    %v5768 = vunpack.c.l.b16 %v5685
    %v5769 = vunpack.c.h.b16 %v5685
    %v5770 = vunpack.c.l.b16 %v5686
    %v5771 = vunpack.c.h.b16 %v5686
    %v5772 = vunpack.c.l.b16 %v5687
    %v5773 = vunpack.c.h.b16 %v5687
    %v5774 = vunpack.c.l.b16 %v5688
    %v5775 = vunpack.c.h.b16 %v5688
    %v5776 = vunpack.c.l.b16 %v5689
    %v5777 = vunpack.c.h.b16 %v5689
    %v5778 = vunpack.c.l.b16 %v5690
    %v5779 = vunpack.c.h.b16 %v5690
    %v5780 = vunpack.c.l.b16 %v5691
    %v5781 = vunpack.c.h.b16 %v5691
    %v5782 = vunpack.c.l.b16 %v5692
    %v5783 = vunpack.c.h.b16 %v5692
    %v5784 = vunpack.c.l.b16 %v5693
    %v5785 = vunpack.c.h.b16 %v5693
    %v5786 = vunpack.c.l.b16 %v5694
    %v5787 = vunpack.c.h.b16 %v5694
    %v5788 = vunpack.c.l.b16 %v5695
    %v5789 = vunpack.c.h.b16 %v5695
    %v5790 = vunpack.c.l.b16 %v5696
    %v5791 = vunpack.c.h.b16 %v5696
    %v5792 = vunpack.c.l.b16 %v5697
    %v5793 = vunpack.c.h.b16 %v5697
    %v5794 = vunpack.c.l.b16 %v5698
    %v5795 = vunpack.c.h.b16 %v5698
    %v5796 = vunpack.c.l.b16 %v5699
    %v5797 = vunpack.c.h.b16 %v5699
    %v5798 = vunpack.c.l.b16 %v5700
    %v5799 = vunpack.c.h.b16 %v5700
    %v5800 = vunpack.c.l.b16 %v5701
    %v5801 = vunpack.c.h.b16 %v5701
    %v5802 = vunpack.c.l.b16 %v5702
    %v5803 = vunpack.c.h.b16 %v5702
    %v5804 = vunpack.c.l.b16 %v5703
    %v5805 = vunpack.c.h.b16 %v5703
    %v5806 = vunpack.c.l.b16 %v5704
    %v5807 = vunpack.c.h.b16 %v5704
    %v5808 = vunpack.c.l.b16 %v5705
    %v5809 = vunpack.c.h.b16 %v5705
    %v5810 = vunpack.c.l.b16 %v5706
    %v5811 = vunpack.c.h.b16 %v5706
    %v5812 = vunpack.c.l.b16 %v5707
    %v5813 = vunpack.c.h.b16 %v5707
    %v5814 = vunpack.c.l.b16 %v5708
    %v5815 = vunpack.c.h.b16 %v5708
    %v5816 = vunpack.c.l.b16 %v5709
    %v5817 = vunpack.c.h.b16 %v5709
    %v5818 = vunpack.c.l.b16 %v5710
    %v5819 = vunpack.c.h.b16 %v5710
    %v5820 = vpack.c.b16 %v5758, %v5756
    %v5821 = vpack.c.b16 %v5759, %v5757
    %v5822 = vpack.c.b16 %v5762, %v5760
    %v5823 = vpack.c.b16 %v5763, %v5761
    %v5824 = vpack.c.b16 %v5766, %v5764
    %v5825 = vpack.c.b16 %v5767, %v5765
    %v5826 = vpack.c.b16 %v5770, %v5768
    %v5827 = vpack.c.b16 %v5771, %v5769
    %v5828 = vpack.c.b16 %v5774, %v5772
    %v5829 = vpack.c.b16 %v5775, %v5773
    %v5830 = vpack.c.b16 %v5778, %v5776
    %v5831 = vpack.c.b16 %v5779, %v5777
    %v5832 = vpack.c.b16 %v5782, %v5780
    %v5833 = vpack.c.b16 %v5783, %v5781
    %v5834 = vpack.c.b16 %v5786, %v5784
    %v5835 = vpack.c.b16 %v5787, %v5785
    %v5836 = vpack.c.b16 %v5790, %v5788
    %v5837 = vpack.c.b16 %v5791, %v5789
    %v5838 = vpack.c.b16 %v5794, %v5792
    %v5839 = vpack.c.b16 %v5795, %v5793
    %v5840 = vpack.c.b16 %v5798, %v5796
    %v5841 = vpack.c.b16 %v5799, %v5797
    %v5842 = vpack.c.b16 %v5802, %v5800
    %v5843 = vpack.c.b16 %v5803, %v5801
    %v5844 = vpack.c.b16 %v5806, %v5804
    %v5845 = vpack.c.b16 %v5807, %v5805
    %v5846 = vpack.c.b16 %v5810, %v5808
    %v5847 = vpack.c.b16 %v5811, %v5809
    %v5848 = vpack.c.b16 %v5814, %v5812
    %v5849 = vpack.c.b16 %v5815, %v5813
    %v5850 = vpack.c.b16 %v5818, %v5816
    %v5851 = vpack.c.b16 %v5819, %v5817
    %5884 = vmatprep.subr.bf16.mxu0 %v5835
    %5885 = vmatpush1.bf16.msra.mxu0 %v5834
    %5886 = vmatprep.subr.bf16.mxu0 %v5833
    %5887 = vmatpush1.bf16.msra.mxu0 %v5832
    %5888 = vmatprep.subr.bf16.mxu0 %v5831
    %5889 = vmatpush1.bf16.msra.mxu0 %v5830
    %5890 = vmatprep.subr.bf16.mxu0 %v5829
    %5891 = vmatpush1.bf16.msra.mxu0 %v5828
    %5892 = vmatprep.subr.bf16.mxu0 %v5827
    %5893 = vmatpush1.bf16.msra.mxu0 %v5826
    %5894 = vmatprep.subr.bf16.mxu0 %v5825
    %5895 = vmatpush1.bf16.msra.mxu0 %v5824
    %5896 = vmatprep.subr.bf16.mxu0 %v5823
    %5897 = vmatpush1.bf16.msra.mxu0 %v5822
    %5898 = vmatprep.subr.bf16.mxu0 %v5821
    %5899 = vmatpush1.bf16.msra.mxu0 %v5820
    %5900 = vmatprep.subr.bf16.mxu0 %v5851
    %5901 = vmatpush2.bf16.msra.mxu0 %v5850
    %5902 = vmatprep.subr.bf16.mxu0 %v5849
    %5903 = vmatpush2.bf16.msra.mxu0 %v5848
    %5904 = vmatprep.subr.bf16.mxu0 %v5847
    %5905 = vmatpush2.bf16.msra.mxu0 %v5846
    %5906 = vmatprep.subr.bf16.mxu0 %v5845
    %5907 = vmatpush2.bf16.msra.mxu0 %v5844
    %5908 = vmatprep.subr.bf16.mxu0 %v5843
    %5909 = vmatpush2.bf16.msra.mxu0 %v5842
    %5910 = vmatprep.subr.bf16.mxu0 %v5841
    %5911 = vmatpush2.bf16.msra.mxu0 %v5840
    %5912 = vmatprep.subr.bf16.mxu0 %v5839
    %5913 = vmatpush2.bf16.msra.mxu0 %v5838
    %5914 = vmatprep.subr.bf16.mxu0 %v5837
    %5915 = vmatpush2.bf16.msra.mxu0 %v5836
    %5916 = vmatprep.mubr.bf16.mxu0 %v5677
    %5917 = vmatmul.mubr.bf16.gmra.mxu0 %v5676
    %v5918 = vpop.f32.mrf.mxu0
    %v5919 = vadd.f32 %v5717, %v5918
    %v5920 = vpop.f32.mrf.mxu0
    %v5921 = vadd.f32 %v5721, %v5920
    %v5922 = vpop.f32.mrf.mxu0
    %v5923 = vpop.f32.mrf.mxu0
    %5924 = vdwg.mxu0
    %v5925 = vmax.f32 %v5919, 0.0
    %v5926 = vmax.f32 %v5921, 0.0
    %v5927 = vpack.c.bf16 %v5925, %v5925
    %v5928 = vpack.c.bf16 %v5926, %v5926
    %v5929 = vld [vmem:[#allocation13] sm:$0xf]
    %v5930 = vld [vmem:[#allocation13 + $0x4] sm:$0xf]
    %v5931 = vld [vmem:[#allocation13 + $0x8] sm:$0xf]
    %v5932 = vld [vmem:[#allocation13 + $0xc] sm:$0xf]
    %v5933 = vld [vmem:[#allocation13 + $0x10] sm:$0xf]
    %v5934 = vld [vmem:[#allocation13 + $0x14] sm:$0xf]
    %v5935 = vld [vmem:[#allocation13 + $0x18] sm:$0xf]
    %v5936 = vld [vmem:[#allocation13 + $0x1c] sm:$0xf]
    %v5937 = vld [vmem:[#allocation13 + $0x20] sm:$0xf]
    %v5938 = vld [vmem:[#allocation13 + $0x24] sm:$0xf]
    %v5939 = vld [vmem:[#allocation13 + $0x28] sm:$0xf]
    %v5940 = vld [vmem:[#allocation13 + $0x2c] sm:$0xf]
    %v5941 = vld [vmem:[#allocation13 + $0x30] sm:$0xf]
    %v5942 = vld [vmem:[#allocation13 + $0x34] sm:$0xf]
    %v5943 = vld [vmem:[#allocation13 + $0x38] sm:$0xf]
    %v5944 = vld [vmem:[#allocation13 + $0x3c] sm:$0xf]
    %v5945 = vld [vmem:[#allocation13 + $0x40] sm:$0xf]
    %v5946 = vld [vmem:[#allocation13 + $0x44] sm:$0xf]
    %v5947 = vld [vmem:[#allocation13 + $0x48] sm:$0xf]
    %v5948 = vld [vmem:[#allocation13 + $0x4c] sm:$0xf]
    %v5949 = vld [vmem:[#allocation13 + $0x50] sm:$0xf]
    %v5950 = vld [vmem:[#allocation13 + $0x54] sm:$0xf]
    %v5951 = vld [vmem:[#allocation13 + $0x58] sm:$0xf]
    %v5952 = vld [vmem:[#allocation13 + $0x5c] sm:$0xf]
    %v5953 = vld [vmem:[#allocation13 + $0x60] sm:$0xf]
    %v5954 = vld [vmem:[#allocation13 + $0x64] sm:$0xf]
    %v5955 = vld [vmem:[#allocation13 + $0x68] sm:$0xf]
    %v5956 = vld [vmem:[#allocation13 + $0x6c] sm:$0xf]
    %v5957 = vld [vmem:[#allocation13 + $0x70] sm:$0xf]
    %v5958 = vld [vmem:[#allocation13 + $0x74] sm:$0xf]
    %v5959 = vld [vmem:[#allocation13 + $0x78] sm:$0xf]
    %v5960 = vld [vmem:[#allocation13 + $0x7c] sm:$0xf]
    %s5961 = scalar_lea.vmem [#allocation13], 128
    %v5962 = vld [vmem:[%s5961] sm:$0xf]
    %v5963 = vld [vmem:[%s5961 + $0x4] sm:$0xf]
    %v5964 = vld [vmem:[%s5961 + $0x8] sm:$0xf]
    %v5965 = vld [vmem:[%s5961 + $0xc] sm:$0xf]
    %v5966 = vld [vmem:[%s5961 + $0x10] sm:$0xf]
    %v5967 = vld [vmem:[%s5961 + $0x14] sm:$0xf]
    %v5968 = vld [vmem:[%s5961 + $0x18] sm:$0xf]
    %v5969 = vld [vmem:[%s5961 + $0x1c] sm:$0xf]
    %v5970 = vld [vmem:[%s5961 + $0x20] sm:$0xf]
    %v5971 = vld [vmem:[%s5961 + $0x24] sm:$0xf]
    %v5972 = vld [vmem:[%s5961 + $0x28] sm:$0xf]
    %v5973 = vld [vmem:[%s5961 + $0x2c] sm:$0xf]
    %v5974 = vld [vmem:[%s5961 + $0x30] sm:$0xf]
    %v5975 = vld [vmem:[%s5961 + $0x34] sm:$0xf]
    %v5976 = vld [vmem:[%s5961 + $0x38] sm:$0xf]
    %v5977 = vld [vmem:[%s5961 + $0x3c] sm:$0xf]
    %v5978 = vld [vmem:[%s5961 + $0x40] sm:$0xf]
    %v5979 = vld [vmem:[%s5961 + $0x44] sm:$0xf]
    %v5980 = vld [vmem:[%s5961 + $0x48] sm:$0xf]
    %v5981 = vld [vmem:[%s5961 + $0x4c] sm:$0xf]
    %v5982 = vld [vmem:[%s5961 + $0x50] sm:$0xf]
    %v5983 = vld [vmem:[%s5961 + $0x54] sm:$0xf]
    %v5984 = vld [vmem:[%s5961 + $0x58] sm:$0xf]
    %v5985 = vld [vmem:[%s5961 + $0x5c] sm:$0xf]
    %v5986 = vld [vmem:[%s5961 + $0x60] sm:$0xf]
    %v5987 = vld [vmem:[%s5961 + $0x64] sm:$0xf]
    %v5988 = vld [vmem:[%s5961 + $0x68] sm:$0xf]
    %v5989 = vld [vmem:[%s5961 + $0x6c] sm:$0xf]
    %v5990 = vld [vmem:[%s5961 + $0x70] sm:$0xf]
    %v5991 = vld [vmem:[%s5961 + $0x74] sm:$0xf]
    %v5992 = vld [vmem:[%s5961 + $0x78] sm:$0xf]
    %v5993 = vld [vmem:[%s5961 + $0x7c] sm:$0xf]
    %v6026 = vunpack.c.l.b16 %v5962
    %v6027 = vunpack.c.l.b16 %v5963
    %v6028 = vunpack.c.l.b16 %v5964
    %v6029 = vunpack.c.l.b16 %v5965
    %v6030 = vunpack.c.l.b16 %v5966
    %v6031 = vunpack.c.l.b16 %v5967
    %v6032 = vunpack.c.l.b16 %v5968
    %v6033 = vunpack.c.l.b16 %v5969
    %v6034 = vunpack.c.l.b16 %v5970
    %v6035 = vunpack.c.l.b16 %v5971
    %v6036 = vunpack.c.l.b16 %v5972
    %v6037 = vunpack.c.l.b16 %v5973
    %v6038 = vunpack.c.l.b16 %v5974
    %v6039 = vunpack.c.l.b16 %v5975
    %v6040 = vunpack.c.l.b16 %v5976
    %v6041 = vunpack.c.l.b16 %v5977
    %v6042 = vunpack.c.l.b16 %v5978
    %v6043 = vunpack.c.l.b16 %v5979
    %v6044 = vunpack.c.l.b16 %v5980
    %v6045 = vunpack.c.l.b16 %v5981
    %v6046 = vunpack.c.l.b16 %v5982
    %v6047 = vunpack.c.l.b16 %v5983
    %v6048 = vunpack.c.l.b16 %v5984
    %v6049 = vunpack.c.l.b16 %v5985
    %v6050 = vunpack.c.l.b16 %v5986
    %v6051 = vunpack.c.l.b16 %v5987
    %v6052 = vunpack.c.l.b16 %v5988
    %v6053 = vunpack.c.l.b16 %v5989
    %v6054 = vunpack.c.l.b16 %v5990
    %v6055 = vunpack.c.l.b16 %v5991
    %v6056 = vunpack.c.l.b16 %v5992
    %v6057 = vunpack.c.l.b16 %v5993
    %v6058 = vpack.c.b16 %v6027, %v6026
    %v6059 = vpack.c.b16 %v6029, %v6028
    %v6060 = vpack.c.b16 %v6031, %v6030
    %v6061 = vpack.c.b16 %v6033, %v6032
    %v6062 = vpack.c.b16 %v6035, %v6034
    %v6063 = vpack.c.b16 %v6037, %v6036
    %v6064 = vpack.c.b16 %v6039, %v6038
    %v6065 = vpack.c.b16 %v6041, %v6040
    %v6066 = vpack.c.b16 %v6043, %v6042
    %v6067 = vpack.c.b16 %v6045, %v6044
    %v6068 = vpack.c.b16 %v6047, %v6046
    %v6069 = vpack.c.b16 %v6049, %v6048
    %v6070 = vpack.c.b16 %v6051, %v6050
    %v6071 = vpack.c.b16 %v6053, %v6052
    %v6072 = vpack.c.b16 %v6055, %v6054
    %v6073 = vpack.c.b16 %v6057, %v6056
    %6090 = vmatprep.subr.bf16.mxu0 0
    %6091 = vmatpush1.bf16.msra.mxu0 %v6065
    %6092 = vmatprep.subr.bf16.mxu0 0
    %6093 = vmatpush1.bf16.msra.mxu0 %v6064
    %6094 = vmatprep.subr.bf16.mxu0 0
    %6095 = vmatpush1.bf16.msra.mxu0 %v6063
    %6096 = vmatprep.subr.bf16.mxu0 0
    %6097 = vmatpush1.bf16.msra.mxu0 %v6062
    %6098 = vmatprep.subr.bf16.mxu0 0
    %6099 = vmatpush1.bf16.msra.mxu0 %v6061
    %6100 = vmatprep.subr.bf16.mxu0 0
    %6101 = vmatpush1.bf16.msra.mxu0 %v6060
    %6102 = vmatprep.subr.bf16.mxu0 0
    %6103 = vmatpush1.bf16.msra.mxu0 %v6059
    %6104 = vmatprep.subr.bf16.mxu0 0
    %6105 = vmatpush1.bf16.msra.mxu0 %v6058
    %6106 = vmatprep.subr.bf16.mxu0 0
    %6107 = vmatpush2.bf16.msra.mxu0 %v6073
    %6108 = vmatprep.subr.bf16.mxu0 0
    %6109 = vmatpush2.bf16.msra.mxu0 %v6072
    %6110 = vmatprep.subr.bf16.mxu0 0
    %6111 = vmatpush2.bf16.msra.mxu0 %v6071
    %6112 = vmatprep.subr.bf16.mxu0 0
    %6113 = vmatpush2.bf16.msra.mxu0 %v6070
    %6114 = vmatprep.subr.bf16.mxu0 0
    %6115 = vmatpush2.bf16.msra.mxu0 %v6069
    %6116 = vmatprep.subr.bf16.mxu0 0
    %6117 = vmatpush2.bf16.msra.mxu0 %v6068
    %6118 = vmatprep.subr.bf16.mxu0 0
    %6119 = vmatpush2.bf16.msra.mxu0 %v6067
    %6120 = vmatprep.subr.bf16.mxu0 0
    %6121 = vmatpush2.bf16.msra.mxu0 %v6066
    %6122 = vmatprep.mubr.bf16.mxu0 %v5175
    %6123 = vmatmul.mubr.bf16.gmra.mxu0 %v5174
    %v6124 = vpop.f32.mrf.mxu0
    %v6125 = vadd.f32 0.0, %v6124
    %v6126 = vpop.f32.mrf.mxu0
    %v6127 = vpop.f32.mrf.mxu0
    %v6128 = vpop.f32.mrf.mxu0
    %6129 = vdwg.mxu0
    %v6162 = vunpack.c.l.b16 %v5929
    %v6163 = vunpack.c.l.b16 %v5930
    %v6164 = vunpack.c.l.b16 %v5931
    %v6165 = vunpack.c.l.b16 %v5932
    %v6166 = vunpack.c.l.b16 %v5933
    %v6167 = vunpack.c.l.b16 %v5934
    %v6168 = vunpack.c.l.b16 %v5935
    %v6169 = vunpack.c.l.b16 %v5936
    %v6170 = vunpack.c.l.b16 %v5937
    %v6171 = vunpack.c.l.b16 %v5938
    %v6172 = vunpack.c.l.b16 %v5939
    %v6173 = vunpack.c.l.b16 %v5940
    %v6174 = vunpack.c.l.b16 %v5941
    %v6175 = vunpack.c.l.b16 %v5942
    %v6176 = vunpack.c.l.b16 %v5943
    %v6177 = vunpack.c.l.b16 %v5944
    %v6178 = vunpack.c.l.b16 %v5945
    %v6179 = vunpack.c.l.b16 %v5946
    %v6180 = vunpack.c.l.b16 %v5947
    %v6181 = vunpack.c.l.b16 %v5948
    %v6182 = vunpack.c.l.b16 %v5949
    %v6183 = vunpack.c.l.b16 %v5950
    %v6184 = vunpack.c.l.b16 %v5951
    %v6185 = vunpack.c.l.b16 %v5952
    %v6186 = vunpack.c.l.b16 %v5953
    %v6187 = vunpack.c.l.b16 %v5954
    %v6188 = vunpack.c.l.b16 %v5955
    %v6189 = vunpack.c.l.b16 %v5956
    %v6190 = vunpack.c.l.b16 %v5957
    %v6191 = vunpack.c.l.b16 %v5958
    %v6192 = vunpack.c.l.b16 %v5959
    %v6193 = vunpack.c.l.b16 %v5960
    %v6194 = vpack.c.b16 %v6163, %v6162
    %v6195 = vpack.c.b16 %v6165, %v6164
    %v6196 = vpack.c.b16 %v6167, %v6166
    %v6197 = vpack.c.b16 %v6169, %v6168
    %v6198 = vpack.c.b16 %v6171, %v6170
    %v6199 = vpack.c.b16 %v6173, %v6172
    %v6200 = vpack.c.b16 %v6175, %v6174
    %v6201 = vpack.c.b16 %v6177, %v6176
    %v6202 = vpack.c.b16 %v6179, %v6178
    %v6203 = vpack.c.b16 %v6181, %v6180
    %v6204 = vpack.c.b16 %v6183, %v6182
    %v6205 = vpack.c.b16 %v6185, %v6184
    %v6206 = vpack.c.b16 %v6187, %v6186
    %v6207 = vpack.c.b16 %v6189, %v6188
    %v6208 = vpack.c.b16 %v6191, %v6190
    %v6209 = vpack.c.b16 %v6193, %v6192
    %6226 = vmatprep.subr.bf16.mxu0 0
    %6227 = vmatpush1.bf16.msra.mxu0 %v6201
    %6228 = vmatprep.subr.bf16.mxu0 0
    %6229 = vmatpush1.bf16.msra.mxu0 %v6200
    %6230 = vmatprep.subr.bf16.mxu0 0
    %6231 = vmatpush1.bf16.msra.mxu0 %v6199
    %6232 = vmatprep.subr.bf16.mxu0 0
    %6233 = vmatpush1.bf16.msra.mxu0 %v6198
    %6234 = vmatprep.subr.bf16.mxu0 0
    %6235 = vmatpush1.bf16.msra.mxu0 %v6197
    %6236 = vmatprep.subr.bf16.mxu0 0
    %6237 = vmatpush1.bf16.msra.mxu0 %v6196
    %6238 = vmatprep.subr.bf16.mxu0 0
    %6239 = vmatpush1.bf16.msra.mxu0 %v6195
    %6240 = vmatprep.subr.bf16.mxu0 0
    %6241 = vmatpush1.bf16.msra.mxu0 %v6194
    %6242 = vmatprep.subr.bf16.mxu0 0
    %6243 = vmatpush2.bf16.msra.mxu0 %v6209
    %6244 = vmatprep.subr.bf16.mxu0 0
    %6245 = vmatpush2.bf16.msra.mxu0 %v6208
    %6246 = vmatprep.subr.bf16.mxu0 0
    %6247 = vmatpush2.bf16.msra.mxu0 %v6207
    %6248 = vmatprep.subr.bf16.mxu0 0
    %6249 = vmatpush2.bf16.msra.mxu0 %v6206
    %6250 = vmatprep.subr.bf16.mxu0 0
    %6251 = vmatpush2.bf16.msra.mxu0 %v6205
    %6252 = vmatprep.subr.bf16.mxu0 0
    %6253 = vmatpush2.bf16.msra.mxu0 %v6204
    %6254 = vmatprep.subr.bf16.mxu0 0
    %6255 = vmatpush2.bf16.msra.mxu0 %v6203
    %6256 = vmatprep.subr.bf16.mxu0 0
    %6257 = vmatpush2.bf16.msra.mxu0 %v6202
    %6258 = vmatprep.mubr.bf16.mxu0 %v4415
    %6259 = vmatmul.mubr.bf16.gmra.mxu0 %v4414
    %v6260 = vpop.f32.mrf.mxu0
    %v6261 = vadd.f32 %v6125, %v6260
    %v6262 = vpop.f32.mrf.mxu0
    %v6263 = vpop.f32.mrf.mxu0
    %v6264 = vpop.f32.mrf.mxu0
    %6265 = vdwg.mxu0
    %s6266 = scalar_lea.vmem [#allocation13], 256
    %v6267 = vld [vmem:[%s6266] sm:$0xf]
    %v6268 = vld [vmem:[%s6266 + $0x4] sm:$0xf]
    %v6269 = vld [vmem:[%s6266 + $0x8] sm:$0xf]
    %v6270 = vld [vmem:[%s6266 + $0xc] sm:$0xf]
    %v6271 = vld [vmem:[%s6266 + $0x10] sm:$0xf]
    %v6272 = vld [vmem:[%s6266 + $0x14] sm:$0xf]
    %v6273 = vld [vmem:[%s6266 + $0x18] sm:$0xf]
    %v6274 = vld [vmem:[%s6266 + $0x1c] sm:$0xf]
    %v6275 = vld [vmem:[%s6266 + $0x20] sm:$0xf]
    %v6276 = vld [vmem:[%s6266 + $0x24] sm:$0xf]
    %v6277 = vld [vmem:[%s6266 + $0x28] sm:$0xf]
    %v6278 = vld [vmem:[%s6266 + $0x2c] sm:$0xf]
    %v6279 = vld [vmem:[%s6266 + $0x30] sm:$0xf]
    %v6280 = vld [vmem:[%s6266 + $0x34] sm:$0xf]
    %v6281 = vld [vmem:[%s6266 + $0x38] sm:$0xf]
    %v6282 = vld [vmem:[%s6266 + $0x3c] sm:$0xf]
    %v6283 = vld [vmem:[%s6266 + $0x40] sm:$0xf]
    %v6284 = vld [vmem:[%s6266 + $0x44] sm:$0xf]
    %v6285 = vld [vmem:[%s6266 + $0x48] sm:$0xf]
    %v6286 = vld [vmem:[%s6266 + $0x4c] sm:$0xf]
    %v6287 = vld [vmem:[%s6266 + $0x50] sm:$0xf]
    %v6288 = vld [vmem:[%s6266 + $0x54] sm:$0xf]
    %v6289 = vld [vmem:[%s6266 + $0x58] sm:$0xf]
    %v6290 = vld [vmem:[%s6266 + $0x5c] sm:$0xf]
    %v6291 = vld [vmem:[%s6266 + $0x60] sm:$0xf]
    %v6292 = vld [vmem:[%s6266 + $0x64] sm:$0xf]
    %v6293 = vld [vmem:[%s6266 + $0x68] sm:$0xf]
    %v6294 = vld [vmem:[%s6266 + $0x6c] sm:$0xf]
    %v6295 = vld [vmem:[%s6266 + $0x70] sm:$0xf]
    %v6296 = vld [vmem:[%s6266 + $0x74] sm:$0xf]
    %v6297 = vld [vmem:[%s6266 + $0x78] sm:$0xf]
    %v6298 = vld [vmem:[%s6266 + $0x7c] sm:$0xf]
    %v6331 = vunpack.c.l.b16 %v6267
    %v6332 = vunpack.c.l.b16 %v6268
    %v6333 = vunpack.c.l.b16 %v6269
    %v6334 = vunpack.c.l.b16 %v6270
    %v6335 = vunpack.c.l.b16 %v6271
    %v6336 = vunpack.c.l.b16 %v6272
    %v6337 = vunpack.c.l.b16 %v6273
    %v6338 = vunpack.c.l.b16 %v6274
    %v6339 = vunpack.c.l.b16 %v6275
    %v6340 = vunpack.c.l.b16 %v6276
    %v6341 = vunpack.c.l.b16 %v6277
    %v6342 = vunpack.c.l.b16 %v6278
    %v6343 = vunpack.c.l.b16 %v6279
    %v6344 = vunpack.c.l.b16 %v6280
    %v6345 = vunpack.c.l.b16 %v6281
    %v6346 = vunpack.c.l.b16 %v6282
    %v6347 = vunpack.c.l.b16 %v6283
    %v6348 = vunpack.c.l.b16 %v6284
    %v6349 = vunpack.c.l.b16 %v6285
    %v6350 = vunpack.c.l.b16 %v6286
    %v6351 = vunpack.c.l.b16 %v6287
    %v6352 = vunpack.c.l.b16 %v6288
    %v6353 = vunpack.c.l.b16 %v6289
    %v6354 = vunpack.c.l.b16 %v6290
    %v6355 = vunpack.c.l.b16 %v6291
    %v6356 = vunpack.c.l.b16 %v6292
    %v6357 = vunpack.c.l.b16 %v6293
    %v6358 = vunpack.c.l.b16 %v6294
    %v6359 = vunpack.c.l.b16 %v6295
    %v6360 = vunpack.c.l.b16 %v6296
    %v6361 = vunpack.c.l.b16 %v6297
    %v6362 = vunpack.c.l.b16 %v6298
    %v6363 = vpack.c.b16 %v6332, %v6331
    %v6364 = vpack.c.b16 %v6334, %v6333
    %v6365 = vpack.c.b16 %v6336, %v6335
    %v6366 = vpack.c.b16 %v6338, %v6337
    %v6367 = vpack.c.b16 %v6340, %v6339
    %v6368 = vpack.c.b16 %v6342, %v6341
    %v6369 = vpack.c.b16 %v6344, %v6343
    %v6370 = vpack.c.b16 %v6346, %v6345
    %v6371 = vpack.c.b16 %v6348, %v6347
    %v6372 = vpack.c.b16 %v6350, %v6349
    %v6373 = vpack.c.b16 %v6352, %v6351
    %v6374 = vpack.c.b16 %v6354, %v6353
    %v6375 = vpack.c.b16 %v6356, %v6355
    %v6376 = vpack.c.b16 %v6358, %v6357
    %v6377 = vpack.c.b16 %v6360, %v6359
    %v6378 = vpack.c.b16 %v6362, %v6361
    %6395 = vmatprep.subr.bf16.mxu0 0
    %6396 = vmatpush1.bf16.msra.mxu0 %v6370
    %6397 = vmatprep.subr.bf16.mxu0 0
    %6398 = vmatpush1.bf16.msra.mxu0 %v6369
    %6399 = vmatprep.subr.bf16.mxu0 0
    %6400 = vmatpush1.bf16.msra.mxu0 %v6368
    %6401 = vmatprep.subr.bf16.mxu0 0
    %6402 = vmatpush1.bf16.msra.mxu0 %v6367
    %6403 = vmatprep.subr.bf16.mxu0 0
    %6404 = vmatpush1.bf16.msra.mxu0 %v6366
    %6405 = vmatprep.subr.bf16.mxu0 0
    %6406 = vmatpush1.bf16.msra.mxu0 %v6365
    %6407 = vmatprep.subr.bf16.mxu0 0
    %6408 = vmatpush1.bf16.msra.mxu0 %v6364
    %6409 = vmatprep.subr.bf16.mxu0 0
    %6410 = vmatpush1.bf16.msra.mxu0 %v6363
    %6411 = vmatprep.subr.bf16.mxu0 0
    %6412 = vmatpush2.bf16.msra.mxu0 %v6378
    %6413 = vmatprep.subr.bf16.mxu0 0
    %6414 = vmatpush2.bf16.msra.mxu0 %v6377
    %6415 = vmatprep.subr.bf16.mxu0 0
    %6416 = vmatpush2.bf16.msra.mxu0 %v6376
    %6417 = vmatprep.subr.bf16.mxu0 0
    %6418 = vmatpush2.bf16.msra.mxu0 %v6375
    %6419 = vmatprep.subr.bf16.mxu0 0
    %6420 = vmatpush2.bf16.msra.mxu0 %v6374
    %6421 = vmatprep.subr.bf16.mxu0 0
    %6422 = vmatpush2.bf16.msra.mxu0 %v6373
    %6423 = vmatprep.subr.bf16.mxu0 0
    %6424 = vmatpush2.bf16.msra.mxu0 %v6372
    %6425 = vmatprep.subr.bf16.mxu0 0
    %6426 = vmatpush2.bf16.msra.mxu0 %v6371
    %6427 = vmatprep.mubr.bf16.mxu0 %v5928
    %6428 = vmatmul.mubr.bf16.gmra.mxu0 %v5927
    %v6429 = vpop.f32.mrf.mxu0
    %v6430 = vadd.f32 0.0, %v6429
    %v6431 = vpop.f32.mrf.mxu0
    %v6432 = vpop.f32.mrf.mxu0
    %v6433 = vpop.f32.mrf.mxu0
    %6434 = vdwg.mxu0
    %v6435 = vadd.f32 %v6261, %v6430
    %v6436 = vld [vmem:[#allocation14 + $0x34] ss:$0 sm:$0xff]
    %v6437 = vadd.f32 %v6435, %v6436
    %6438 = vst [vmem:[#allocation16] sm:$0xff] %v6437
    // Predicated region
    $region66: #{tpu_custom_call.1} parent=1 // pred_check
      _
    $region67: #{tpu_custom_call.1} parent=1 // pred_check_branch
      %6440 = sbr.rel (0) target = $region69
    $region68: #{tpu_custom_call.1} parent=1 // pred_region
      %s6442 = ssub.s32 128, 128
      %6443 = vsyncadd [#allocation4], %s6442
      %s6445 = sshll.u32 [#allocation16], 4
      %s6446 = int_to_ptr.vmem [resolvable:$true] %s6445
      %6448 = dma.vmem_to_hbm [thread:$0]  %s6446, 128, %s8, [#allocation4]
    $region69: #{tpu_custom_call.1} parent=1 // pred_fallthru
      _
    // Predicated region
    $region70: #{tpu_custom_call.1} parent=1 // pred_check
      _
    $region71: #{tpu_custom_call.1} parent=1 // pred_check_branch
      %6450 = sbr.rel (0) target = $region73
    $region72: #{tpu_custom_call.1} parent=1 // pred_region
      %6451 = dma.done [#allocation4], 128
    $region73: #{tpu_custom_call.1} parent=1 // pred_fallthru
      _
    %6452 = vsyncpa [#allocation3], 1
    %6453 = vsyncpa [#allocation6], 1
    %6454 = vsyncpa [#allocation9], 1
    %6455 = vsyncpa [#allocation12], 1
    %6456 = vsyncpa [#allocation15], 1
    %6457 = vsyncpa [#allocation4], 1

</llo_original>
